<compile_context>
chip_gen: v6e
topology: v6e:2x2x1
jax: 0.10.0
libtpu: 0.0.40
codegen_flags: <defaults>
</compile_context>

<pallas_src>
import functools

import jax
import jax.numpy as jnp
from jax.experimental import pallas as pl
from jax.experimental.pallas import tpu as pltpu


_LN_EPS = 1e-5           # torch.nn.LayerNorm default
_SQRT_HALF = 0.7071067811865476


# ----------------------------------------------------------------------------
# Numerics helpers
# ----------------------------------------------------------------------------
def _layernorm(x, gamma, beta):
    mean = jnp.mean(x, axis=-1, keepdims=True)
    xc = x - mean
    var = jnp.mean(xc * xc, axis=-1, keepdims=True)
    return xc * jax.lax.rsqrt(var + _LN_EPS) * gamma + beta


def _erf_kernel(x):
    """erf via Abramowitz&Stegun 7.1.26 (max abs err ~1.5e-7), kernel-only.

    The 1/(1+p*z) term goes through the EUP (approx reciprocal) so the large
    (R, 4D) GELU activation does not occupy VALU divide slots.
    """
    a1, a2, a3, a4, a5 = (0.254829592, -0.284496736, 1.421413741,
                          -1.453152027, 1.061405429)
    p = 0.3275911
    sign = jnp.where(x >= 0.0, 1.0, -1.0)
    z = jnp.abs(x)
    t = pl.reciprocal(1.0 + p * z, approx=True)
    poly = ((((a5 * t + a4) * t + a3) * t + a2) * t + a1) * t
    return sign * (1.0 - poly * jnp.exp(-z * z))


def _gelu_kernel(x):
    return 0.5 * x * (1.0 + _erf_kernel(x * _SQRT_HALF))


# ----------------------------------------------------------------------------
# Fused Pallas kernel: one tile of Bt batch elements per grid step
# ----------------------------------------------------------------------------
def _cross_modal_fusion_kernel(
    num_heads,
    q_ref, kv_ref,
    wq_ref, wk_ref, wv_ref, bq_ref, bk_ref, bv_ref,
    wo_ref, bo_ref,
    ln1g_ref, ln1b_ref,
    w1_ref, b1_ref, w2_ref, b2_ref,
    ln2g_ref, ln2b_ref,
    o_ref,
):
    Bt, S, D = q_ref.shape
    H = num_heads
    Dh = D // H
    R = Bt * S
    scale = 1.0 / (Dh ** 0.5)
    bf16 = jnp.bfloat16

    # Flatten (Bt, S, D) -> (R, D): all dense matmuls see R rows per MXU push.
    xq = q_ref[...].reshape(R, D)                       # f32, also the residual
    xkv = kv_ref[...].reshape(R, D)
    xq_b = xq.astype(bf16)
    xkv_b = xkv.astype(bf16)

    # --- Q/K/V projections: bf16 operands, f32 MXU accumulation -------------
    q = jnp.dot(xq_b, wq_ref[...], preferred_element_type=jnp.float32) + bq_ref[...]
    k = jnp.dot(xkv_b, wk_ref[...], preferred_element_type=jnp.float32) + bk_ref[...]
    v = jnp.dot(xkv_b, wv_ref[...], preferred_element_type=jnp.float32) + bv_ref[...]

    # bf16 operands for the attention-core matmuls; softmax stays f32.
    q3 = q.astype(bf16).reshape(Bt, S, D)
    k3 = k.astype(bf16).reshape(Bt, S, D)
    v3 = v.astype(bf16).reshape(Bt, S, D)

    # --- per-head scaled-dot-product attention, batched over Bt -------------
    ctx_heads = []
    for h in range(H):                                  # H is small -> static unroll
        lo = h * Dh
        qh = q3[:, :, lo:lo + Dh]
        kh = k3[:, :, lo:lo + Dh]
        vh = v3[:, :, lo:lo + Dh]
        s = jnp.einsum("bqd,bkd->bqk", qh, kh,
                       preferred_element_type=jnp.float32) * scale
        s = s - jnp.max(s, axis=-1, keepdims=True)
        p = jnp.exp(s)                                   # f32 softmax
        p = p * pl.reciprocal(jnp.sum(p, axis=-1, keepdims=True), approx=True)
        ctx_heads.append(
            jnp.einsum("bqk,bkd->bqd", p.astype(bf16), vh,
                       preferred_element_type=jnp.float32))

    # Lane-concat heads -> ONE full-K output projection (no K=16 pushes).
    ctx = jnp.concatenate(ctx_heads, axis=-1).reshape(R, D).astype(bf16)
    attn = jnp.dot(ctx, wo_ref[...], preferred_element_type=jnp.float32) + bo_ref[...]

    # --- residual + LayerNorm 1 (f32 VPU work) -------------------------------
    y1 = _layernorm(attn + xq, ln1g_ref[...], ln1b_ref[...])

    # --- FFN: Linear(D,4D) -> GELU -> Linear(4D,D), bf16 MXU / f32 elsewhere -
    h1 = jnp.dot(y1.astype(bf16), w1_ref[...],
                 preferred_element_type=jnp.float32) + b1_ref[...]
    h1 = _gelu_kernel(h1)
    ffn = jnp.dot(h1.astype(bf16), w2_ref[...],
                  preferred_element_type=jnp.float32) + b2_ref[...]

    # --- residual + LayerNorm 2 ----------------------------------------------
    out = _layernorm(ffn + y1, ln2g_ref[...], ln2b_ref[...])
    o_ref[...] = out.reshape(Bt, S, D).astype(o_ref.dtype)


# ----------------------------------------------------------------------------
# Parameter construction (deterministic, nn.Module-consistent shapes)
# ----------------------------------------------------------------------------
def make_cross_modal_fusion_params(feature_dim, num_heads, seed=0):
    assert feature_dim % num_heads == 0
    D = feature_dim
    Dff = 4 * D
    keys = jax.random.split(jax.random.PRNGKey(seed), 16)

    def uni(k, shape, bound):
        return jax.random.uniform(k, shape, jnp.float32, -bound, bound)

    xav = (6.0 / (D + D)) ** 0.5          # xavier_uniform bound (MHA in_proj)
    inv_d = 1.0 / (D ** 0.5)
    inv_ff = 1.0 / (Dff ** 0.5)

    return dict(
        # attention projections, stored as (in, out) == torch W.T
        wq=uni(keys[0], (D, D), xav),
        wk=uni(keys[1], (D, D), xav),
        wv=uni(keys[2], (D, D), xav),
        bq=uni(keys[3], (1, D), 0.02),
        bk=uni(keys[4], (1, D), 0.02),
        bv=uni(keys[5], (1, D), 0.02),
        wo=uni(keys[6], (D, D), inv_d),
        bo=uni(keys[7], (1, D), inv_d),
        # LayerNorm affine params (noise added so the affine path is exercised)
        ln1_g=1.0 + uni(keys[8], (1, D), 0.1),
        ln1_b=uni(keys[9], (1, D), 0.1),
        ln2_g=1.0 + uni(keys[10], (1, D), 0.1),
        ln2_b=uni(keys[11], (1, D), 0.1),
        # FFN
        w1=uni(keys[12], (D, Dff), inv_d),
        b1=uni(keys[13], (1, Dff), inv_d),
        w2=uni(keys[14], (Dff, D), inv_ff),
        b2=uni(keys[15], (1, D), inv_ff),
    )


# ----------------------------------------------------------------------------
# Wrapper calling pallas_call
# ----------------------------------------------------------------------------
def _pick_batch_tile(B, S, target_rows=256):
    """Largest divisor of B such that Bt*S <= target_rows (>=1)."""
    cap = max(1, min(B, target_rows // max(S, 1)))
    bt = 1
    for cand in range(1, cap + 1):
        if B % cand == 0:
            bt = cand
    return bt


def cross_modal_fusion_forward(query, key_value, params, *, num_heads):
    """query, key_value: (B, S, D) float32.  Returns (B, S, D) float32."""
    B, S, D = query.shape
    assert key_value.shape == (B, S, D)
    assert D % num_heads == 0
    Dff = params["w1"].shape[1]

    # Row packing: Bt batch elements (Bt*S rows) per grid step.
    Bt = _pick_batch_tile(B, S)
    grid = (B // Bt,)

    bf16 = jnp.bfloat16
    # Matmul weights in bf16 (f32 accumulation in-kernel): full MXU rate and
    # half the weight bytes DMA'd from HBM.  Biases / LN params stay f32.
    flat_params = [
        params["wq"].astype(bf16), params["wk"].astype(bf16),
        params["wv"].astype(bf16),
        params["bq"], params["bk"], params["bv"],
        params["wo"].astype(bf16), params["bo"],
        params["ln1_g"], params["ln1_b"],
        params["w1"].astype(bf16), params["b1"],
        params["w2"].astype(bf16), params["b2"],
        params["ln2_g"], params["ln2_b"],
    ]

    def _const_spec(arr):
        nd = arr.ndim
        return pl.BlockSpec(arr.shape, lambda b, _nd=nd: (0,) * _nd)   # grid-invariant

    seq_spec = pl.BlockSpec((Bt, S, D), lambda b: (b, 0, 0))
    in_specs = [seq_spec, seq_spec] + [_const_spec(p) for p in flat_params]
    out_spec = pl.BlockSpec((Bt, S, D), lambda b: (b, 0, 0))

    # Advisory cost hint so XLA schedules/overlaps this small fused kernel well.
    flops = B * (24 * S * D * D + 4 * S * S * D)
    transcendentals = B * (num_heads * S * S + S * Dff)
    bytes_accessed = 3 * B * S * D * 4 + sum(
        int(p.size) * p.dtype.itemsize for p in flat_params)

    kernel = functools.partial(_cross_modal_fusion_kernel, num_heads)

    fn = pl.pallas_call(
        kernel,
        out_shape=jax.ShapeDtypeStruct((B, S, D), jnp.float32),
        grid_spec=pltpu.PrefetchScalarGridSpec(
            num_scalar_prefetch=0,
            grid=grid,
            in_specs=in_specs,
            out_specs=out_spec,
        ),
        compiler_params=pltpu.CompilerParams(
            dimension_semantics=("parallel",),
            vmem_limit_bytes=32 * 1024 * 1024,   # explicit; kernel needs ~2 MiB @ D=128
        ),
        cost_estimate=pl.CostEstimate(
            flops=flops,
            transcendentals=transcendentals,
            bytes_accessed=bytes_accessed,
        ),
    )
    return fn(query, key_value, *flat_params)


# ----------------------------------------------------------------------------
# Pure-JAX f32 reference (faithful to the PyTorch module math)
# ----------------------------------------------------------------------------
def _reference_forward(query, key_value, params, num_heads):
    B, S, D = query.shape
    Dh = D // num_heads

    def lin(x, w, b):
        return x @ w + b

    q = lin(query, params["wq"], params["bq"])
    k = lin(key_value, params["wk"], params["bk"])
    v = lin(key_value, params["wv"], params["bv"])

    def split(x):
        return x.reshape(B, S, num_heads, Dh).transpose(0, 2, 1, 3)

    qh, kh, vh = split(q), split(k), split(v)
    scores = jnp.einsum("bhqd,bhkd->bhqk", qh, kh) / (Dh ** 0.5)
    probs = jax.nn.softmax(scores, axis=-1)
    ctx = jnp.einsum("bhqk,bhkd->bhqd", probs, vh)
    ctx = ctx.transpose(0, 2, 1, 3).reshape(B, S, D)
    attn = lin(ctx, params["wo"], params["bo"])

    y1 = _layernorm(attn + query, params["ln1_g"], params["ln1_b"])
    h1 = jax.nn.gelu(lin(y1, params["w1"], params["b1"]), approximate=False)
    ffn = lin(h1, params["w2"], params["b2"])
    return _layernorm(ffn + y1, params["ln2_g"], params["ln2_b"])


# ----------------------------------------------------------------------------
# Main
# ----------------------------------------------------------------------------
if __name__ == "__main__":
    batch, seq, feature_dim, num_heads = 2, 8, 128, 8   # lane-dense D, head_dim=16

    key = jax.random.PRNGKey(0)
    kq, kkv = jax.random.split(key)
    q = jax.random.normal(kq, (batch, seq, feature_dim), dtype=jnp.float32)
    kv = jax.random.normal(kkv, (batch, seq, feature_dim), dtype=jnp.float32)

    params = make_cross_modal_fusion_params(feature_dim, num_heads, seed=0)

    out = cross_modal_fusion_forward(q, kv, params, num_heads=num_heads)
    out = jax.block_until_ready(out)

    ref = _reference_forward(q, kv, params, num_heads)
    assert out.shape == (batch, seq, feature_dim)
    # bf16 MXU operands (f32 accumulation) + approx-reciprocal softmax/GELU vs
    # the pure-f32 reference; LayerNorm keeps outputs O(1) so this is generous.
    assert jnp.allclose(out, ref, atol=5e-2, rtol=5e-2), float(
        jnp.max(jnp.abs(out - ref)))

    print("KERNEL_OK")
</pallas_src>

<mosaic_0001>
module attributes {stable_mosaic.version = 11 : i64} {
  func.func @_cross_modal_fusion_kernel(%arg0: i32, %arg1: memref<2x8x128xf32, #tpu.memory_space<vmem>>, %arg2: memref<2x8x128xf32, #tpu.memory_space<vmem>>, %arg3: memref<128x128xbf16, #tpu.memory_space<vmem>>, %arg4: memref<128x128xbf16, #tpu.memory_space<vmem>>, %arg5: memref<128x128xbf16, #tpu.memory_space<vmem>>, %arg6: memref<1x128xf32, #tpu.memory_space<vmem>>, %arg7: memref<1x128xf32, #tpu.memory_space<vmem>>, %arg8: memref<1x128xf32, #tpu.memory_space<vmem>>, %arg9: memref<128x128xbf16, #tpu.memory_space<vmem>>, %arg10: memref<1x128xf32, #tpu.memory_space<vmem>>, %arg11: memref<1x128xf32, #tpu.memory_space<vmem>>, %arg12: memref<1x128xf32, #tpu.memory_space<vmem>>, %arg13: memref<128x512xbf16, #tpu.memory_space<vmem>>, %arg14: memref<1x512xf32, #tpu.memory_space<vmem>>, %arg15: memref<512x128xbf16, #tpu.memory_space<vmem>>, %arg16: memref<1x128xf32, #tpu.memory_space<vmem>>, %arg17: memref<1x128xf32, #tpu.memory_space<vmem>>, %arg18: memref<1x128xf32, #tpu.memory_space<vmem>>, %arg19: memref<2x8x128xf32, #tpu.memory_space<vmem>>) attributes {dimension_semantics = [#tpu.dimension_semantics<parallel>], iteration_bounds = array<i64: 1>, scalar_prefetch = 0 : i64, scratch_operands = 0 : i64, tpu.core_type = #tpu.core_type<tc>, window_params = [{transform_indices = @transform_0, window_bounds = array<i64: 2, 8, 128>}, {transform_indices = @transform_1, window_bounds = array<i64: 2, 8, 128>}, {pipeline_mode = #tpu.pipeline_mode<synchronous>, transform_indices = @transform_2, window_bounds = array<i64: 128, 128>}, {pipeline_mode = #tpu.pipeline_mode<synchronous>, transform_indices = @transform_3, window_bounds = array<i64: 128, 128>}, {pipeline_mode = #tpu.pipeline_mode<synchronous>, transform_indices = @transform_4, window_bounds = array<i64: 128, 128>}, {pipeline_mode = #tpu.pipeline_mode<synchronous>, transform_indices = @transform_5, window_bounds = array<i64: 1, 128>}, {pipeline_mode = #tpu.pipeline_mode<synchronous>, transform_indices = @transform_6, window_bounds = array<i64: 1, 128>}, {pipeline_mode = #tpu.pipeline_mode<synchronous>, transform_indices = @transform_7, window_bounds = array<i64: 1, 128>}, {pipeline_mode = #tpu.pipeline_mode<synchronous>, transform_indices = @transform_8, window_bounds = array<i64: 128, 128>}, {pipeline_mode = #tpu.pipeline_mode<synchronous>, transform_indices = @transform_9, window_bounds = array<i64: 1, 128>}, {pipeline_mode = #tpu.pipeline_mode<synchronous>, transform_indices = @transform_10, window_bounds = array<i64: 1, 128>}, {pipeline_mode = #tpu.pipeline_mode<synchronous>, transform_indices = @transform_11, window_bounds = array<i64: 1, 128>}, {pipeline_mode = #tpu.pipeline_mode<synchronous>, transform_indices = @transform_12, window_bounds = array<i64: 128, 512>}, {pipeline_mode = #tpu.pipeline_mode<synchronous>, transform_indices = @transform_13, window_bounds = array<i64: 1, 512>}, {pipeline_mode = #tpu.pipeline_mode<synchronous>, transform_indices = @transform_14, window_bounds = array<i64: 512, 128>}, {pipeline_mode = #tpu.pipeline_mode<synchronous>, transform_indices = @transform_15, window_bounds = array<i64: 1, 128>}, {pipeline_mode = #tpu.pipeline_mode<synchronous>, transform_indices = @transform_16, window_bounds = array<i64: 1, 128>}, {pipeline_mode = #tpu.pipeline_mode<synchronous>, transform_indices = @transform_17, window_bounds = array<i64: 1, 128>}, {transform_indices = @transform_18, window_bounds = array<i64: 2, 8, 128>}]} {
    %c0 = arith.constant 0 : index
    %c0_0 = arith.constant 0 : index
    %c0_1 = arith.constant 0 : index
    %0 = vector.load %arg1[%c0, %c0_0, %c0_1] : memref<2x8x128xf32, #tpu.memory_space<vmem>>, vector<2x8x128xf32>
    %1 = vector.shape_cast %0 : vector<2x8x128xf32> to vector<16x128xf32>
    %c0_2 = arith.constant 0 : index
    %c0_3 = arith.constant 0 : index
    %c0_4 = arith.constant 0 : index
    %2 = vector.load %arg2[%c0_2, %c0_3, %c0_4] : memref<2x8x128xf32, #tpu.memory_space<vmem>>, vector<2x8x128xf32>
    %3 = vector.shape_cast %2 : vector<2x8x128xf32> to vector<16x128xf32>
    %4 = arith.truncf %1 : vector<16x128xf32> to vector<16x128xbf16>
    %5 = arith.truncf %3 : vector<16x128xf32> to vector<16x128xbf16>
    %c0_5 = arith.constant 0 : index
    %c0_6 = arith.constant 0 : index
    %6 = vector.load %arg3[%c0_5, %c0_6] : memref<128x128xbf16, #tpu.memory_space<vmem>>, vector<128x128xbf16>
    %cst = arith.constant dense<0.000000e+00> : vector<16x128xf32>
    %7 = tpu.matmul %4, %6, %cst {dimension_numbers = #tpu.dot_dimension_numbers<[1], [0], [0], [1], [0, 0, 1, 1], [], []>} : vector<16x128xbf16>, vector<128x128xbf16>, vector<16x128xf32> -> vector<16x128xf32>
    %c0_7 = arith.constant 0 : index
    %c0_8 = arith.constant 0 : index
    %8 = vector.load %arg6[%c0_7, %c0_8] : memref<1x128xf32, #tpu.memory_space<vmem>>, vector<1x128xf32>
    %9 = vector.broadcast %8 : vector<1x128xf32> to vector<16x128xf32>
    %10 = arith.addf %7, %9 : vector<16x128xf32>
    %c0_9 = arith.constant 0 : index
    %c0_10 = arith.constant 0 : index
    %11 = vector.load %arg4[%c0_9, %c0_10] : memref<128x128xbf16, #tpu.memory_space<vmem>>, vector<128x128xbf16>
    %cst_11 = arith.constant dense<0.000000e+00> : vector<16x128xf32>
    %12 = tpu.matmul %5, %11, %cst_11 {dimension_numbers = #tpu.dot_dimension_numbers<[1], [0], [0], [1], [0, 0, 1, 1], [], []>} : vector<16x128xbf16>, vector<128x128xbf16>, vector<16x128xf32> -> vector<16x128xf32>
    %c0_12 = arith.constant 0 : index
    %c0_13 = arith.constant 0 : index
    %13 = vector.load %arg7[%c0_12, %c0_13] : memref<1x128xf32, #tpu.memory_space<vmem>>, vector<1x128xf32>
    %14 = vector.broadcast %13 : vector<1x128xf32> to vector<16x128xf32>
    %15 = arith.addf %12, %14 : vector<16x128xf32>
    %c0_14 = arith.constant 0 : index
    %c0_15 = arith.constant 0 : index
    %16 = vector.load %arg5[%c0_14, %c0_15] : memref<128x128xbf16, #tpu.memory_space<vmem>>, vector<128x128xbf16>
    %cst_16 = arith.constant dense<0.000000e+00> : vector<16x128xf32>
    %17 = tpu.matmul %5, %16, %cst_16 {dimension_numbers = #tpu.dot_dimension_numbers<[1], [0], [0], [1], [0, 0, 1, 1], [], []>} : vector<16x128xbf16>, vector<128x128xbf16>, vector<16x128xf32> -> vector<16x128xf32>
    %c0_17 = arith.constant 0 : index
    %c0_18 = arith.constant 0 : index
    %18 = vector.load %arg8[%c0_17, %c0_18] : memref<1x128xf32, #tpu.memory_space<vmem>>, vector<1x128xf32>
    %19 = vector.broadcast %18 : vector<1x128xf32> to vector<16x128xf32>
    %20 = arith.addf %17, %19 : vector<16x128xf32>
    %21 = arith.truncf %10 : vector<16x128xf32> to vector<16x128xbf16>
    %22 = vector.shape_cast %21 : vector<16x128xbf16> to vector<2x8x128xbf16>
    %23 = arith.truncf %15 : vector<16x128xf32> to vector<16x128xbf16>
    %24 = vector.shape_cast %23 : vector<16x128xbf16> to vector<2x8x128xbf16>
    %25 = arith.truncf %20 : vector<16x128xf32> to vector<16x128xbf16>
    %26 = vector.shape_cast %25 : vector<16x128xbf16> to vector<2x8x128xbf16>
    %27 = vector.extract_strided_slice %22 {offsets = [0, 0, 0], sizes = [2, 8, 16], strides = [1, 1, 1]} : vector<2x8x128xbf16> to vector<2x8x16xbf16>
    %28 = vector.extract_strided_slice %24 {offsets = [0, 0, 0], sizes = [2, 8, 16], strides = [1, 1, 1]} : vector<2x8x128xbf16> to vector<2x8x16xbf16>
    %29 = vector.extract_strided_slice %26 {offsets = [0, 0, 0], sizes = [2, 8, 16], strides = [1, 1, 1]} : vector<2x8x128xbf16> to vector<2x8x16xbf16>
    "tpu.trace_start"() <{level = 10 : i32, message = "bqd,bkd->bqk"}> : () -> ()
    %cst_19 = arith.constant dense<0.000000e+00> : vector<2x8x8xf32>
    %30 = tpu.matmul %27, %28, %cst_19 {dimension_numbers = #tpu.dot_dimension_numbers<[2], [2], [1], [1], [0, 0, 0, 1, 1, 1], [0], [0]>} : vector<2x8x16xbf16>, vector<2x8x16xbf16>, vector<2x8x8xf32> -> vector<2x8x8xf32>
    "tpu.trace_stop"() : () -> ()
    %cst_20 = arith.constant 2.500000e-01 : f32
    %31 = vector.broadcast %cst_20 : f32 to vector<2x8x8xf32>
    %32 = arith.mulf %30, %31 : vector<2x8x8xf32>
    %cst_21 = arith.constant dense<0xFF800000> : vector<2x8xf32>
    %33 = vector.multi_reduction <maximumf>, %32, %cst_21 [2] : vector<2x8x8xf32> to vector<2x8xf32>
    %34 = vector.shape_cast %33 : vector<2x8xf32> to vector<2x8x1xf32>
    %35 = vector.broadcast %34 : vector<2x8x1xf32> to vector<2x8x8xf32>
    %36 = arith.subf %32, %35 : vector<2x8x8xf32>
    %37 = math.exp %36 : vector<2x8x8xf32>
    %cst_22 = arith.constant dense<0.000000e+00> : vector<2x8xf32>
    %38 = vector.multi_reduction <add>, %37, %cst_22 [2] : vector<2x8x8xf32> to vector<2x8xf32>
    %39 = vector.shape_cast %38 : vector<2x8xf32> to vector<2x8x1xf32>
    %40 = tpu.reciprocal %39 {approx = true} : vector<2x8x1xf32> -> vector<2x8x1xf32>
    %41 = vector.broadcast %40 : vector<2x8x1xf32> to vector<2x8x8xf32>
    %42 = arith.mulf %37, %41 : vector<2x8x8xf32>
    %43 = arith.truncf %42 : vector<2x8x8xf32> to vector<2x8x8xbf16>
    "tpu.trace_start"() <{level = 10 : i32, message = "bqk,bkd->bqd"}> : () -> ()
    %cst_23 = arith.constant dense<0.000000e+00> : vector<2x8x16xf32>
    %44 = tpu.matmul %43, %29, %cst_23 {dimension_numbers = #tpu.dot_dimension_numbers<[2], [1], [1], [2], [0, 0, 0, 1, 1, 2], [0], [0]>} : vector<2x8x8xbf16>, vector<2x8x16xbf16>, vector<2x8x16xf32> -> vector<2x8x16xf32>
    "tpu.trace_stop"() : () -> ()
    %45 = vector.extract_strided_slice %22 {offsets = [0, 0, 16], sizes = [2, 8, 16], strides = [1, 1, 1]} : vector<2x8x128xbf16> to vector<2x8x16xbf16>
    %46 = vector.extract_strided_slice %24 {offsets = [0, 0, 16], sizes = [2, 8, 16], strides = [1, 1, 1]} : vector<2x8x128xbf16> to vector<2x8x16xbf16>
    %47 = vector.extract_strided_slice %26 {offsets = [0, 0, 16], sizes = [2, 8, 16], strides = [1, 1, 1]} : vector<2x8x128xbf16> to vector<2x8x16xbf16>
    "tpu.trace_start"() <{level = 10 : i32, message = "bqd,bkd->bqk"}> : () -> ()
    %cst_24 = arith.constant dense<0.000000e+00> : vector<2x8x8xf32>
    %48 = tpu.matmul %45, %46, %cst_24 {dimension_numbers = #tpu.dot_dimension_numbers<[2], [2], [1], [1], [0, 0, 0, 1, 1, 1], [0], [0]>} : vector<2x8x16xbf16>, vector<2x8x16xbf16>, vector<2x8x8xf32> -> vector<2x8x8xf32>
    "tpu.trace_stop"() : () -> ()
    %cst_25 = arith.constant 2.500000e-01 : f32
    %49 = vector.broadcast %cst_25 : f32 to vector<2x8x8xf32>
    %50 = arith.mulf %48, %49 : vector<2x8x8xf32>
    %cst_26 = arith.constant dense<0xFF800000> : vector<2x8xf32>
    %51 = vector.multi_reduction <maximumf>, %50, %cst_26 [2] : vector<2x8x8xf32> to vector<2x8xf32>
    %52 = vector.shape_cast %51 : vector<2x8xf32> to vector<2x8x1xf32>
    %53 = vector.broadcast %52 : vector<2x8x1xf32> to vector<2x8x8xf32>
    %54 = arith.subf %50, %53 : vector<2x8x8xf32>
    %55 = math.exp %54 : vector<2x8x8xf32>
    %cst_27 = arith.constant dense<0.000000e+00> : vector<2x8xf32>
    %56 = vector.multi_reduction <add>, %55, %cst_27 [2] : vector<2x8x8xf32> to vector<2x8xf32>
    %57 = vector.shape_cast %56 : vector<2x8xf32> to vector<2x8x1xf32>
    %58 = tpu.reciprocal %57 {approx = true} : vector<2x8x1xf32> -> vector<2x8x1xf32>
    %59 = vector.broadcast %58 : vector<2x8x1xf32> to vector<2x8x8xf32>
    %60 = arith.mulf %55, %59 : vector<2x8x8xf32>
    %61 = arith.truncf %60 : vector<2x8x8xf32> to vector<2x8x8xbf16>
    "tpu.trace_start"() <{level = 10 : i32, message = "bqk,bkd->bqd"}> : () -> ()
    %cst_28 = arith.constant dense<0.000000e+00> : vector<2x8x16xf32>
    %62 = tpu.matmul %61, %47, %cst_28 {dimension_numbers = #tpu.dot_dimension_numbers<[2], [1], [1], [2], [0, 0, 0, 1, 1, 2], [0], [0]>} : vector<2x8x8xbf16>, vector<2x8x16xbf16>, vector<2x8x16xf32> -> vector<2x8x16xf32>
    "tpu.trace_stop"() : () -> ()
    %63 = vector.extract_strided_slice %22 {offsets = [0, 0, 32], sizes = [2, 8, 16], strides = [1, 1, 1]} : vector<2x8x128xbf16> to vector<2x8x16xbf16>
    %64 = vector.extract_strided_slice %24 {offsets = [0, 0, 32], sizes = [2, 8, 16], strides = [1, 1, 1]} : vector<2x8x128xbf16> to vector<2x8x16xbf16>
    %65 = vector.extract_strided_slice %26 {offsets = [0, 0, 32], sizes = [2, 8, 16], strides = [1, 1, 1]} : vector<2x8x128xbf16> to vector<2x8x16xbf16>
    "tpu.trace_start"() <{level = 10 : i32, message = "bqd,bkd->bqk"}> : () -> ()
    %cst_29 = arith.constant dense<0.000000e+00> : vector<2x8x8xf32>
    %66 = tpu.matmul %63, %64, %cst_29 {dimension_numbers = #tpu.dot_dimension_numbers<[2], [2], [1], [1], [0, 0, 0, 1, 1, 1], [0], [0]>} : vector<2x8x16xbf16>, vector<2x8x16xbf16>, vector<2x8x8xf32> -> vector<2x8x8xf32>
    "tpu.trace_stop"() : () -> ()
    %cst_30 = arith.constant 2.500000e-01 : f32
    %67 = vector.broadcast %cst_30 : f32 to vector<2x8x8xf32>
    %68 = arith.mulf %66, %67 : vector<2x8x8xf32>
    %cst_31 = arith.constant dense<0xFF800000> : vector<2x8xf32>
    %69 = vector.multi_reduction <maximumf>, %68, %cst_31 [2] : vector<2x8x8xf32> to vector<2x8xf32>
    %70 = vector.shape_cast %69 : vector<2x8xf32> to vector<2x8x1xf32>
    %71 = vector.broadcast %70 : vector<2x8x1xf32> to vector<2x8x8xf32>
    %72 = arith.subf %68, %71 : vector<2x8x8xf32>
    %73 = math.exp %72 : vector<2x8x8xf32>
    %cst_32 = arith.constant dense<0.000000e+00> : vector<2x8xf32>
    %74 = vector.multi_reduction <add>, %73, %cst_32 [2] : vector<2x8x8xf32> to vector<2x8xf32>
    %75 = vector.shape_cast %74 : vector<2x8xf32> to vector<2x8x1xf32>
    %76 = tpu.reciprocal %75 {approx = true} : vector<2x8x1xf32> -> vector<2x8x1xf32>
    %77 = vector.broadcast %76 : vector<2x8x1xf32> to vector<2x8x8xf32>
    %78 = arith.mulf %73, %77 : vector<2x8x8xf32>
    %79 = arith.truncf %78 : vector<2x8x8xf32> to vector<2x8x8xbf16>
    "tpu.trace_start"() <{level = 10 : i32, message = "bqk,bkd->bqd"}> : () -> ()
    %cst_33 = arith.constant dense<0.000000e+00> : vector<2x8x16xf32>
    %80 = tpu.matmul %79, %65, %cst_33 {dimension_numbers = #tpu.dot_dimension_numbers<[2], [1], [1], [2], [0, 0, 0, 1, 1, 2], [0], [0]>} : vector<2x8x8xbf16>, vector<2x8x16xbf16>, vector<2x8x16xf32> -> vector<2x8x16xf32>
    "tpu.trace_stop"() : () -> ()
    %81 = vector.extract_strided_slice %22 {offsets = [0, 0, 48], sizes = [2, 8, 16], strides = [1, 1, 1]} : vector<2x8x128xbf16> to vector<2x8x16xbf16>
    %82 = vector.extract_strided_slice %24 {offsets = [0, 0, 48], sizes = [2, 8, 16], strides = [1, 1, 1]} : vector<2x8x128xbf16> to vector<2x8x16xbf16>
    %83 = vector.extract_strided_slice %26 {offsets = [0, 0, 48], sizes = [2, 8, 16], strides = [1, 1, 1]} : vector<2x8x128xbf16> to vector<2x8x16xbf16>
    "tpu.trace_start"() <{level = 10 : i32, message = "bqd,bkd->bqk"}> : () -> ()
    %cst_34 = arith.constant dense<0.000000e+00> : vector<2x8x8xf32>
    %84 = tpu.matmul %81, %82, %cst_34 {dimension_numbers = #tpu.dot_dimension_numbers<[2], [2], [1], [1], [0, 0, 0, 1, 1, 1], [0], [0]>} : vector<2x8x16xbf16>, vector<2x8x16xbf16>, vector<2x8x8xf32> -> vector<2x8x8xf32>
    "tpu.trace_stop"() : () -> ()
    %cst_35 = arith.constant 2.500000e-01 : f32
    %85 = vector.broadcast %cst_35 : f32 to vector<2x8x8xf32>
    %86 = arith.mulf %84, %85 : vector<2x8x8xf32>
    %cst_36 = arith.constant dense<0xFF800000> : vector<2x8xf32>
    %87 = vector.multi_reduction <maximumf>, %86, %cst_36 [2] : vector<2x8x8xf32> to vector<2x8xf32>
    %88 = vector.shape_cast %87 : vector<2x8xf32> to vector<2x8x1xf32>
    %89 = vector.broadcast %88 : vector<2x8x1xf32> to vector<2x8x8xf32>
    %90 = arith.subf %86, %89 : vector<2x8x8xf32>
    %91 = math.exp %90 : vector<2x8x8xf32>
    %cst_37 = arith.constant dense<0.000000e+00> : vector<2x8xf32>
    %92 = vector.multi_reduction <add>, %91, %cst_37 [2] : vector<2x8x8xf32> to vector<2x8xf32>
    %93 = vector.shape_cast %92 : vector<2x8xf32> to vector<2x8x1xf32>
    %94 = tpu.reciprocal %93 {approx = true} : vector<2x8x1xf32> -> vector<2x8x1xf32>
    %95 = vector.broadcast %94 : vector<2x8x1xf32> to vector<2x8x8xf32>
    %96 = arith.mulf %91, %95 : vector<2x8x8xf32>
    %97 = arith.truncf %96 : vector<2x8x8xf32> to vector<2x8x8xbf16>
    "tpu.trace_start"() <{level = 10 : i32, message = "bqk,bkd->bqd"}> : () -> ()
    %cst_38 = arith.constant dense<0.000000e+00> : vector<2x8x16xf32>
    %98 = tpu.matmul %97, %83, %cst_38 {dimension_numbers = #tpu.dot_dimension_numbers<[2], [1], [1], [2], [0, 0, 0, 1, 1, 2], [0], [0]>} : vector<2x8x8xbf16>, vector<2x8x16xbf16>, vector<2x8x16xf32> -> vector<2x8x16xf32>
    "tpu.trace_stop"() : () -> ()
    %99 = vector.extract_strided_slice %22 {offsets = [0, 0, 64], sizes = [2, 8, 16], strides = [1, 1, 1]} : vector<2x8x128xbf16> to vector<2x8x16xbf16>
    %100 = vector.extract_strided_slice %24 {offsets = [0, 0, 64], sizes = [2, 8, 16], strides = [1, 1, 1]} : vector<2x8x128xbf16> to vector<2x8x16xbf16>
    %101 = vector.extract_strided_slice %26 {offsets = [0, 0, 64], sizes = [2, 8, 16], strides = [1, 1, 1]} : vector<2x8x128xbf16> to vector<2x8x16xbf16>
    "tpu.trace_start"() <{level = 10 : i32, message = "bqd,bkd->bqk"}> : () -> ()
    %cst_39 = arith.constant dense<0.000000e+00> : vector<2x8x8xf32>
    %102 = tpu.matmul %99, %100, %cst_39 {dimension_numbers = #tpu.dot_dimension_numbers<[2], [2], [1], [1], [0, 0, 0, 1, 1, 1], [0], [0]>} : vector<2x8x16xbf16>, vector<2x8x16xbf16>, vector<2x8x8xf32> -> vector<2x8x8xf32>
    "tpu.trace_stop"() : () -> ()
    %cst_40 = arith.constant 2.500000e-01 : f32
    %103 = vector.broadcast %cst_40 : f32 to vector<2x8x8xf32>
    %104 = arith.mulf %102, %103 : vector<2x8x8xf32>
    %cst_41 = arith.constant dense<0xFF800000> : vector<2x8xf32>
    %105 = vector.multi_reduction <maximumf>, %104, %cst_41 [2] : vector<2x8x8xf32> to vector<2x8xf32>
    %106 = vector.shape_cast %105 : vector<2x8xf32> to vector<2x8x1xf32>
    %107 = vector.broadcast %106 : vector<2x8x1xf32> to vector<2x8x8xf32>
    %108 = arith.subf %104, %107 : vector<2x8x8xf32>
    %109 = math.exp %108 : vector<2x8x8xf32>
    %cst_42 = arith.constant dense<0.000000e+00> : vector<2x8xf32>
    %110 = vector.multi_reduction <add>, %109, %cst_42 [2] : vector<2x8x8xf32> to vector<2x8xf32>
    %111 = vector.shape_cast %110 : vector<2x8xf32> to vector<2x8x1xf32>
    %112 = tpu.reciprocal %111 {approx = true} : vector<2x8x1xf32> -> vector<2x8x1xf32>
    %113 = vector.broadcast %112 : vector<2x8x1xf32> to vector<2x8x8xf32>
    %114 = arith.mulf %109, %113 : vector<2x8x8xf32>
    %115 = arith.truncf %114 : vector<2x8x8xf32> to vector<2x8x8xbf16>
    "tpu.trace_start"() <{level = 10 : i32, message = "bqk,bkd->bqd"}> : () -> ()
    %cst_43 = arith.constant dense<0.000000e+00> : vector<2x8x16xf32>
    %116 = tpu.matmul %115, %101, %cst_43 {dimension_numbers = #tpu.dot_dimension_numbers<[2], [1], [1], [2], [0, 0, 0, 1, 1, 2], [0], [0]>} : vector<2x8x8xbf16>, vector<2x8x16xbf16>, vector<2x8x16xf32> -> vector<2x8x16xf32>
    "tpu.trace_stop"() : () -> ()
    %117 = vector.extract_strided_slice %22 {offsets = [0, 0, 80], sizes = [2, 8, 16], strides = [1, 1, 1]} : vector<2x8x128xbf16> to vector<2x8x16xbf16>
    %118 = vector.extract_strided_slice %24 {offsets = [0, 0, 80], sizes = [2, 8, 16], strides = [1, 1, 1]} : vector<2x8x128xbf16> to vector<2x8x16xbf16>
    %119 = vector.extract_strided_slice %26 {offsets = [0, 0, 80], sizes = [2, 8, 16], strides = [1, 1, 1]} : vector<2x8x128xbf16> to vector<2x8x16xbf16>
    "tpu.trace_start"() <{level = 10 : i32, message = "bqd,bkd->bqk"}> : () -> ()
    %cst_44 = arith.constant dense<0.000000e+00> : vector<2x8x8xf32>
    %120 = tpu.matmul %117, %118, %cst_44 {dimension_numbers = #tpu.dot_dimension_numbers<[2], [2], [1], [1], [0, 0, 0, 1, 1, 1], [0], [0]>} : vector<2x8x16xbf16>, vector<2x8x16xbf16>, vector<2x8x8xf32> -> vector<2x8x8xf32>
    "tpu.trace_stop"() : () -> ()
    %cst_45 = arith.constant 2.500000e-01 : f32
    %121 = vector.broadcast %cst_45 : f32 to vector<2x8x8xf32>
    %122 = arith.mulf %120, %121 : vector<2x8x8xf32>
    %cst_46 = arith.constant dense<0xFF800000> : vector<2x8xf32>
    %123 = vector.multi_reduction <maximumf>, %122, %cst_46 [2] : vector<2x8x8xf32> to vector<2x8xf32>
    %124 = vector.shape_cast %123 : vector<2x8xf32> to vector<2x8x1xf32>
    %125 = vector.broadcast %124 : vector<2x8x1xf32> to vector<2x8x8xf32>
    %126 = arith.subf %122, %125 : vector<2x8x8xf32>
    %127 = math.exp %126 : vector<2x8x8xf32>
    %cst_47 = arith.constant dense<0.000000e+00> : vector<2x8xf32>
    %128 = vector.multi_reduction <add>, %127, %cst_47 [2] : vector<2x8x8xf32> to vector<2x8xf32>
    %129 = vector.shape_cast %128 : vector<2x8xf32> to vector<2x8x1xf32>
    %130 = tpu.reciprocal %129 {approx = true} : vector<2x8x1xf32> -> vector<2x8x1xf32>
    %131 = vector.broadcast %130 : vector<2x8x1xf32> to vector<2x8x8xf32>
    %132 = arith.mulf %127, %131 : vector<2x8x8xf32>
    %133 = arith.truncf %132 : vector<2x8x8xf32> to vector<2x8x8xbf16>
    "tpu.trace_start"() <{level = 10 : i32, message = "bqk,bkd->bqd"}> : () -> ()
    %cst_48 = arith.constant dense<0.000000e+00> : vector<2x8x16xf32>
    %134 = tpu.matmul %133, %119, %cst_48 {dimension_numbers = #tpu.dot_dimension_numbers<[2], [1], [1], [2], [0, 0, 0, 1, 1, 2], [0], [0]>} : vector<2x8x8xbf16>, vector<2x8x16xbf16>, vector<2x8x16xf32> -> vector<2x8x16xf32>
    "tpu.trace_stop"() : () -> ()
    %135 = vector.extract_strided_slice %22 {offsets = [0, 0, 96], sizes = [2, 8, 16], strides = [1, 1, 1]} : vector<2x8x128xbf16> to vector<2x8x16xbf16>
    %136 = vector.extract_strided_slice %24 {offsets = [0, 0, 96], sizes = [2, 8, 16], strides = [1, 1, 1]} : vector<2x8x128xbf16> to vector<2x8x16xbf16>
    %137 = vector.extract_strided_slice %26 {offsets = [0, 0, 96], sizes = [2, 8, 16], strides = [1, 1, 1]} : vector<2x8x128xbf16> to vector<2x8x16xbf16>
    "tpu.trace_start"() <{level = 10 : i32, message = "bqd,bkd->bqk"}> : () -> ()
    %cst_49 = arith.constant dense<0.000000e+00> : vector<2x8x8xf32>
    %138 = tpu.matmul %135, %136, %cst_49 {dimension_numbers = #tpu.dot_dimension_numbers<[2], [2], [1], [1], [0, 0, 0, 1, 1, 1], [0], [0]>} : vector<2x8x16xbf16>, vector<2x8x16xbf16>, vector<2x8x8xf32> -> vector<2x8x8xf32>
    "tpu.trace_stop"() : () -> ()
    %cst_50 = arith.constant 2.500000e-01 : f32
    %139 = vector.broadcast %cst_50 : f32 to vector<2x8x8xf32>
    %140 = arith.mulf %138, %139 : vector<2x8x8xf32>
    %cst_51 = arith.constant dense<0xFF800000> : vector<2x8xf32>
    %141 = vector.multi_reduction <maximumf>, %140, %cst_51 [2] : vector<2x8x8xf32> to vector<2x8xf32>
    %142 = vector.shape_cast %141 : vector<2x8xf32> to vector<2x8x1xf32>
    %143 = vector.broadcast %142 : vector<2x8x1xf32> to vector<2x8x8xf32>
    %144 = arith.subf %140, %143 : vector<2x8x8xf32>
    %145 = math.exp %144 : vector<2x8x8xf32>
    %cst_52 = arith.constant dense<0.000000e+00> : vector<2x8xf32>
    %146 = vector.multi_reduction <add>, %145, %cst_52 [2] : vector<2x8x8xf32> to vector<2x8xf32>
    %147 = vector.shape_cast %146 : vector<2x8xf32> to vector<2x8x1xf32>
    %148 = tpu.reciprocal %147 {approx = true} : vector<2x8x1xf32> -> vector<2x8x1xf32>
    %149 = vector.broadcast %148 : vector<2x8x1xf32> to vector<2x8x8xf32>
    %150 = arith.mulf %145, %149 : vector<2x8x8xf32>
    %151 = arith.truncf %150 : vector<2x8x8xf32> to vector<2x8x8xbf16>
    "tpu.trace_start"() <{level = 10 : i32, message = "bqk,bkd->bqd"}> : () -> ()
    %cst_53 = arith.constant dense<0.000000e+00> : vector<2x8x16xf32>
    %152 = tpu.matmul %151, %137, %cst_53 {dimension_numbers = #tpu.dot_dimension_numbers<[2], [1], [1], [2], [0, 0, 0, 1, 1, 2], [0], [0]>} : vector<2x8x8xbf16>, vector<2x8x16xbf16>, vector<2x8x16xf32> -> vector<2x8x16xf32>
    "tpu.trace_stop"() : () -> ()
    %153 = vector.extract_strided_slice %22 {offsets = [0, 0, 112], sizes = [2, 8, 16], strides = [1, 1, 1]} : vector<2x8x128xbf16> to vector<2x8x16xbf16>
    %154 = vector.extract_strided_slice %24 {offsets = [0, 0, 112], sizes = [2, 8, 16], strides = [1, 1, 1]} : vector<2x8x128xbf16> to vector<2x8x16xbf16>
    %155 = vector.extract_strided_slice %26 {offsets = [0, 0, 112], sizes = [2, 8, 16], strides = [1, 1, 1]} : vector<2x8x128xbf16> to vector<2x8x16xbf16>
    "tpu.trace_start"() <{level = 10 : i32, message = "bqd,bkd->bqk"}> : () -> ()
    %cst_54 = arith.constant dense<0.000000e+00> : vector<2x8x8xf32>
    %156 = tpu.matmul %153, %154, %cst_54 {dimension_numbers = #tpu.dot_dimension_numbers<[2], [2], [1], [1], [0, 0, 0, 1, 1, 1], [0], [0]>} : vector<2x8x16xbf16>, vector<2x8x16xbf16>, vector<2x8x8xf32> -> vector<2x8x8xf32>
    "tpu.trace_stop"() : () -> ()
    %cst_55 = arith.constant 2.500000e-01 : f32
    %157 = vector.broadcast %cst_55 : f32 to vector<2x8x8xf32>
    %158 = arith.mulf %156, %157 : vector<2x8x8xf32>
    %cst_56 = arith.constant dense<0xFF800000> : vector<2x8xf32>
    %159 = vector.multi_reduction <maximumf>, %158, %cst_56 [2] : vector<2x8x8xf32> to vector<2x8xf32>
    %160 = vector.shape_cast %159 : vector<2x8xf32> to vector<2x8x1xf32>
    %161 = vector.broadcast %160 : vector<2x8x1xf32> to vector<2x8x8xf32>
    %162 = arith.subf %158, %161 : vector<2x8x8xf32>
    %163 = math.exp %162 : vector<2x8x8xf32>
    %cst_57 = arith.constant dense<0.000000e+00> : vector<2x8xf32>
    %164 = vector.multi_reduction <add>, %163, %cst_57 [2] : vector<2x8x8xf32> to vector<2x8xf32>
    %165 = vector.shape_cast %164 : vector<2x8xf32> to vector<2x8x1xf32>
    %166 = tpu.reciprocal %165 {approx = true} : vector<2x8x1xf32> -> vector<2x8x1xf32>
    %167 = vector.broadcast %166 : vector<2x8x1xf32> to vector<2x8x8xf32>
    %168 = arith.mulf %163, %167 : vector<2x8x8xf32>
    %169 = arith.truncf %168 : vector<2x8x8xf32> to vector<2x8x8xbf16>
    "tpu.trace_start"() <{level = 10 : i32, message = "bqk,bkd->bqd"}> : () -> ()
    %cst_58 = arith.constant dense<0.000000e+00> : vector<2x8x16xf32>
    %170 = tpu.matmul %169, %155, %cst_58 {dimension_numbers = #tpu.dot_dimension_numbers<[2], [1], [1], [2], [0, 0, 0, 1, 1, 2], [0], [0]>} : vector<2x8x8xbf16>, vector<2x8x16xbf16>, vector<2x8x16xf32> -> vector<2x8x16xf32>
    "tpu.trace_stop"() : () -> ()
    %171 = tpu.concatenate %44, %62, %80, %98, %116, %134, %152, %170 in 2 : vector<2x8x16xf32>, vector<2x8x16xf32>, vector<2x8x16xf32>, vector<2x8x16xf32>, vector<2x8x16xf32>, vector<2x8x16xf32>, vector<2x8x16xf32>, vector<2x8x16xf32> -> vector<2x8x128xf32>
    %172 = vector.shape_cast %171 : vector<2x8x128xf32> to vector<16x128xf32>
    %173 = arith.truncf %172 : vector<16x128xf32> to vector<16x128xbf16>
    %c0_59 = arith.constant 0 : index
    %c0_60 = arith.constant 0 : index
    %174 = vector.load %arg9[%c0_59, %c0_60] : memref<128x128xbf16, #tpu.memory_space<vmem>>, vector<128x128xbf16>
    %cst_61 = arith.constant dense<0.000000e+00> : vector<16x128xf32>
    %175 = tpu.matmul %173, %174, %cst_61 {dimension_numbers = #tpu.dot_dimension_numbers<[1], [0], [0], [1], [0, 0, 1, 1], [], []>} : vector<16x128xbf16>, vector<128x128xbf16>, vector<16x128xf32> -> vector<16x128xf32>
    %c0_62 = arith.constant 0 : index
    %c0_63 = arith.constant 0 : index
    %176 = vector.load %arg10[%c0_62, %c0_63] : memref<1x128xf32, #tpu.memory_space<vmem>>, vector<1x128xf32>
    %177 = vector.broadcast %176 : vector<1x128xf32> to vector<16x128xf32>
    %178 = arith.addf %175, %177 : vector<16x128xf32>
    %179 = arith.addf %178, %1 : vector<16x128xf32>
    %c0_64 = arith.constant 0 : index
    %c0_65 = arith.constant 0 : index
    %180 = vector.load %arg11[%c0_64, %c0_65] : memref<1x128xf32, #tpu.memory_space<vmem>>, vector<1x128xf32>
    %c0_66 = arith.constant 0 : index
    %c0_67 = arith.constant 0 : index
    %181 = vector.load %arg12[%c0_66, %c0_67] : memref<1x128xf32, #tpu.memory_space<vmem>>, vector<1x128xf32>
    %cst_68 = arith.constant dense<0.000000e+00> : vector<16xf32>
    %182 = vector.multi_reduction <add>, %179, %cst_68 [1] : vector<16x128xf32> to vector<16xf32>
    %183 = vector.shape_cast %182 : vector<16xf32> to vector<16x1xf32>
    %cst_69 = arith.constant 1.280000e+02 : f32
    %184 = vector.broadcast %cst_69 : f32 to vector<16x1xf32>
    %185 = arith.divf %183, %184 : vector<16x1xf32>
    %186 = vector.broadcast %185 : vector<16x1xf32> to vector<16x128xf32>
    %187 = arith.subf %179, %186 : vector<16x128xf32>
    %188 = arith.mulf %187, %187 : vector<16x128xf32>
    %cst_70 = arith.constant dense<0.000000e+00> : vector<16xf32>
    %189 = vector.multi_reduction <add>, %188, %cst_70 [1] : vector<16x128xf32> to vector<16xf32>
    %190 = vector.shape_cast %189 : vector<16xf32> to vector<16x1xf32>
    %cst_71 = arith.constant 1.280000e+02 : f32
    %191 = vector.broadcast %cst_71 : f32 to vector<16x1xf32>
    %192 = arith.divf %190, %191 : vector<16x1xf32>
    %cst_72 = arith.constant 9.99999974E-6 : f32
    %193 = vector.broadcast %cst_72 : f32 to vector<16x1xf32>
    %194 = arith.addf %192, %193 : vector<16x1xf32>
    %195 = math.rsqrt %194 : vector<16x1xf32>
    %196 = vector.broadcast %195 : vector<16x1xf32> to vector<16x128xf32>
    %197 = arith.mulf %187, %196 : vector<16x128xf32>
    %198 = vector.broadcast %180 : vector<1x128xf32> to vector<16x128xf32>
    %199 = arith.mulf %197, %198 : vector<16x128xf32>
    %200 = vector.broadcast %181 : vector<1x128xf32> to vector<16x128xf32>
    %201 = arith.addf %199, %200 : vector<16x128xf32>
    %202 = arith.truncf %201 : vector<16x128xf32> to vector<16x128xbf16>
    %c0_73 = arith.constant 0 : index
    %c0_74 = arith.constant 0 : index
    %203 = vector.load %arg13[%c0_73, %c0_74] : memref<128x512xbf16, #tpu.memory_space<vmem>>, vector<128x512xbf16>
    %cst_75 = arith.constant dense<0.000000e+00> : vector<16x512xf32>
    %204 = tpu.matmul %202, %203, %cst_75 {dimension_numbers = #tpu.dot_dimension_numbers<[1], [0], [0], [1], [0, 0, 1, 1], [], []>} : vector<16x128xbf16>, vector<128x512xbf16>, vector<16x512xf32> -> vector<16x512xf32>
    %c0_76 = arith.constant 0 : index
    %c0_77 = arith.constant 0 : index
    %205 = vector.load %arg14[%c0_76, %c0_77] : memref<1x512xf32, #tpu.memory_space<vmem>>, vector<1x512xf32>
    %206 = vector.broadcast %205 : vector<1x512xf32> to vector<16x512xf32>
    %207 = arith.addf %204, %206 : vector<16x512xf32>
    %cst_78 = arith.constant 5.000000e-01 : f32
    %208 = vector.broadcast %cst_78 : f32 to vector<16x512xf32>
    %209 = arith.mulf %208, %207 : vector<16x512xf32>
    %cst_79 = arith.constant 0.707106769 : f32
    %210 = vector.broadcast %cst_79 : f32 to vector<16x512xf32>
    %211 = arith.mulf %207, %210 : vector<16x512xf32>
    %cst_80 = arith.constant 0.000000e+00 : f32
    %212 = vector.broadcast %cst_80 : f32 to vector<16x512xf32>
    %213 = arith.cmpf oge, %211, %212 : vector<16x512xf32>
    %cst_81 = arith.constant 1.000000e+00 : f32
    %cst_82 = arith.constant -1.000000e+00 : f32
    %214 = vector.broadcast %cst_81 : f32 to vector<16x512xf32>
    %215 = vector.broadcast %cst_82 : f32 to vector<16x512xf32>
    %216 = arith.select %213, %214, %215 : vector<16x512xi1>, vector<16x512xf32>
    %217 = math.absf %211 : vector<16x512xf32>
    %cst_83 = arith.constant 0.327591091 : f32
    %218 = vector.broadcast %cst_83 : f32 to vector<16x512xf32>
    %219 = arith.mulf %218, %217 : vector<16x512xf32>
    %cst_84 = arith.constant 1.000000e+00 : f32
    %220 = vector.broadcast %cst_84 : f32 to vector<16x512xf32>
    %221 = arith.addf %220, %219 : vector<16x512xf32>
    %222 = tpu.reciprocal %221 {approx = true} : vector<16x512xf32> -> vector<16x512xf32>
    %cst_85 = arith.constant 1.06140542 : f32
    %223 = vector.broadcast %cst_85 : f32 to vector<16x512xf32>
    %224 = arith.mulf %223, %222 : vector<16x512xf32>
    %cst_86 = arith.constant -1.45315206 : f32
    %225 = vector.broadcast %cst_86 : f32 to vector<16x512xf32>
    %226 = arith.addf %224, %225 : vector<16x512xf32>
    %227 = arith.mulf %226, %222 : vector<16x512xf32>
    %cst_87 = arith.constant 1.42141378 : f32
    %228 = vector.broadcast %cst_87 : f32 to vector<16x512xf32>
    %229 = arith.addf %227, %228 : vector<16x512xf32>
    %230 = arith.mulf %229, %222 : vector<16x512xf32>
    %cst_88 = arith.constant -0.284496725 : f32
    %231 = vector.broadcast %cst_88 : f32 to vector<16x512xf32>
    %232 = arith.addf %230, %231 : vector<16x512xf32>
    %233 = arith.mulf %232, %222 : vector<16x512xf32>
    %cst_89 = arith.constant 0.254829586 : f32
    %234 = vector.broadcast %cst_89 : f32 to vector<16x512xf32>
    %235 = arith.addf %233, %234 : vector<16x512xf32>
    %236 = arith.mulf %235, %222 : vector<16x512xf32>
    %cst_90 = arith.constant 0.000000e+00 : f32
    %237 = vector.broadcast %cst_90 : f32 to vector<16x512xf32>
    %238 = arith.subf %237, %217 : vector<16x512xf32>
    %239 = arith.mulf %238, %217 : vector<16x512xf32>
    %240 = math.exp %239 : vector<16x512xf32>
    %241 = arith.mulf %236, %240 : vector<16x512xf32>
    %cst_91 = arith.constant 1.000000e+00 : f32
    %242 = vector.broadcast %cst_91 : f32 to vector<16x512xf32>
    %243 = arith.subf %242, %241 : vector<16x512xf32>
    %244 = arith.mulf %216, %243 : vector<16x512xf32>
    %cst_92 = arith.constant 1.000000e+00 : f32
    %245 = vector.broadcast %cst_92 : f32 to vector<16x512xf32>
    %246 = arith.addf %245, %244 : vector<16x512xf32>
    %247 = arith.mulf %209, %246 : vector<16x512xf32>
    %248 = arith.truncf %247 : vector<16x512xf32> to vector<16x512xbf16>
    %c0_93 = arith.constant 0 : index
    %c0_94 = arith.constant 0 : index
    %249 = vector.load %arg15[%c0_93, %c0_94] : memref<512x128xbf16, #tpu.memory_space<vmem>>, vector<512x128xbf16>
    %cst_95 = arith.constant dense<0.000000e+00> : vector<16x128xf32>
    %250 = tpu.matmul %248, %249, %cst_95 {dimension_numbers = #tpu.dot_dimension_numbers<[1], [0], [0], [1], [0, 0, 1, 1], [], []>} : vector<16x512xbf16>, vector<512x128xbf16>, vector<16x128xf32> -> vector<16x128xf32>
    %c0_96 = arith.constant 0 : index
    %c0_97 = arith.constant 0 : index
    %251 = vector.load %arg16[%c0_96, %c0_97] : memref<1x128xf32, #tpu.memory_space<vmem>>, vector<1x128xf32>
    %252 = vector.broadcast %251 : vector<1x128xf32> to vector<16x128xf32>
    %253 = arith.addf %250, %252 : vector<16x128xf32>
    %254 = arith.addf %253, %201 : vector<16x128xf32>
    %c0_98 = arith.constant 0 : index
    %c0_99 = arith.constant 0 : index
    %255 = vector.load %arg17[%c0_98, %c0_99] : memref<1x128xf32, #tpu.memory_space<vmem>>, vector<1x128xf32>
    %c0_100 = arith.constant 0 : index
    %c0_101 = arith.constant 0 : index
    %256 = vector.load %arg18[%c0_100, %c0_101] : memref<1x128xf32, #tpu.memory_space<vmem>>, vector<1x128xf32>
    %cst_102 = arith.constant dense<0.000000e+00> : vector<16xf32>
    %257 = vector.multi_reduction <add>, %254, %cst_102 [1] : vector<16x128xf32> to vector<16xf32>
    %258 = vector.shape_cast %257 : vector<16xf32> to vector<16x1xf32>
    %cst_103 = arith.constant 1.280000e+02 : f32
    %259 = vector.broadcast %cst_103 : f32 to vector<16x1xf32>
    %260 = arith.divf %258, %259 : vector<16x1xf32>
    %261 = vector.broadcast %260 : vector<16x1xf32> to vector<16x128xf32>
    %262 = arith.subf %254, %261 : vector<16x128xf32>
    %263 = arith.mulf %262, %262 : vector<16x128xf32>
    %cst_104 = arith.constant dense<0.000000e+00> : vector<16xf32>
    %264 = vector.multi_reduction <add>, %263, %cst_104 [1] : vector<16x128xf32> to vector<16xf32>
    %265 = vector.shape_cast %264 : vector<16xf32> to vector<16x1xf32>
    %cst_105 = arith.constant 1.280000e+02 : f32
    %266 = vector.broadcast %cst_105 : f32 to vector<16x1xf32>
    %267 = arith.divf %265, %266 : vector<16x1xf32>
    %cst_106 = arith.constant 9.99999974E-6 : f32
    %268 = vector.broadcast %cst_106 : f32 to vector<16x1xf32>
    %269 = arith.addf %267, %268 : vector<16x1xf32>
    %270 = math.rsqrt %269 : vector<16x1xf32>
    %271 = vector.broadcast %270 : vector<16x1xf32> to vector<16x128xf32>
    %272 = arith.mulf %262, %271 : vector<16x128xf32>
    %273 = vector.broadcast %255 : vector<1x128xf32> to vector<16x128xf32>
    %274 = arith.mulf %272, %273 : vector<16x128xf32>
    %275 = vector.broadcast %256 : vector<1x128xf32> to vector<16x128xf32>
    %276 = arith.addf %274, %275 : vector<16x128xf32>
    %277 = vector.shape_cast %276 : vector<16x128xf32> to vector<2x8x128xf32>
    %c0_107 = arith.constant 0 : index
    %c0_108 = arith.constant 0 : index
    %c0_109 = arith.constant 0 : index
    %278 = vector.load %arg19[%c0_107, %c0_108, %c0_109] : memref<2x8x128xf32, #tpu.memory_space<vmem>>, vector<2x8x128xf32>
    tpu.vector_store %arg19[%c0_107, %c0_108, %c0_109], %277 {strides = array<i32>} : memref<2x8x128xf32, #tpu.memory_space<vmem>>, vector<2x8x128xf32>,
    return
  }
  func.func @transform_0(%arg0: i32) -> (i32, i32, i32) {
    %c0_i32 = arith.constant 0 : i32
    %c0_i32_0 = arith.constant 0 : i32
    %c0_i32_1 = arith.constant 0 : i32
    return %arg0, %c0_i32, %c0_i32_0 : i32, i32, i32
  }
  func.func @transform_1(%arg0: i32) -> (i32, i32, i32) {
    %c0_i32 = arith.constant 0 : i32
    %c0_i32_0 = arith.constant 0 : i32
    %c0_i32_1 = arith.constant 0 : i32
    return %arg0, %c0_i32, %c0_i32_0 : i32, i32, i32
  }
  func.func @transform_2(%arg0: i32) -> (i32, i32) {
    %c0_i32 = arith.constant 0 : i32
    %c0_i32_0 = arith.constant 0 : i32
    %c0_i32_1 = arith.constant 0 : i32
    return %c0_i32, %c0_i32_0 : i32, i32
  }
  func.func @transform_3(%arg0: i32) -> (i32, i32) {
    %c0_i32 = arith.constant 0 : i32
    %c0_i32_0 = arith.constant 0 : i32
    %c0_i32_1 = arith.constant 0 : i32
    return %c0_i32, %c0_i32_0 : i32, i32
  }
  func.func @transform_4(%arg0: i32) -> (i32, i32) {
    %c0_i32 = arith.constant 0 : i32
    %c0_i32_0 = arith.constant 0 : i32
    %c0_i32_1 = arith.constant 0 : i32
    return %c0_i32, %c0_i32_0 : i32, i32
  }
  func.func @transform_5(%arg0: i32) -> (i32, i32) {
    %c0_i32 = arith.constant 0 : i32
    %c0_i32_0 = arith.constant 0 : i32
    %c0_i32_1 = arith.constant 0 : i32
    return %c0_i32, %c0_i32_0 : i32, i32
  }
  func.func @transform_6(%arg0: i32) -> (i32, i32) {
    %c0_i32 = arith.constant 0 : i32
    %c0_i32_0 = arith.constant 0 : i32
    %c0_i32_1 = arith.constant 0 : i32
    return %c0_i32, %c0_i32_0 : i32, i32
  }
  func.func @transform_7(%arg0: i32) -> (i32, i32) {
    %c0_i32 = arith.constant 0 : i32
    %c0_i32_0 = arith.constant 0 : i32
    %c0_i32_1 = arith.constant 0 : i32
    return %c0_i32, %c0_i32_0 : i32, i32
  }
  func.func @transform_8(%arg0: i32) -> (i32, i32) {
    %c0_i32 = arith.constant 0 : i32
    %c0_i32_0 = arith.constant 0 : i32
    %c0_i32_1 = arith.constant 0 : i32
    return %c0_i32, %c0_i32_0 : i32, i32
  }
  func.func @transform_9(%arg0: i32) -> (i32, i32) {
    %c0_i32 = arith.constant 0 : i32
    %c0_i32_0 = arith.constant 0 : i32
    %c0_i32_1 = arith.constant 0 : i32
    return %c0_i32, %c0_i32_0 : i32, i32
  }
  func.func @transform_10(%arg0: i32) -> (i32, i32) {
    %c0_i32 = arith.constant 0 : i32
    %c0_i32_0 = arith.constant 0 : i32
    %c0_i32_1 = arith.constant 0 : i32
    return %c0_i32, %c0_i32_0 : i32, i32
  }
  func.func @transform_11(%arg0: i32) -> (i32, i32) {
    %c0_i32 = arith.constant 0 : i32
    %c0_i32_0 = arith.constant 0 : i32
    %c0_i32_1 = arith.constant 0 : i32
    return %c0_i32, %c0_i32_0 : i32, i32
  }
  func.func @transform_12(%arg0: i32) -> (i32, i32) {
    %c0_i32 = arith.constant 0 : i32
    %c0_i32_0 = arith.constant 0 : i32
    %c0_i32_1 = arith.constant 0 : i32
    return %c0_i32, %c0_i32_0 : i32, i32
  }
  func.func @transform_13(%arg0: i32) -> (i32, i32) {
    %c0_i32 = arith.constant 0 : i32
    %c0_i32_0 = arith.constant 0 : i32
    %c0_i32_1 = arith.constant 0 : i32
    return %c0_i32, %c0_i32_0 : i32, i32
  }
  func.func @transform_14(%arg0: i32) -> (i32, i32) {
    %c0_i32 = arith.constant 0 : i32
    %c0_i32_0 = arith.constant 0 : i32
    %c0_i32_1 = arith.constant 0 : i32
    return %c0_i32, %c0_i32_0 : i32, i32
  }
  func.func @transform_15(%arg0: i32) -> (i32, i32) {
    %c0_i32 = arith.constant 0 : i32
    %c0_i32_0 = arith.constant 0 : i32
    %c0_i32_1 = arith.constant 0 : i32
    return %c0_i32, %c0_i32_0 : i32, i32
  }
  func.func @transform_16(%arg0: i32) -> (i32, i32) {
    %c0_i32 = arith.constant 0 : i32
    %c0_i32_0 = arith.constant 0 : i32
    %c0_i32_1 = arith.constant 0 : i32
    return %c0_i32, %c0_i32_0 : i32, i32
  }
  func.func @transform_17(%arg0: i32) -> (i32, i32) {
    %c0_i32 = arith.constant 0 : i32
    %c0_i32_0 = arith.constant 0 : i32
    %c0_i32_1 = arith.constant 0 : i32
    return %c0_i32, %c0_i32_0 : i32, i32
  }
  func.func @transform_18(%arg0: i32) -> (i32, i32, i32) {
    %c0_i32 = arith.constant 0 : i32
    %c0_i32_0 = arith.constant 0 : i32
    %c0_i32_1 = arith.constant 0 : i32
    return %arg0, %c0_i32, %c0_i32_0 : i32, i32, i32
  }
}

</mosaic_0001>

<llo_original>
// kernel: tpu_custom_call.1
$region0: #{tpu_custom_call.1}
  #allocation0 [shape = 'u32[]', space=smem, size = 0x4, offset = 0x4, fixed_abs, tag = 'smem constant byte address 0x4 - core index']
  #allocation1 [shape = 'u32[144,128]{1,0:T(1,128)}', space=vmem, size = 0x12000, scoped, tag = 'internal scratch']
  %s0 = inlined_call_operand.hbm [shape: f32[2,8,128], index: 0, kind: input, shape index: {}]
  %s1 = inlined_call_operand.hbm [shape: f32[2,8,128], index: 1, kind: input, shape index: {}]
  %s2 = inlined_call_operand.hbm [shape: bf16[128,128], index: 2, kind: input, shape index: {}]
  %s3 = inlined_call_operand.hbm [shape: bf16[128,128], index: 3, kind: input, shape index: {}]
  %s4 = inlined_call_operand.hbm [shape: bf16[128,128], index: 4, kind: input, shape index: {}]
  %s5 = inlined_call_operand.vmem [shape: f32[1,128], index: 5, kind: input, shape index: {}]
  %s6 = inlined_call_operand.vmem [shape: f32[1,128], index: 6, kind: input, shape index: {}]
  %s7 = inlined_call_operand.vmem [shape: f32[1,128], index: 7, kind: input, shape index: {}]
  %s8 = inlined_call_operand.hbm [shape: bf16[128,128], index: 8, kind: input, shape index: {}]
  %s9 = inlined_call_operand.vmem [shape: f32[1,128], index: 9, kind: input, shape index: {}]
  %s10 = inlined_call_operand.vmem [shape: f32[1,128], index: 10, kind: input, shape index: {}]
  %s11 = inlined_call_operand.vmem [shape: f32[1,128], index: 11, kind: input, shape index: {}]
  %s12 = inlined_call_operand.hbm [shape: bf16[128,512], index: 12, kind: input, shape index: {}]
  %s13 = inlined_call_operand.vmem [shape: f32[1,512], index: 13, kind: input, shape index: {}]
  %s14 = inlined_call_operand.hbm [shape: bf16[512,128], index: 14, kind: input, shape index: {}]
  %s15 = inlined_call_operand.vmem [shape: f32[1,128], index: 15, kind: input, shape index: {}]
  %s16 = inlined_call_operand.vmem [shape: f32[1,128], index: 16, kind: input, shape index: {}]
  %s17 = inlined_call_operand.vmem [shape: f32[1,128], index: 17, kind: input, shape index: {}]
  %s18 = inlined_call_operand.hbm [shape: f32[2,8,128], index: 18, kind: output, shape index: {}]
  %s19 = sld [smem:[#allocation0]]
  $region114: #{tpu_custom_call.1} parent=0
    _
  %s21 = ssub.s32 1, %s19
  %s22 = scalar_select 0, %s21, %s19
  $region1: #{tpu_custom_call.1} parent=0
    #allocation2 [shape = 'u8[8192]{0}', space=vmem, size = 0x2000, scoped, tag = 'input window, operand 0, single buffered']
    #allocation3 [shape = 's32[1]{0}', space=sflag, size = 0x4, scoped, tag = 'scoped memory for tpu_custom_call.1']
    #allocation4 [shape = 's32[1]{0}', space=sflag, size = 0x4, scoped, tag = 'scoped memory for tpu_custom_call.1']
    #allocation5 [shape = 'u8[8192]{0}', space=vmem, size = 0x2000, scoped, tag = 'input window, operand 1, single buffered']
    #allocation6 [shape = 's32[1]{0}', space=sflag, size = 0x4, scoped, tag = 'scoped memory for tpu_custom_call.1']
    #allocation7 [shape = 'u8[32768]{0}', space=vmem, size = 0x8000, scoped, tag = 'input window, operand 2, single buffered']
    #allocation8 [shape = 'u8[32768]{0}', space=vmem, size = 0x8000, scoped, tag = 'input window, operand 3, single buffered']
    #allocation9 [shape = 's32[1]{0}', space=sflag, size = 0x4, scoped, tag = 'scoped memory for tpu_custom_call.1']
    #allocation10 [shape = 'u8[32768]{0}', space=vmem, size = 0x8000, scoped, tag = 'input window, operand 4, single buffered']
    #allocation11 [shape = 'u8[32768]{0}', space=vmem, size = 0x8000, scoped, tag = 'input window, operand 8, single buffered']
    #allocation12 [shape = 's32[1]{0}', space=sflag, size = 0x4, scoped, tag = 'scoped memory for tpu_custom_call.1']
    #allocation13 [shape = 'u8[131072]{0}', space=vmem, size = 0x20000, scoped, tag = 'input window, operand 12, single buffered']
    #allocation14 [shape = 'u8[131072]{0}', space=vmem, size = 0x20000, scoped, tag = 'input window, operand 14, single buffered']
    #allocation15 [shape = 's32[1]{0}', space=sflag, size = 0x4, scoped, tag = 'scoped memory for tpu_custom_call.1']
    #allocation16 [shape = 'u8[8192]{0}', space=vmem, size = 0x2000, scoped, tag = 'output window, operand 0, single buffered']
    %23 = vsyncpa [#allocation3], 0
    %24 = vsyncpa [#allocation6], 0
    %25 = vsyncpa [#allocation9], 0
    %26 = vsyncpa [#allocation12], 0
    %27 = vsyncpa [#allocation15], 0
    %28 = vsyncpa [#allocation4], 0
    // Predicated region
    $region2: #{tpu_custom_call.1} parent=1 // pred_check
      _
    $region3: #{tpu_custom_call.1} parent=1 // pred_check_branch
      %30 = sbr.rel (0) target = $region5
    $region4: #{tpu_custom_call.1} parent=1 // pred_region
      %s32 = ssub.s32 256, 256
      %33 = vsyncadd [#allocation3], %s32
      %s34 = sshll.u32 [#allocation2], 4
      %s35 = int_to_ptr.vmem [resolvable:$true] %s34
      %40 = dma.hbm_to_vmem [thread:$0]  %s0, 256, %s35, [#allocation3], 128, 128, 8
    $region5: #{tpu_custom_call.1} parent=1 // pred_fallthru
      _
    // Predicated region
    $region6: #{tpu_custom_call.1} parent=1 // pred_check
      _
    $region7: #{tpu_custom_call.1} parent=1 // pred_check_branch
      %42 = sbr.rel (0) target = $region9
    $region8: #{tpu_custom_call.1} parent=1 // pred_region
      %s44 = ssub.s32 256, 256
      %45 = vsyncadd [#allocation6], %s44
      %s46 = sshll.u32 [#allocation5], 4
      %s47 = int_to_ptr.vmem [resolvable:$true] %s46
      %52 = dma.hbm_to_vmem [thread:$0]  %s1, 256, %s47, [#allocation6], 128, 128, 8
    $region9: #{tpu_custom_call.1} parent=1 // pred_fallthru
      _
    // Predicated region
    $region10: #{tpu_custom_call.1} parent=1 // pred_check
      _
    $region11: #{tpu_custom_call.1} parent=1 // pred_check_branch
      %54 = sbr.rel (0) target = $region13
    $region12: #{tpu_custom_call.1} parent=1 // pred_region
      %s56 = ssub.s32 1024, 1024
      %57 = vsyncadd [#allocation6], %s56
      %s58 = sshll.u32 [#allocation7], 4
      %s59 = int_to_ptr.vmem [resolvable:$true] %s58
      %64 = dma.hbm_to_vmem [thread:$0]  %s2, 1024, %s59, [#allocation6], 64, 64, 4
    $region13: #{tpu_custom_call.1} parent=1 // pred_fallthru
      _
    // Predicated region
    $region14: #{tpu_custom_call.1} parent=1 // pred_check
      _
    $region15: #{tpu_custom_call.1} parent=1 // pred_check_branch
      %66 = sbr.rel (0) target = $region17
    $region16: #{tpu_custom_call.1} parent=1 // pred_region
      %s68 = ssub.s32 1024, 1024
      %69 = vsyncadd [#allocation9], %s68
      %s70 = sshll.u32 [#allocation8], 4
      %s71 = int_to_ptr.vmem [resolvable:$true] %s70
      %76 = dma.hbm_to_vmem [thread:$0]  %s3, 1024, %s71, [#allocation9], 64, 64, 4
    $region17: #{tpu_custom_call.1} parent=1 // pred_fallthru
      _
    // Predicated region
    $region18: #{tpu_custom_call.1} parent=1 // pred_check
      _
    $region19: #{tpu_custom_call.1} parent=1 // pred_check_branch
      %78 = sbr.rel (0) target = $region21
    $region20: #{tpu_custom_call.1} parent=1 // pred_region
      %s80 = ssub.s32 1024, 1024
      %81 = vsyncadd [#allocation9], %s80
      %s82 = sshll.u32 [#allocation10], 4
      %s83 = int_to_ptr.vmem [resolvable:$true] %s82
      %88 = dma.hbm_to_vmem [thread:$0]  %s4, 1024, %s83, [#allocation9], 64, 64, 4
    $region21: #{tpu_custom_call.1} parent=1 // pred_fallthru
      _
    // Predicated region
    $region22: #{tpu_custom_call.1} parent=1 // pred_check
      _
    $region23: #{tpu_custom_call.1} parent=1 // pred_check_branch
      %90 = sbr.rel (0) target = $region25
    $region24: #{tpu_custom_call.1} parent=1 // pred_region
      _
    $region25: #{tpu_custom_call.1} parent=1 // pred_fallthru
      _
    // Predicated region
    $region26: #{tpu_custom_call.1} parent=1 // pred_check
      _
    $region27: #{tpu_custom_call.1} parent=1 // pred_check_branch
      %92 = sbr.rel (0) target = $region29
    $region28: #{tpu_custom_call.1} parent=1 // pred_region
      _
    $region29: #{tpu_custom_call.1} parent=1 // pred_fallthru
      _
    // Predicated region
    $region30: #{tpu_custom_call.1} parent=1 // pred_check
      _
    $region31: #{tpu_custom_call.1} parent=1 // pred_check_branch
      %94 = sbr.rel (0) target = $region33
    $region32: #{tpu_custom_call.1} parent=1 // pred_region
      _
    $region33: #{tpu_custom_call.1} parent=1 // pred_fallthru
      _
    // Predicated region
    $region34: #{tpu_custom_call.1} parent=1 // pred_check
      _
    $region35: #{tpu_custom_call.1} parent=1 // pred_check_branch
      %96 = sbr.rel (0) target = $region37
    $region36: #{tpu_custom_call.1} parent=1 // pred_region
      %s98 = ssub.s32 1024, 1024
      %99 = vsyncadd [#allocation12], %s98
      %s100 = sshll.u32 [#allocation11], 4
      %s101 = int_to_ptr.vmem [resolvable:$true] %s100
      %106 = dma.hbm_to_vmem [thread:$0]  %s8, 1024, %s101, [#allocation12], 64, 64, 4
    $region37: #{tpu_custom_call.1} parent=1 // pred_fallthru
      _
    // Predicated region
    $region38: #{tpu_custom_call.1} parent=1 // pred_check
      _
    $region39: #{tpu_custom_call.1} parent=1 // pred_check_branch
      %108 = sbr.rel (0) target = $region41
    $region40: #{tpu_custom_call.1} parent=1 // pred_region
      _
    $region41: #{tpu_custom_call.1} parent=1 // pred_fallthru
      _
    // Predicated region
    $region42: #{tpu_custom_call.1} parent=1 // pred_check
      _
    $region43: #{tpu_custom_call.1} parent=1 // pred_check_branch
      %110 = sbr.rel (0) target = $region45
    $region44: #{tpu_custom_call.1} parent=1 // pred_region
      _
    $region45: #{tpu_custom_call.1} parent=1 // pred_fallthru
      _
    // Predicated region
    $region46: #{tpu_custom_call.1} parent=1 // pred_check
      _
    $region47: #{tpu_custom_call.1} parent=1 // pred_check_branch
      %112 = sbr.rel (0) target = $region49
    $region48: #{tpu_custom_call.1} parent=1 // pred_region
      _
    $region49: #{tpu_custom_call.1} parent=1 // pred_fallthru
      _
    // Predicated region
    $region50: #{tpu_custom_call.1} parent=1 // pred_check
      _
    $region51: #{tpu_custom_call.1} parent=1 // pred_check_branch
      %114 = sbr.rel (0) target = $region53
    $region52: #{tpu_custom_call.1} parent=1 // pred_region
      %s116 = ssub.s32 4096, 4096
      %117 = vsyncadd [#allocation12], %s116
      %s118 = sshll.u32 [#allocation13], 4
      %s119 = int_to_ptr.vmem [resolvable:$true] %s118
      %124 = dma.hbm_to_vmem [thread:$0]  %s12, 4096, %s119, [#allocation12], 256, 256, 16
    $region53: #{tpu_custom_call.1} parent=1 // pred_fallthru
      _
    // Predicated region
    $region54: #{tpu_custom_call.1} parent=1 // pred_check
      _
    $region55: #{tpu_custom_call.1} parent=1 // pred_check_branch
      %126 = sbr.rel (0) target = $region57
    $region56: #{tpu_custom_call.1} parent=1 // pred_region
      _
    $region57: #{tpu_custom_call.1} parent=1 // pred_fallthru
      _
    // Predicated region
    $region58: #{tpu_custom_call.1} parent=1 // pred_check
      _
    $region59: #{tpu_custom_call.1} parent=1 // pred_check_branch
      %128 = sbr.rel (0) target = $region61
    $region60: #{tpu_custom_call.1} parent=1 // pred_region
      %s130 = ssub.s32 4096, 4096
      %131 = vsyncadd [#allocation15], %s130
      %s132 = sshll.u32 [#allocation14], 4
      %s133 = int_to_ptr.vmem [resolvable:$true] %s132
      %138 = dma.hbm_to_vmem [thread:$0]  %s14, 4096, %s133, [#allocation15], 64, 64, 4
    $region61: #{tpu_custom_call.1} parent=1 // pred_fallthru
      _
    // Predicated region
    $region62: #{tpu_custom_call.1} parent=1 // pred_check
      _
    $region63: #{tpu_custom_call.1} parent=1 // pred_check_branch
      %140 = sbr.rel (0) target = $region65
    $region64: #{tpu_custom_call.1} parent=1 // pred_region
      _
    $region65: #{tpu_custom_call.1} parent=1 // pred_fallthru
      _
    // Predicated region
    $region66: #{tpu_custom_call.1} parent=1 // pred_check
      _
    $region67: #{tpu_custom_call.1} parent=1 // pred_check_branch
      %142 = sbr.rel (0) target = $region69
    $region68: #{tpu_custom_call.1} parent=1 // pred_region
      _
    $region69: #{tpu_custom_call.1} parent=1 // pred_fallthru
      _
    // Predicated region
    $region70: #{tpu_custom_call.1} parent=1 // pred_check
      _
    $region71: #{tpu_custom_call.1} parent=1 // pred_check_branch
      %144 = sbr.rel (0) target = $region73
    $region72: #{tpu_custom_call.1} parent=1 // pred_region
      _
    $region73: #{tpu_custom_call.1} parent=1 // pred_fallthru
      _
    // Predicated region
    $region74: #{tpu_custom_call.1} parent=1 // pred_check
      _
    $region75: #{tpu_custom_call.1} parent=1 // pred_check_branch
      %146 = sbr.rel (0) target = $region77
    $region76: #{tpu_custom_call.1} parent=1 // pred_region
      %147 = dma.done [#allocation3], 256
    $region77: #{tpu_custom_call.1} parent=1 // pred_fallthru
      _
    // Predicated region
    $region78: #{tpu_custom_call.1} parent=1 // pred_check
      _
    $region79: #{tpu_custom_call.1} parent=1 // pred_check_branch
      %149 = sbr.rel (0) target = $region81
    $region80: #{tpu_custom_call.1} parent=1 // pred_region
      %150 = dma.done [#allocation6], 256
    $region81: #{tpu_custom_call.1} parent=1 // pred_fallthru
      _
    // Predicated region
    $region82: #{tpu_custom_call.1} parent=1 // pred_check
      _
    $region83: #{tpu_custom_call.1} parent=1 // pred_check_branch
      %152 = sbr.rel (0) target = $region85
    $region84: #{tpu_custom_call.1} parent=1 // pred_region
      %153 = dma.done [#allocation6], 1024
    $region85: #{tpu_custom_call.1} parent=1 // pred_fallthru
      _
    // Predicated region
    $region86: #{tpu_custom_call.1} parent=1 // pred_check
      _
    $region87: #{tpu_custom_call.1} parent=1 // pred_check_branch
      %155 = sbr.rel (0) target = $region89
    $region88: #{tpu_custom_call.1} parent=1 // pred_region
      %156 = dma.done [#allocation9], 1024
    $region89: #{tpu_custom_call.1} parent=1 // pred_fallthru
      _
    // Predicated region
    $region90: #{tpu_custom_call.1} parent=1 // pred_check
      _
    $region91: #{tpu_custom_call.1} parent=1 // pred_check_branch
      %158 = sbr.rel (0) target = $region93
    $region92: #{tpu_custom_call.1} parent=1 // pred_region
      %159 = dma.done [#allocation9], 1024
    $region93: #{tpu_custom_call.1} parent=1 // pred_fallthru
      _
    // Predicated region
    $region94: #{tpu_custom_call.1} parent=1 // pred_check
      _
    $region95: #{tpu_custom_call.1} parent=1 // pred_check_branch
      %161 = sbr.rel (0) target = $region97
    $region96: #{tpu_custom_call.1} parent=1 // pred_region
      %162 = dma.done [#allocation12], 1024
    $region97: #{tpu_custom_call.1} parent=1 // pred_fallthru
      _
    // Predicated region
    $region98: #{tpu_custom_call.1} parent=1 // pred_check
      _
    $region99: #{tpu_custom_call.1} parent=1 // pred_check_branch
      %164 = sbr.rel (0) target = $region101
    $region100: #{tpu_custom_call.1} parent=1 // pred_region
      %165 = dma.done [#allocation12], 4096
    $region101: #{tpu_custom_call.1} parent=1 // pred_fallthru
      _
    // Predicated region
    $region102: #{tpu_custom_call.1} parent=1 // pred_check
      _
    $region103: #{tpu_custom_call.1} parent=1 // pred_check_branch
      %167 = sbr.rel (0) target = $region105
    $region104: #{tpu_custom_call.1} parent=1 // pred_region
      %168 = dma.done [#allocation15], 4096
    $region105: #{tpu_custom_call.1} parent=1 // pred_fallthru
      _
    %v170 = vld [vmem:[#allocation2] sm:$0xff]
    %v171 = vld [vmem:[#allocation2 + $0x8] sm:$0xff]
    %v172 = vld [vmem:[#allocation5] sm:$0xff]
    %v173 = vld [vmem:[#allocation5 + $0x8] sm:$0xff]
    %v174 = vpack.c.bf16 %v171, %v170
    %v175 = vpack.c.bf16 %v173, %v172
    %v176 = vld [vmem:[#allocation7] sm:$0xf]
    %v177 = vld [vmem:[#allocation7 + $0x4] sm:$0xf]
    %v178 = vld [vmem:[#allocation7 + $0x8] sm:$0xf]
    %v179 = vld [vmem:[#allocation7 + $0xc] sm:$0xf]
    %v180 = vld [vmem:[#allocation7 + $0x10] sm:$0xf]
    %v181 = vld [vmem:[#allocation7 + $0x14] sm:$0xf]
    %v182 = vld [vmem:[#allocation7 + $0x18] sm:$0xf]
    %v183 = vld [vmem:[#allocation7 + $0x1c] sm:$0xf]
    %v184 = vld [vmem:[#allocation7 + $0x20] sm:$0xf]
    %v185 = vld [vmem:[#allocation7 + $0x24] sm:$0xf]
    %v186 = vld [vmem:[#allocation7 + $0x28] sm:$0xf]
    %v187 = vld [vmem:[#allocation7 + $0x2c] sm:$0xf]
    %v188 = vld [vmem:[#allocation7 + $0x30] sm:$0xf]
    %v189 = vld [vmem:[#allocation7 + $0x34] sm:$0xf]
    %v190 = vld [vmem:[#allocation7 + $0x38] sm:$0xf]
    %v191 = vld [vmem:[#allocation7 + $0x3c] sm:$0xf]
    %v192 = vld [vmem:[%s5] sm:$0x1]
    %v194 = vlaneseq
    %v195 = vshrl.u32 %v194, 7
    %v196 = vsub.s32 0, %v195
    %v197 = vrot.slane %v192, %v196
    %v215 = vunpack.c.l.b16 %v176
    %v216 = vunpack.c.l.b16 %v177
    %v217 = vunpack.c.l.b16 %v178
    %v218 = vunpack.c.l.b16 %v179
    %v219 = vunpack.c.l.b16 %v180
    %v220 = vunpack.c.l.b16 %v181
    %v221 = vunpack.c.l.b16 %v182
    %v222 = vunpack.c.l.b16 %v183
    %v223 = vunpack.c.l.b16 %v184
    %v224 = vunpack.c.l.b16 %v185
    %v225 = vunpack.c.l.b16 %v186
    %v226 = vunpack.c.l.b16 %v187
    %v227 = vunpack.c.l.b16 %v188
    %v228 = vunpack.c.l.b16 %v189
    %v229 = vunpack.c.l.b16 %v190
    %v230 = vunpack.c.l.b16 %v191
    %v231 = vpack.c.b16 %v216, %v215
    %v232 = vpack.c.b16 %v218, %v217
    %v233 = vpack.c.b16 %v220, %v219
    %v234 = vpack.c.b16 %v222, %v221
    %v235 = vpack.c.b16 %v224, %v223
    %v236 = vpack.c.b16 %v226, %v225
    %v237 = vpack.c.b16 %v228, %v227
    %v238 = vpack.c.b16 %v230, %v229
    %247 = vmatprep.subr.bf16.mxu0 0
    %248 = vmatpush1.bf16.msra.mxu0 %v238
    %249 = vmatprep.subr.bf16.mxu0 0
    %250 = vmatpush1.bf16.msra.mxu0 %v237
    %251 = vmatprep.subr.bf16.mxu0 0
    %252 = vmatpush1.bf16.msra.mxu0 %v236
    %253 = vmatprep.subr.bf16.mxu0 0
    %254 = vmatpush1.bf16.msra.mxu0 %v235
    %255 = vmatprep.subr.bf16.mxu0 0
    %256 = vmatpush1.bf16.msra.mxu0 %v234
    %257 = vmatprep.subr.bf16.mxu0 0
    %258 = vmatpush1.bf16.msra.mxu0 %v233
    %259 = vmatprep.subr.bf16.mxu0 0
    %260 = vmatpush1.bf16.msra.mxu0 %v232
    %261 = vmatprep.subr.bf16.mxu0 0
    %262 = vmatpush1.bf16.msra.mxu0 %v231
    %263 = vmatprep.subr.bf16.mxu0 0
    %264 = vmatpush2.bf16.msra.mxu0 0
    %265 = vmatprep.subr.bf16.mxu0 0
    %266 = vmatpush2.bf16.msra.mxu0 0
    %267 = vmatprep.subr.bf16.mxu0 0
    %268 = vmatpush2.bf16.msra.mxu0 0
    %269 = vmatprep.subr.bf16.mxu0 0
    %270 = vmatpush2.bf16.msra.mxu0 0
    %271 = vmatprep.subr.bf16.mxu0 0
    %272 = vmatpush2.bf16.msra.mxu0 0
    %273 = vmatprep.subr.bf16.mxu0 0
    %274 = vmatpush2.bf16.msra.mxu0 0
    %275 = vmatprep.subr.bf16.mxu0 0
    %276 = vmatpush2.bf16.msra.mxu0 0
    %277 = vmatprep.subr.bf16.mxu0 0
    %278 = vmatpush2.bf16.msra.mxu0 0
    %279 = vmatprep.mubr.bf16.mxu0 0
    %280 = vmatmul.mubr.bf16.gmra.mxu0 %v174
    %v281 = vpop.f32.mrf.mxu0
    %v282 = vadd.f32 %v197, %v281
    %v283 = vpop.f32.mrf.mxu0
    %v284 = vpop.f32.mrf.mxu0
    %v285 = vadd.f32 %v197, %v284
    %v286 = vpop.f32.mrf.mxu0
    %287 = vdwg.mxu0
    %v288 = vld [vmem:[#allocation8] sm:$0xf]
    %v289 = vld [vmem:[#allocation8 + $0x4] sm:$0xf]
    %v290 = vld [vmem:[#allocation8 + $0x8] sm:$0xf]
    %v291 = vld [vmem:[#allocation8 + $0xc] sm:$0xf]
    %v292 = vld [vmem:[#allocation8 + $0x10] sm:$0xf]
    %v293 = vld [vmem:[#allocation8 + $0x14] sm:$0xf]
    %v294 = vld [vmem:[#allocation8 + $0x18] sm:$0xf]
    %v295 = vld [vmem:[#allocation8 + $0x1c] sm:$0xf]
    %v296 = vld [vmem:[#allocation8 + $0x20] sm:$0xf]
    %v297 = vld [vmem:[#allocation8 + $0x24] sm:$0xf]
    %v298 = vld [vmem:[#allocation8 + $0x28] sm:$0xf]
    %v299 = vld [vmem:[#allocation8 + $0x2c] sm:$0xf]
    %v300 = vld [vmem:[#allocation8 + $0x30] sm:$0xf]
    %v301 = vld [vmem:[#allocation8 + $0x34] sm:$0xf]
    %v302 = vld [vmem:[#allocation8 + $0x38] sm:$0xf]
    %v303 = vld [vmem:[#allocation8 + $0x3c] sm:$0xf]
    %v304 = vld [vmem:[%s6] sm:$0x1]
    %v306 = vlaneseq
    %v307 = vshrl.u32 %v306, 7
    %v308 = vsub.s32 0, %v307
    %v309 = vrot.slane %v304, %v308
    %v327 = vunpack.c.l.b16 %v288
    %v328 = vunpack.c.l.b16 %v289
    %v329 = vunpack.c.l.b16 %v290
    %v330 = vunpack.c.l.b16 %v291
    %v331 = vunpack.c.l.b16 %v292
    %v332 = vunpack.c.l.b16 %v293
    %v333 = vunpack.c.l.b16 %v294
    %v334 = vunpack.c.l.b16 %v295
    %v335 = vunpack.c.l.b16 %v296
    %v336 = vunpack.c.l.b16 %v297
    %v337 = vunpack.c.l.b16 %v298
    %v338 = vunpack.c.l.b16 %v299
    %v339 = vunpack.c.l.b16 %v300
    %v340 = vunpack.c.l.b16 %v301
    %v341 = vunpack.c.l.b16 %v302
    %v342 = vunpack.c.l.b16 %v303
    %v343 = vpack.c.b16 %v328, %v327
    %v344 = vpack.c.b16 %v330, %v329
    %v345 = vpack.c.b16 %v332, %v331
    %v346 = vpack.c.b16 %v334, %v333
    %v347 = vpack.c.b16 %v336, %v335
    %v348 = vpack.c.b16 %v338, %v337
    %v349 = vpack.c.b16 %v340, %v339
    %v350 = vpack.c.b16 %v342, %v341
    %359 = vmatprep.subr.bf16.mxu0 0
    %360 = vmatpush1.bf16.msra.mxu0 %v350
    %361 = vmatprep.subr.bf16.mxu0 0
    %362 = vmatpush1.bf16.msra.mxu0 %v349
    %363 = vmatprep.subr.bf16.mxu0 0
    %364 = vmatpush1.bf16.msra.mxu0 %v348
    %365 = vmatprep.subr.bf16.mxu0 0
    %366 = vmatpush1.bf16.msra.mxu0 %v347
    %367 = vmatprep.subr.bf16.mxu0 0
    %368 = vmatpush1.bf16.msra.mxu0 %v346
    %369 = vmatprep.subr.bf16.mxu0 0
    %370 = vmatpush1.bf16.msra.mxu0 %v345
    %371 = vmatprep.subr.bf16.mxu0 0
    %372 = vmatpush1.bf16.msra.mxu0 %v344
    %373 = vmatprep.subr.bf16.mxu0 0
    %374 = vmatpush1.bf16.msra.mxu0 %v343
    %375 = vmatprep.subr.bf16.mxu0 0
    %376 = vmatpush2.bf16.msra.mxu0 0
    %377 = vmatprep.subr.bf16.mxu0 0
    %378 = vmatpush2.bf16.msra.mxu0 0
    %379 = vmatprep.subr.bf16.mxu0 0
    %380 = vmatpush2.bf16.msra.mxu0 0
    %381 = vmatprep.subr.bf16.mxu0 0
    %382 = vmatpush2.bf16.msra.mxu0 0
    %383 = vmatprep.subr.bf16.mxu0 0
    %384 = vmatpush2.bf16.msra.mxu0 0
    %385 = vmatprep.subr.bf16.mxu0 0
    %386 = vmatpush2.bf16.msra.mxu0 0
    %387 = vmatprep.subr.bf16.mxu0 0
    %388 = vmatpush2.bf16.msra.mxu0 0
    %389 = vmatprep.subr.bf16.mxu0 0
    %390 = vmatpush2.bf16.msra.mxu0 0
    %391 = vmatprep.mubr.bf16.mxu0 0
    %392 = vmatmul.mubr.bf16.gmra.mxu0 %v175
    %v393 = vpop.f32.mrf.mxu0
    %v394 = vadd.f32 %v309, %v393
    %v395 = vpop.f32.mrf.mxu0
    %v396 = vpop.f32.mrf.mxu0
    %v397 = vadd.f32 %v309, %v396
    %v398 = vpop.f32.mrf.mxu0
    %399 = vdwg.mxu0
    %v400 = vld [vmem:[#allocation10] sm:$0xf]
    %v401 = vld [vmem:[#allocation10 + $0x4] sm:$0xf]
    %v402 = vld [vmem:[#allocation10 + $0x8] sm:$0xf]
    %v403 = vld [vmem:[#allocation10 + $0xc] sm:$0xf]
    %v404 = vld [vmem:[#allocation10 + $0x10] sm:$0xf]
    %v405 = vld [vmem:[#allocation10 + $0x14] sm:$0xf]
    %v406 = vld [vmem:[#allocation10 + $0x18] sm:$0xf]
    %v407 = vld [vmem:[#allocation10 + $0x1c] sm:$0xf]
    %v408 = vld [vmem:[#allocation10 + $0x20] sm:$0xf]
    %v409 = vld [vmem:[#allocation10 + $0x24] sm:$0xf]
    %v410 = vld [vmem:[#allocation10 + $0x28] sm:$0xf]
    %v411 = vld [vmem:[#allocation10 + $0x2c] sm:$0xf]
    %v412 = vld [vmem:[#allocation10 + $0x30] sm:$0xf]
    %v413 = vld [vmem:[#allocation10 + $0x34] sm:$0xf]
    %v414 = vld [vmem:[#allocation10 + $0x38] sm:$0xf]
    %v415 = vld [vmem:[#allocation10 + $0x3c] sm:$0xf]
    %v416 = vld [vmem:[%s7] sm:$0x1]
    %v418 = vlaneseq
    %v419 = vshrl.u32 %v418, 7
    %v420 = vsub.s32 0, %v419
    %v421 = vrot.slane %v416, %v420
    %v439 = vunpack.c.l.b16 %v400
    %v440 = vunpack.c.l.b16 %v401
    %v441 = vunpack.c.l.b16 %v402
    %v442 = vunpack.c.l.b16 %v403
    %v443 = vunpack.c.l.b16 %v404
    %v444 = vunpack.c.l.b16 %v405
    %v445 = vunpack.c.l.b16 %v406
    %v446 = vunpack.c.l.b16 %v407
    %v447 = vunpack.c.l.b16 %v408
    %v448 = vunpack.c.l.b16 %v409
    %v449 = vunpack.c.l.b16 %v410
    %v450 = vunpack.c.l.b16 %v411
    %v451 = vunpack.c.l.b16 %v412
    %v452 = vunpack.c.l.b16 %v413
    %v453 = vunpack.c.l.b16 %v414
    %v454 = vunpack.c.l.b16 %v415
    %v455 = vpack.c.b16 %v440, %v439
    %v456 = vpack.c.b16 %v442, %v441
    %v457 = vpack.c.b16 %v444, %v443
    %v458 = vpack.c.b16 %v446, %v445
    %v459 = vpack.c.b16 %v448, %v447
    %v460 = vpack.c.b16 %v450, %v449
    %v461 = vpack.c.b16 %v452, %v451
    %v462 = vpack.c.b16 %v454, %v453
    %471 = vmatprep.subr.bf16.mxu0 0
    %472 = vmatpush1.bf16.msra.mxu0 %v462
    %473 = vmatprep.subr.bf16.mxu0 0
    %474 = vmatpush1.bf16.msra.mxu0 %v461
    %475 = vmatprep.subr.bf16.mxu0 0
    %476 = vmatpush1.bf16.msra.mxu0 %v460
    %477 = vmatprep.subr.bf16.mxu0 0
    %478 = vmatpush1.bf16.msra.mxu0 %v459
    %479 = vmatprep.subr.bf16.mxu0 0
    %480 = vmatpush1.bf16.msra.mxu0 %v458
    %481 = vmatprep.subr.bf16.mxu0 0
    %482 = vmatpush1.bf16.msra.mxu0 %v457
    %483 = vmatprep.subr.bf16.mxu0 0
    %484 = vmatpush1.bf16.msra.mxu0 %v456
    %485 = vmatprep.subr.bf16.mxu0 0
    %486 = vmatpush1.bf16.msra.mxu0 %v455
    %487 = vmatprep.subr.bf16.mxu0 0
    %488 = vmatpush2.bf16.msra.mxu0 0
    %489 = vmatprep.subr.bf16.mxu0 0
    %490 = vmatpush2.bf16.msra.mxu0 0
    %491 = vmatprep.subr.bf16.mxu0 0
    %492 = vmatpush2.bf16.msra.mxu0 0
    %493 = vmatprep.subr.bf16.mxu0 0
    %494 = vmatpush2.bf16.msra.mxu0 0
    %495 = vmatprep.subr.bf16.mxu0 0
    %496 = vmatpush2.bf16.msra.mxu0 0
    %497 = vmatprep.subr.bf16.mxu0 0
    %498 = vmatpush2.bf16.msra.mxu0 0
    %499 = vmatprep.subr.bf16.mxu0 0
    %500 = vmatpush2.bf16.msra.mxu0 0
    %501 = vmatprep.subr.bf16.mxu0 0
    %502 = vmatpush2.bf16.msra.mxu0 0
    %503 = vmatprep.mubr.bf16.mxu0 0
    %504 = vmatmul.mubr.bf16.gmra.mxu0 %v175
    %v505 = vpop.f32.mrf.mxu0
    %v506 = vadd.f32 %v421, %v505
    %v507 = vpop.f32.mrf.mxu0
    %v508 = vpop.f32.mrf.mxu0
    %v509 = vadd.f32 %v421, %v508
    %v510 = vpop.f32.mrf.mxu0
    %511 = vdwg.mxu0
    %v512 = vpack.c.bf16 %v285, %v282
    %v514 = vunpack.c.l.b16 %v512
    %v515 = vunpack.c.h.b16 %v512
    %v516 = vpack.c.b16 %v514, %v514
    %v517 = vpack.c.b16 %v515, %v515
    %v518 = vpack.c.bf16 %v397, %v394
    %v520 = vunpack.c.l.b16 %v518
    %v521 = vunpack.c.h.b16 %v518
    %v522 = vpack.c.b16 %v520, %v520
    %v523 = vpack.c.b16 %v521, %v521
    %v524 = vpack.c.bf16 %v509, %v506
    %v526 = vunpack.c.l.b16 %v524
    %v527 = vunpack.c.h.b16 %v524
    %v528 = vpack.c.b16 %v526, %v526
    %v529 = vpack.c.b16 %v527, %v527
    %vm530 = vcmask 130048
    %v532 = vsel %vm530, %v516, 0
    %v535 = vsel %vm530, %v522, 0
    %537 = vmatprep.subr.bf16.mxu0 0
    %538 = vmatpush1.bf16.xpose.msra.mxu0 0
    %539 = vmatprep.subr.bf16.mxu0 0
    %540 = vmatpush1.bf16.xpose.msra.mxu0 0
    %541 = vmatprep.subr.bf16.mxu0 0
    %542 = vmatpush1.bf16.xpose.msra.mxu0 0
    %543 = vmatprep.subr.bf16.mxu0 0
    %544 = vmatpush1.bf16.xpose.msra.mxu0 0
    %545 = vmatprep.subr.bf16.mxu0 0
    %546 = vmatpush1.bf16.xpose.msra.mxu0 0
    %547 = vmatprep.subr.bf16.mxu0 0
    %548 = vmatpush1.bf16.xpose.msra.mxu0 0
    %549 = vmatprep.subr.bf16.mxu0 0
    %550 = vmatpush1.bf16.xpose.msra.mxu0 0
    %551 = vmatprep.subr.bf16.mxu0 0
    %552 = vmatpush1.bf16.xpose.msra.mxu0 %v535
    %553 = vmatprep.subr.bf16.mxu0 0
    %554 = vmatpush2.bf16.xpose.msra.mxu0 0
    %555 = vmatprep.subr.bf16.mxu0 0
    %556 = vmatpush2.bf16.xpose.msra.mxu0 0
    %557 = vmatprep.subr.bf16.mxu0 0
    %558 = vmatpush2.bf16.xpose.msra.mxu0 0
    %559 = vmatprep.subr.bf16.mxu0 0
    %560 = vmatpush2.bf16.xpose.msra.mxu0 0
    %561 = vmatprep.subr.bf16.mxu0 0
    %562 = vmatpush2.bf16.xpose.msra.mxu0 0
    %563 = vmatprep.subr.bf16.mxu0 0
    %564 = vmatpush2.bf16.xpose.msra.mxu0 0
    %565 = vmatprep.subr.bf16.mxu0 0
    %566 = vmatpush2.bf16.xpose.msra.mxu0 0
    %567 = vmatprep.subr.bf16.mxu0 0
    %568 = vmatpush2.bf16.xpose.msra.mxu0 0
    %569 = vmatprep.mubr.bf16.mxu0 0
    %570 = vmatmul.mubr.bf16.gmra.mxu0 %v532
    %v571 = vpop.f32.mrf.mxu0
    %v572 = vadd.f32 0.0, %v571
    %v573 = vpop.f32.mrf.mxu0
    %v574 = vpop.f32.mrf.mxu0
    %v575 = vpop.f32.mrf.mxu0
    %576 = vdwg.mxu0
    %v578 = vsel %vm530, %v517, 0
    %v581 = vsel %vm530, %v523, 0
    %583 = vmatprep.subr.bf16.mxu0 0
    %584 = vmatpush1.bf16.xpose.msra.mxu0 0
    %585 = vmatprep.subr.bf16.mxu0 0
    %586 = vmatpush1.bf16.xpose.msra.mxu0 0
    %587 = vmatprep.subr.bf16.mxu0 0
    %588 = vmatpush1.bf16.xpose.msra.mxu0 0
    %589 = vmatprep.subr.bf16.mxu0 0
    %590 = vmatpush1.bf16.xpose.msra.mxu0 0
    %591 = vmatprep.subr.bf16.mxu0 0
    %592 = vmatpush1.bf16.xpose.msra.mxu0 0
    %593 = vmatprep.subr.bf16.mxu0 0
    %594 = vmatpush1.bf16.xpose.msra.mxu0 0
    %595 = vmatprep.subr.bf16.mxu0 0
    %596 = vmatpush1.bf16.xpose.msra.mxu0 0
    %597 = vmatprep.subr.bf16.mxu0 0
    %598 = vmatpush1.bf16.xpose.msra.mxu0 %v581
    %599 = vmatprep.subr.bf16.mxu0 0
    %600 = vmatpush2.bf16.xpose.msra.mxu0 0
    %601 = vmatprep.subr.bf16.mxu0 0
    %602 = vmatpush2.bf16.xpose.msra.mxu0 0
    %603 = vmatprep.subr.bf16.mxu0 0
    %604 = vmatpush2.bf16.xpose.msra.mxu0 0
    %605 = vmatprep.subr.bf16.mxu0 0
    %606 = vmatpush2.bf16.xpose.msra.mxu0 0
    %607 = vmatprep.subr.bf16.mxu0 0
    %608 = vmatpush2.bf16.xpose.msra.mxu0 0
    %609 = vmatprep.subr.bf16.mxu0 0
    %610 = vmatpush2.bf16.xpose.msra.mxu0 0
    %611 = vmatprep.subr.bf16.mxu0 0
    %612 = vmatpush2.bf16.xpose.msra.mxu0 0
    %613 = vmatprep.subr.bf16.mxu0 0
    %614 = vmatpush2.bf16.xpose.msra.mxu0 0
    %615 = vmatprep.mubr.bf16.mxu0 0
    %616 = vmatmul.mubr.bf16.gmra.mxu0 %v578
    %v617 = vpop.f32.mrf.mxu0
    %v618 = vadd.f32 0.0, %v617
    %v619 = vpop.f32.mrf.mxu0
    %v620 = vpop.f32.mrf.mxu0
    %v621 = vpop.f32.mrf.mxu0
    %622 = vdwg.mxu0
    %v623 = vmul.f32 %v572, 0.25
    %v624 = vmul.f32 %v618, 0.25
    %vm625 = vcmask 64512
    %v626 = vsel %vm625, %v623, -inf
    %627 = vmax.xlane.f32.xlu0 %v626
    %v628 = vpop.xlane.xlu0 %627
    %v629 = vsel %vm625, %v624, -inf
    %630 = vmax.xlane.f32.xlu0 %v629
    %v631 = vpop.xlane.xlu0 %630
    %v632 = vsub.f32 %v623, %v628
    %v633 = vsub.f32 %v624, %v631
    %v634 = vmul.f32 %v632, 1.442695
    %v635 = vpow.pop %v634
    %v636 = vmul.f32 %v633, 1.442695
    %v637 = vpow.pop %v636
    %v638 = vsel %vm625, %v635, 0.0
    %639 = vadd.xlane.f32.xlu0 %v638
    %v640 = vpop.xlane.xlu0 %639
    %v641 = vsel %vm625, %v637, 0.0
    %642 = vadd.xlane.f32.xlu0 %v641
    %v643 = vpop.xlane.xlu0 %642
    %v644 = vrcp.pop %v640
    %v645 = vrcp.pop %v643
    %v646 = vmul.f32 %v635, %v644
    %v647 = vmul.f32 %v637, %v645
    %v648 = vpack.c.bf16 %v646, %v646
    %v649 = vpack.c.bf16 %v647, %v647
    %v651 = vsel %vm625, %v648, 0
    %vm653 = vcmask 1043456
    %v655 = vsel %vm653, %v528, 0
    %657 = vmatprep.subr.bf16.mxu0 0
    %658 = vmatpush1.bf16.msra.mxu0 0
    %659 = vmatprep.subr.bf16.mxu0 0
    %660 = vmatpush1.bf16.msra.mxu0 0
    %661 = vmatprep.subr.bf16.mxu0 0
    %662 = vmatpush1.bf16.msra.mxu0 0
    %663 = vmatprep.subr.bf16.mxu0 0
    %664 = vmatpush1.bf16.msra.mxu0 0
    %665 = vmatprep.subr.bf16.mxu0 0
    %666 = vmatpush1.bf16.msra.mxu0 0
    %667 = vmatprep.subr.bf16.mxu0 0
    %668 = vmatpush1.bf16.msra.mxu0 0
    %669 = vmatprep.subr.bf16.mxu0 0
    %670 = vmatpush1.bf16.msra.mxu0 0
    %671 = vmatprep.subr.bf16.mxu0 0
    %672 = vmatpush1.bf16.msra.mxu0 %v655
    %673 = vmatprep.subr.bf16.mxu0 0
    %674 = vmatpush2.bf16.msra.mxu0 0
    %675 = vmatprep.subr.bf16.mxu0 0
    %676 = vmatpush2.bf16.msra.mxu0 0
    %677 = vmatprep.subr.bf16.mxu0 0
    %678 = vmatpush2.bf16.msra.mxu0 0
    %679 = vmatprep.subr.bf16.mxu0 0
    %680 = vmatpush2.bf16.msra.mxu0 0
    %681 = vmatprep.subr.bf16.mxu0 0
    %682 = vmatpush2.bf16.msra.mxu0 0
    %683 = vmatprep.subr.bf16.mxu0 0
    %684 = vmatpush2.bf16.msra.mxu0 0
    %685 = vmatprep.subr.bf16.mxu0 0
    %686 = vmatpush2.bf16.msra.mxu0 0
    %687 = vmatprep.subr.bf16.mxu0 0
    %688 = vmatpush2.bf16.msra.mxu0 0
    %689 = vmatprep.mubr.bf16.mxu0 0
    %690 = vmatmul.mubr.bf16.gmra.mxu0 %v651
    %v691 = vpop.f32.mrf.mxu0
    %v692 = vadd.f32 0.0, %v691
    %v693 = vpop.f32.mrf.mxu0
    %v694 = vpop.f32.mrf.mxu0
    %v695 = vpop.f32.mrf.mxu0
    %696 = vdwg.mxu0
    %v698 = vsel %vm625, %v649, 0
    %v701 = vsel %vm653, %v529, 0
    %703 = vmatprep.subr.bf16.mxu0 0
    %704 = vmatpush1.bf16.msra.mxu0 0
    %705 = vmatprep.subr.bf16.mxu0 0
    %706 = vmatpush1.bf16.msra.mxu0 0
    %707 = vmatprep.subr.bf16.mxu0 0
    %708 = vmatpush1.bf16.msra.mxu0 0
    %709 = vmatprep.subr.bf16.mxu0 0
    %710 = vmatpush1.bf16.msra.mxu0 0
    %711 = vmatprep.subr.bf16.mxu0 0
    %712 = vmatpush1.bf16.msra.mxu0 0
    %713 = vmatprep.subr.bf16.mxu0 0
    %714 = vmatpush1.bf16.msra.mxu0 0
    %715 = vmatprep.subr.bf16.mxu0 0
    %716 = vmatpush1.bf16.msra.mxu0 0
    %717 = vmatprep.subr.bf16.mxu0 0
    %718 = vmatpush1.bf16.msra.mxu0 %v701
    %719 = vmatprep.subr.bf16.mxu0 0
    %720 = vmatpush2.bf16.msra.mxu0 0
    %721 = vmatprep.subr.bf16.mxu0 0
    %722 = vmatpush2.bf16.msra.mxu0 0
    %723 = vmatprep.subr.bf16.mxu0 0
    %724 = vmatpush2.bf16.msra.mxu0 0
    %725 = vmatprep.subr.bf16.mxu0 0
    %726 = vmatpush2.bf16.msra.mxu0 0
    %727 = vmatprep.subr.bf16.mxu0 0
    %728 = vmatpush2.bf16.msra.mxu0 0
    %729 = vmatprep.subr.bf16.mxu0 0
    %730 = vmatpush2.bf16.msra.mxu0 0
    %731 = vmatprep.subr.bf16.mxu0 0
    %732 = vmatpush2.bf16.msra.mxu0 0
    %733 = vmatprep.subr.bf16.mxu0 0
    %734 = vmatpush2.bf16.msra.mxu0 0
    %735 = vmatprep.mubr.bf16.mxu0 0
    %736 = vmatmul.mubr.bf16.gmra.mxu0 %v698
    %v737 = vpop.f32.mrf.mxu0
    %v738 = vadd.f32 0.0, %v737
    %v739 = vpop.f32.mrf.mxu0
    %v740 = vpop.f32.mrf.mxu0
    %v741 = vpop.f32.mrf.mxu0
    %742 = vdwg.mxu0
    %743 = vrot.lane.b32.xlu0 %v516, 112
    %v744 = vpop.permute.xlu0 %743
    %745 = vrot.lane.b32.xlu0 %v522, 112
    %v746 = vpop.permute.xlu0 %745
    %v748 = vsel %vm530, %v744, 0
    %v751 = vsel %vm530, %v746, 0
    %753 = vmatprep.subr.bf16.mxu0 0
    %754 = vmatpush1.bf16.xpose.msra.mxu0 0
    %755 = vmatprep.subr.bf16.mxu0 0
    %756 = vmatpush1.bf16.xpose.msra.mxu0 0
    %757 = vmatprep.subr.bf16.mxu0 0
    %758 = vmatpush1.bf16.xpose.msra.mxu0 0
    %759 = vmatprep.subr.bf16.mxu0 0
    %760 = vmatpush1.bf16.xpose.msra.mxu0 0
    %761 = vmatprep.subr.bf16.mxu0 0
    %762 = vmatpush1.bf16.xpose.msra.mxu0 0
    %763 = vmatprep.subr.bf16.mxu0 0
    %764 = vmatpush1.bf16.xpose.msra.mxu0 0
    %765 = vmatprep.subr.bf16.mxu0 0
    %766 = vmatpush1.bf16.xpose.msra.mxu0 0
    %767 = vmatprep.subr.bf16.mxu0 0
    %768 = vmatpush1.bf16.xpose.msra.mxu0 %v751
    %769 = vmatprep.subr.bf16.mxu0 0
    %770 = vmatpush2.bf16.xpose.msra.mxu0 0
    %771 = vmatprep.subr.bf16.mxu0 0
    %772 = vmatpush2.bf16.xpose.msra.mxu0 0
    %773 = vmatprep.subr.bf16.mxu0 0
    %774 = vmatpush2.bf16.xpose.msra.mxu0 0
    %775 = vmatprep.subr.bf16.mxu0 0
    %776 = vmatpush2.bf16.xpose.msra.mxu0 0
    %777 = vmatprep.subr.bf16.mxu0 0
    %778 = vmatpush2.bf16.xpose.msra.mxu0 0
    %779 = vmatprep.subr.bf16.mxu0 0
    %780 = vmatpush2.bf16.xpose.msra.mxu0 0
    %781 = vmatprep.subr.bf16.mxu0 0
    %782 = vmatpush2.bf16.xpose.msra.mxu0 0
    %783 = vmatprep.subr.bf16.mxu0 0
    %784 = vmatpush2.bf16.xpose.msra.mxu0 0
    %785 = vmatprep.mubr.bf16.mxu0 0
    %786 = vmatmul.mubr.bf16.gmra.mxu0 %v748
    %v787 = vpop.f32.mrf.mxu0
    %v788 = vadd.f32 0.0, %v787
    %v789 = vpop.f32.mrf.mxu0
    %v790 = vpop.f32.mrf.mxu0
    %v791 = vpop.f32.mrf.mxu0
    %792 = vdwg.mxu0
    %793 = vrot.lane.b32.xlu0 %v517, 112
    %v794 = vpop.permute.xlu0 %793
    %795 = vrot.lane.b32.xlu0 %v523, 112
    %v796 = vpop.permute.xlu0 %795
    %v798 = vsel %vm530, %v794, 0
    %v801 = vsel %vm530, %v796, 0
    %803 = vmatprep.subr.bf16.mxu0 0
    %804 = vmatpush1.bf16.xpose.msra.mxu0 0
    %805 = vmatprep.subr.bf16.mxu0 0
    %806 = vmatpush1.bf16.xpose.msra.mxu0 0
    %807 = vmatprep.subr.bf16.mxu0 0
    %808 = vmatpush1.bf16.xpose.msra.mxu0 0
    %809 = vmatprep.subr.bf16.mxu0 0
    %810 = vmatpush1.bf16.xpose.msra.mxu0 0
    %811 = vmatprep.subr.bf16.mxu0 0
    %812 = vmatpush1.bf16.xpose.msra.mxu0 0
    %813 = vmatprep.subr.bf16.mxu0 0
    %814 = vmatpush1.bf16.xpose.msra.mxu0 0
    %815 = vmatprep.subr.bf16.mxu0 0
    %816 = vmatpush1.bf16.xpose.msra.mxu0 0
    %817 = vmatprep.subr.bf16.mxu0 0
    %818 = vmatpush1.bf16.xpose.msra.mxu0 %v801
    %819 = vmatprep.subr.bf16.mxu0 0
    %820 = vmatpush2.bf16.xpose.msra.mxu0 0
    %821 = vmatprep.subr.bf16.mxu0 0
    %822 = vmatpush2.bf16.xpose.msra.mxu0 0
    %823 = vmatprep.subr.bf16.mxu0 0
    %824 = vmatpush2.bf16.xpose.msra.mxu0 0
    %825 = vmatprep.subr.bf16.mxu0 0
    %826 = vmatpush2.bf16.xpose.msra.mxu0 0
    %827 = vmatprep.subr.bf16.mxu0 0
    %828 = vmatpush2.bf16.xpose.msra.mxu0 0
    %829 = vmatprep.subr.bf16.mxu0 0
    %830 = vmatpush2.bf16.xpose.msra.mxu0 0
    %831 = vmatprep.subr.bf16.mxu0 0
    %832 = vmatpush2.bf16.xpose.msra.mxu0 0
    %833 = vmatprep.subr.bf16.mxu0 0
    %834 = vmatpush2.bf16.xpose.msra.mxu0 0
    %835 = vmatprep.mubr.bf16.mxu0 0
    %836 = vmatmul.mubr.bf16.gmra.mxu0 %v798
    %v837 = vpop.f32.mrf.mxu0
    %v838 = vadd.f32 0.0, %v837
    %v839 = vpop.f32.mrf.mxu0
    %v840 = vpop.f32.mrf.mxu0
    %v841 = vpop.f32.mrf.mxu0
    %842 = vdwg.mxu0
    %v843 = vmul.f32 %v788, 0.25
    %v844 = vmul.f32 %v838, 0.25
    %v845 = vsel %vm625, %v843, -inf
    %846 = vmax.xlane.f32.xlu0 %v845
    %v847 = vpop.xlane.xlu0 %846
    %v848 = vsel %vm625, %v844, -inf
    %849 = vmax.xlane.f32.xlu0 %v848
    %v850 = vpop.xlane.xlu0 %849
    %v851 = vsub.f32 %v843, %v847
    %v852 = vsub.f32 %v844, %v850
    %v853 = vmul.f32 %v851, 1.442695
    %v854 = vpow.pop %v853
    %v855 = vmul.f32 %v852, 1.442695
    %v856 = vpow.pop %v855
    %v857 = vsel %vm625, %v854, 0.0
    %858 = vadd.xlane.f32.xlu0 %v857
    %v859 = vpop.xlane.xlu0 %858
    %v860 = vsel %vm625, %v856, 0.0
    %861 = vadd.xlane.f32.xlu0 %v860
    %v862 = vpop.xlane.xlu0 %861
    %v863 = vrcp.pop %v859
    %v864 = vrcp.pop %v862
    %v865 = vmul.f32 %v854, %v863
    %v866 = vmul.f32 %v856, %v864
    %v867 = vpack.c.bf16 %v865, %v865
    %v868 = vpack.c.bf16 %v866, %v866
    %869 = vrot.lane.b32.xlu0 %v528, 112
    %v870 = vpop.permute.xlu0 %869
    %v872 = vsel %vm625, %v867, 0
    %v875 = vsel %vm653, %v870, 0
    %877 = vmatprep.subr.bf16.mxu0 0
    %878 = vmatpush1.bf16.msra.mxu0 0
    %879 = vmatprep.subr.bf16.mxu0 0
    %880 = vmatpush1.bf16.msra.mxu0 0
    %881 = vmatprep.subr.bf16.mxu0 0
    %882 = vmatpush1.bf16.msra.mxu0 0
    %883 = vmatprep.subr.bf16.mxu0 0
    %884 = vmatpush1.bf16.msra.mxu0 0
    %885 = vmatprep.subr.bf16.mxu0 0
    %886 = vmatpush1.bf16.msra.mxu0 0
    %887 = vmatprep.subr.bf16.mxu0 0
    %888 = vmatpush1.bf16.msra.mxu0 0
    %889 = vmatprep.subr.bf16.mxu0 0
    %890 = vmatpush1.bf16.msra.mxu0 0
    %891 = vmatprep.subr.bf16.mxu0 0
    %892 = vmatpush1.bf16.msra.mxu0 %v875
    %893 = vmatprep.subr.bf16.mxu0 0
    %894 = vmatpush2.bf16.msra.mxu0 0
    %895 = vmatprep.subr.bf16.mxu0 0
    %896 = vmatpush2.bf16.msra.mxu0 0
    %897 = vmatprep.subr.bf16.mxu0 0
    %898 = vmatpush2.bf16.msra.mxu0 0
    %899 = vmatprep.subr.bf16.mxu0 0
    %900 = vmatpush2.bf16.msra.mxu0 0
    %901 = vmatprep.subr.bf16.mxu0 0
    %902 = vmatpush2.bf16.msra.mxu0 0
    %903 = vmatprep.subr.bf16.mxu0 0
    %904 = vmatpush2.bf16.msra.mxu0 0
    %905 = vmatprep.subr.bf16.mxu0 0
    %906 = vmatpush2.bf16.msra.mxu0 0
    %907 = vmatprep.subr.bf16.mxu0 0
    %908 = vmatpush2.bf16.msra.mxu0 0
    %909 = vmatprep.mubr.bf16.mxu0 0
    %910 = vmatmul.mubr.bf16.gmra.mxu0 %v872
    %v911 = vpop.f32.mrf.mxu0
    %v912 = vadd.f32 0.0, %v911
    %v913 = vpop.f32.mrf.mxu0
    %v914 = vpop.f32.mrf.mxu0
    %v915 = vpop.f32.mrf.mxu0
    %916 = vdwg.mxu0
    %917 = vrot.lane.b32.xlu0 %v529, 112
    %v918 = vpop.permute.xlu0 %917
    %v920 = vsel %vm625, %v868, 0
    %v923 = vsel %vm653, %v918, 0
    %925 = vmatprep.subr.bf16.mxu0 0
    %926 = vmatpush1.bf16.msra.mxu0 0
    %927 = vmatprep.subr.bf16.mxu0 0
    %928 = vmatpush1.bf16.msra.mxu0 0
    %929 = vmatprep.subr.bf16.mxu0 0
    %930 = vmatpush1.bf16.msra.mxu0 0
    %931 = vmatprep.subr.bf16.mxu0 0
    %932 = vmatpush1.bf16.msra.mxu0 0
    %933 = vmatprep.subr.bf16.mxu0 0
    %934 = vmatpush1.bf16.msra.mxu0 0
    %935 = vmatprep.subr.bf16.mxu0 0
    %936 = vmatpush1.bf16.msra.mxu0 0
    %937 = vmatprep.subr.bf16.mxu0 0
    %938 = vmatpush1.bf16.msra.mxu0 0
    %939 = vmatprep.subr.bf16.mxu0 0
    %940 = vmatpush1.bf16.msra.mxu0 %v923
    %941 = vmatprep.subr.bf16.mxu0 0
    %942 = vmatpush2.bf16.msra.mxu0 0
    %943 = vmatprep.subr.bf16.mxu0 0
    %944 = vmatpush2.bf16.msra.mxu0 0
    %945 = vmatprep.subr.bf16.mxu0 0
    %946 = vmatpush2.bf16.msra.mxu0 0
    %947 = vmatprep.subr.bf16.mxu0 0
    %948 = vmatpush2.bf16.msra.mxu0 0
    %949 = vmatprep.subr.bf16.mxu0 0
    %950 = vmatpush2.bf16.msra.mxu0 0
    %951 = vmatprep.subr.bf16.mxu0 0
    %952 = vmatpush2.bf16.msra.mxu0 0
    %953 = vmatprep.subr.bf16.mxu0 0
    %954 = vmatpush2.bf16.msra.mxu0 0
    %955 = vmatprep.subr.bf16.mxu0 0
    %956 = vmatpush2.bf16.msra.mxu0 0
    %957 = vmatprep.mubr.bf16.mxu0 0
    %958 = vmatmul.mubr.bf16.gmra.mxu0 %v920
    %v959 = vpop.f32.mrf.mxu0
    %v960 = vadd.f32 0.0, %v959
    %v961 = vpop.f32.mrf.mxu0
    %v962 = vpop.f32.mrf.mxu0
    %v963 = vpop.f32.mrf.mxu0
    %964 = vdwg.mxu0
    %965 = vrot.lane.b32.xlu0 %v516, 96
    %v966 = vpop.permute.xlu0 %965
    %967 = vrot.lane.b32.xlu0 %v522, 96
    %v968 = vpop.permute.xlu0 %967
    %v970 = vsel %vm530, %v966, 0
    %v973 = vsel %vm530, %v968, 0
    %975 = vmatprep.subr.bf16.mxu0 0
    %976 = vmatpush1.bf16.xpose.msra.mxu0 0
    %977 = vmatprep.subr.bf16.mxu0 0
    %978 = vmatpush1.bf16.xpose.msra.mxu0 0
    %979 = vmatprep.subr.bf16.mxu0 0
    %980 = vmatpush1.bf16.xpose.msra.mxu0 0
    %981 = vmatprep.subr.bf16.mxu0 0
    %982 = vmatpush1.bf16.xpose.msra.mxu0 0
    %983 = vmatprep.subr.bf16.mxu0 0
    %984 = vmatpush1.bf16.xpose.msra.mxu0 0
    %985 = vmatprep.subr.bf16.mxu0 0
    %986 = vmatpush1.bf16.xpose.msra.mxu0 0
    %987 = vmatprep.subr.bf16.mxu0 0
    %988 = vmatpush1.bf16.xpose.msra.mxu0 0
    %989 = vmatprep.subr.bf16.mxu0 0
    %990 = vmatpush1.bf16.xpose.msra.mxu0 %v973
    %991 = vmatprep.subr.bf16.mxu0 0
    %992 = vmatpush2.bf16.xpose.msra.mxu0 0
    %993 = vmatprep.subr.bf16.mxu0 0
    %994 = vmatpush2.bf16.xpose.msra.mxu0 0
    %995 = vmatprep.subr.bf16.mxu0 0
    %996 = vmatpush2.bf16.xpose.msra.mxu0 0
    %997 = vmatprep.subr.bf16.mxu0 0
    %998 = vmatpush2.bf16.xpose.msra.mxu0 0
    %999 = vmatprep.subr.bf16.mxu0 0
    %1000 = vmatpush2.bf16.xpose.msra.mxu0 0
    %1001 = vmatprep.subr.bf16.mxu0 0
    %1002 = vmatpush2.bf16.xpose.msra.mxu0 0
    %1003 = vmatprep.subr.bf16.mxu0 0
    %1004 = vmatpush2.bf16.xpose.msra.mxu0 0
    %1005 = vmatprep.subr.bf16.mxu0 0
    %1006 = vmatpush2.bf16.xpose.msra.mxu0 0
    %1007 = vmatprep.mubr.bf16.mxu0 0
    %1008 = vmatmul.mubr.bf16.gmra.mxu0 %v970
    %v1009 = vpop.f32.mrf.mxu0
    %v1010 = vadd.f32 0.0, %v1009
    %v1011 = vpop.f32.mrf.mxu0
    %v1012 = vpop.f32.mrf.mxu0
    %v1013 = vpop.f32.mrf.mxu0
    %1014 = vdwg.mxu0
    %1015 = vrot.lane.b32.xlu0 %v517, 96
    %v1016 = vpop.permute.xlu0 %1015
    %1017 = vrot.lane.b32.xlu0 %v523, 96
    %v1018 = vpop.permute.xlu0 %1017
    %v1020 = vsel %vm530, %v1016, 0
    %v1023 = vsel %vm530, %v1018, 0
    %1025 = vmatprep.subr.bf16.mxu0 0
    %1026 = vmatpush1.bf16.xpose.msra.mxu0 0
    %1027 = vmatprep.subr.bf16.mxu0 0
    %1028 = vmatpush1.bf16.xpose.msra.mxu0 0
    %1029 = vmatprep.subr.bf16.mxu0 0
    %1030 = vmatpush1.bf16.xpose.msra.mxu0 0
    %1031 = vmatprep.subr.bf16.mxu0 0
    %1032 = vmatpush1.bf16.xpose.msra.mxu0 0
    %1033 = vmatprep.subr.bf16.mxu0 0
    %1034 = vmatpush1.bf16.xpose.msra.mxu0 0
    %1035 = vmatprep.subr.bf16.mxu0 0
    %1036 = vmatpush1.bf16.xpose.msra.mxu0 0
    %1037 = vmatprep.subr.bf16.mxu0 0
    %1038 = vmatpush1.bf16.xpose.msra.mxu0 0
    %1039 = vmatprep.subr.bf16.mxu0 0
    %1040 = vmatpush1.bf16.xpose.msra.mxu0 %v1023
    %1041 = vmatprep.subr.bf16.mxu0 0
    %1042 = vmatpush2.bf16.xpose.msra.mxu0 0
    %1043 = vmatprep.subr.bf16.mxu0 0
    %1044 = vmatpush2.bf16.xpose.msra.mxu0 0
    %1045 = vmatprep.subr.bf16.mxu0 0
    %1046 = vmatpush2.bf16.xpose.msra.mxu0 0
    %1047 = vmatprep.subr.bf16.mxu0 0
    %1048 = vmatpush2.bf16.xpose.msra.mxu0 0
    %1049 = vmatprep.subr.bf16.mxu0 0
    %1050 = vmatpush2.bf16.xpose.msra.mxu0 0
    %1051 = vmatprep.subr.bf16.mxu0 0
    %1052 = vmatpush2.bf16.xpose.msra.mxu0 0
    %1053 = vmatprep.subr.bf16.mxu0 0
    %1054 = vmatpush2.bf16.xpose.msra.mxu0 0
    %1055 = vmatprep.subr.bf16.mxu0 0
    %1056 = vmatpush2.bf16.xpose.msra.mxu0 0
    %1057 = vmatprep.mubr.bf16.mxu0 0
    %1058 = vmatmul.mubr.bf16.gmra.mxu0 %v1020
    %v1059 = vpop.f32.mrf.mxu0
    %v1060 = vadd.f32 0.0, %v1059
    %v1061 = vpop.f32.mrf.mxu0
    %v1062 = vpop.f32.mrf.mxu0
    %v1063 = vpop.f32.mrf.mxu0
    %1064 = vdwg.mxu0
    %v1065 = vmul.f32 %v1010, 0.25
    %v1066 = vmul.f32 %v1060, 0.25
    %v1067 = vsel %vm625, %v1065, -inf
    %1068 = vmax.xlane.f32.xlu0 %v1067
    %v1069 = vpop.xlane.xlu0 %1068
    %v1070 = vsel %vm625, %v1066, -inf
    %1071 = vmax.xlane.f32.xlu0 %v1070
    %v1072 = vpop.xlane.xlu0 %1071
    %v1073 = vsub.f32 %v1065, %v1069
    %v1074 = vsub.f32 %v1066, %v1072
    %v1075 = vmul.f32 %v1073, 1.442695
    %v1076 = vpow.pop %v1075
    %v1077 = vmul.f32 %v1074, 1.442695
    %v1078 = vpow.pop %v1077
    %v1079 = vsel %vm625, %v1076, 0.0
    %1080 = vadd.xlane.f32.xlu0 %v1079
    %v1081 = vpop.xlane.xlu0 %1080
    %v1082 = vsel %vm625, %v1078, 0.0
    %1083 = vadd.xlane.f32.xlu0 %v1082
    %v1084 = vpop.xlane.xlu0 %1083
    %v1085 = vrcp.pop %v1081
    %v1086 = vrcp.pop %v1084
    %v1087 = vmul.f32 %v1076, %v1085
    %v1088 = vmul.f32 %v1078, %v1086
    %v1089 = vpack.c.bf16 %v1087, %v1087
    %v1090 = vpack.c.bf16 %v1088, %v1088
    %1091 = vrot.lane.b32.xlu0 %v528, 96
    %v1092 = vpop.permute.xlu0 %1091
    %v1094 = vsel %vm625, %v1089, 0
    %v1097 = vsel %vm653, %v1092, 0
    %1099 = vmatprep.subr.bf16.mxu0 0
    %1100 = vmatpush1.bf16.msra.mxu0 0
    %1101 = vmatprep.subr.bf16.mxu0 0
    %1102 = vmatpush1.bf16.msra.mxu0 0
    %1103 = vmatprep.subr.bf16.mxu0 0
    %1104 = vmatpush1.bf16.msra.mxu0 0
    %1105 = vmatprep.subr.bf16.mxu0 0
    %1106 = vmatpush1.bf16.msra.mxu0 0
    %1107 = vmatprep.subr.bf16.mxu0 0
    %1108 = vmatpush1.bf16.msra.mxu0 0
    %1109 = vmatprep.subr.bf16.mxu0 0
    %1110 = vmatpush1.bf16.msra.mxu0 0
    %1111 = vmatprep.subr.bf16.mxu0 0
    %1112 = vmatpush1.bf16.msra.mxu0 0
    %1113 = vmatprep.subr.bf16.mxu0 0
    %1114 = vmatpush1.bf16.msra.mxu0 %v1097
    %1115 = vmatprep.subr.bf16.mxu0 0
    %1116 = vmatpush2.bf16.msra.mxu0 0
    %1117 = vmatprep.subr.bf16.mxu0 0
    %1118 = vmatpush2.bf16.msra.mxu0 0
    %1119 = vmatprep.subr.bf16.mxu0 0
    %1120 = vmatpush2.bf16.msra.mxu0 0
    %1121 = vmatprep.subr.bf16.mxu0 0
    %1122 = vmatpush2.bf16.msra.mxu0 0
    %1123 = vmatprep.subr.bf16.mxu0 0
    %1124 = vmatpush2.bf16.msra.mxu0 0
    %1125 = vmatprep.subr.bf16.mxu0 0
    %1126 = vmatpush2.bf16.msra.mxu0 0
    %1127 = vmatprep.subr.bf16.mxu0 0
    %1128 = vmatpush2.bf16.msra.mxu0 0
    %1129 = vmatprep.subr.bf16.mxu0 0
    %1130 = vmatpush2.bf16.msra.mxu0 0
    %1131 = vmatprep.mubr.bf16.mxu0 0
    %1132 = vmatmul.mubr.bf16.gmra.mxu0 %v1094
    %v1133 = vpop.f32.mrf.mxu0
    %v1134 = vadd.f32 0.0, %v1133
    %v1135 = vpop.f32.mrf.mxu0
    %v1136 = vpop.f32.mrf.mxu0
    %v1137 = vpop.f32.mrf.mxu0
    %1138 = vdwg.mxu0
    %1139 = vrot.lane.b32.xlu0 %v529, 96
    %v1140 = vpop.permute.xlu0 %1139
    %v1142 = vsel %vm625, %v1090, 0
    %v1145 = vsel %vm653, %v1140, 0
    %1147 = vmatprep.subr.bf16.mxu0 0
    %1148 = vmatpush1.bf16.msra.mxu0 0
    %1149 = vmatprep.subr.bf16.mxu0 0
    %1150 = vmatpush1.bf16.msra.mxu0 0
    %1151 = vmatprep.subr.bf16.mxu0 0
    %1152 = vmatpush1.bf16.msra.mxu0 0
    %1153 = vmatprep.subr.bf16.mxu0 0
    %1154 = vmatpush1.bf16.msra.mxu0 0
    %1155 = vmatprep.subr.bf16.mxu0 0
    %1156 = vmatpush1.bf16.msra.mxu0 0
    %1157 = vmatprep.subr.bf16.mxu0 0
    %1158 = vmatpush1.bf16.msra.mxu0 0
    %1159 = vmatprep.subr.bf16.mxu0 0
    %1160 = vmatpush1.bf16.msra.mxu0 0
    %1161 = vmatprep.subr.bf16.mxu0 0
    %1162 = vmatpush1.bf16.msra.mxu0 %v1145
    %1163 = vmatprep.subr.bf16.mxu0 0
    %1164 = vmatpush2.bf16.msra.mxu0 0
    %1165 = vmatprep.subr.bf16.mxu0 0
    %1166 = vmatpush2.bf16.msra.mxu0 0
    %1167 = vmatprep.subr.bf16.mxu0 0
    %1168 = vmatpush2.bf16.msra.mxu0 0
    %1169 = vmatprep.subr.bf16.mxu0 0
    %1170 = vmatpush2.bf16.msra.mxu0 0
    %1171 = vmatprep.subr.bf16.mxu0 0
    %1172 = vmatpush2.bf16.msra.mxu0 0
    %1173 = vmatprep.subr.bf16.mxu0 0
    %1174 = vmatpush2.bf16.msra.mxu0 0
    %1175 = vmatprep.subr.bf16.mxu0 0
    %1176 = vmatpush2.bf16.msra.mxu0 0
    %1177 = vmatprep.subr.bf16.mxu0 0
    %1178 = vmatpush2.bf16.msra.mxu0 0
    %1179 = vmatprep.mubr.bf16.mxu0 0
    %1180 = vmatmul.mubr.bf16.gmra.mxu0 %v1142
    %v1181 = vpop.f32.mrf.mxu0
    %v1182 = vadd.f32 0.0, %v1181
    %v1183 = vpop.f32.mrf.mxu0
    %v1184 = vpop.f32.mrf.mxu0
    %v1185 = vpop.f32.mrf.mxu0
    %1186 = vdwg.mxu0
    %1187 = vrot.lane.b32.xlu0 %v516, 80
    %v1188 = vpop.permute.xlu0 %1187
    %1189 = vrot.lane.b32.xlu0 %v522, 80
    %v1190 = vpop.permute.xlu0 %1189
    %v1192 = vsel %vm530, %v1188, 0
    %v1195 = vsel %vm530, %v1190, 0
    %1197 = vmatprep.subr.bf16.mxu0 0
    %1198 = vmatpush1.bf16.xpose.msra.mxu0 0
    %1199 = vmatprep.subr.bf16.mxu0 0
    %1200 = vmatpush1.bf16.xpose.msra.mxu0 0
    %1201 = vmatprep.subr.bf16.mxu0 0
    %1202 = vmatpush1.bf16.xpose.msra.mxu0 0
    %1203 = vmatprep.subr.bf16.mxu0 0
    %1204 = vmatpush1.bf16.xpose.msra.mxu0 0
    %1205 = vmatprep.subr.bf16.mxu0 0
    %1206 = vmatpush1.bf16.xpose.msra.mxu0 0
    %1207 = vmatprep.subr.bf16.mxu0 0
    %1208 = vmatpush1.bf16.xpose.msra.mxu0 0
    %1209 = vmatprep.subr.bf16.mxu0 0
    %1210 = vmatpush1.bf16.xpose.msra.mxu0 0
    %1211 = vmatprep.subr.bf16.mxu0 0
    %1212 = vmatpush1.bf16.xpose.msra.mxu0 %v1195
    %1213 = vmatprep.subr.bf16.mxu0 0
    %1214 = vmatpush2.bf16.xpose.msra.mxu0 0
    %1215 = vmatprep.subr.bf16.mxu0 0
    %1216 = vmatpush2.bf16.xpose.msra.mxu0 0
    %1217 = vmatprep.subr.bf16.mxu0 0
    %1218 = vmatpush2.bf16.xpose.msra.mxu0 0
    %1219 = vmatprep.subr.bf16.mxu0 0
    %1220 = vmatpush2.bf16.xpose.msra.mxu0 0
    %1221 = vmatprep.subr.bf16.mxu0 0
    %1222 = vmatpush2.bf16.xpose.msra.mxu0 0
    %1223 = vmatprep.subr.bf16.mxu0 0
    %1224 = vmatpush2.bf16.xpose.msra.mxu0 0
    %1225 = vmatprep.subr.bf16.mxu0 0
    %1226 = vmatpush2.bf16.xpose.msra.mxu0 0
    %1227 = vmatprep.subr.bf16.mxu0 0
    %1228 = vmatpush2.bf16.xpose.msra.mxu0 0
    %1229 = vmatprep.mubr.bf16.mxu0 0
    %1230 = vmatmul.mubr.bf16.gmra.mxu0 %v1192
    %v1231 = vpop.f32.mrf.mxu0
    %v1232 = vadd.f32 0.0, %v1231
    %v1233 = vpop.f32.mrf.mxu0
    %v1234 = vpop.f32.mrf.mxu0
    %v1235 = vpop.f32.mrf.mxu0
    %1236 = vdwg.mxu0
    %1237 = vrot.lane.b32.xlu0 %v517, 80
    %v1238 = vpop.permute.xlu0 %1237
    %1239 = vrot.lane.b32.xlu0 %v523, 80
    %v1240 = vpop.permute.xlu0 %1239
    %v1242 = vsel %vm530, %v1238, 0
    %v1245 = vsel %vm530, %v1240, 0
    %1247 = vmatprep.subr.bf16.mxu0 0
    %1248 = vmatpush1.bf16.xpose.msra.mxu0 0
    %1249 = vmatprep.subr.bf16.mxu0 0
    %1250 = vmatpush1.bf16.xpose.msra.mxu0 0
    %1251 = vmatprep.subr.bf16.mxu0 0
    %1252 = vmatpush1.bf16.xpose.msra.mxu0 0
    %1253 = vmatprep.subr.bf16.mxu0 0
    %1254 = vmatpush1.bf16.xpose.msra.mxu0 0
    %1255 = vmatprep.subr.bf16.mxu0 0
    %1256 = vmatpush1.bf16.xpose.msra.mxu0 0
    %1257 = vmatprep.subr.bf16.mxu0 0
    %1258 = vmatpush1.bf16.xpose.msra.mxu0 0
    %1259 = vmatprep.subr.bf16.mxu0 0
    %1260 = vmatpush1.bf16.xpose.msra.mxu0 0
    %1261 = vmatprep.subr.bf16.mxu0 0
    %1262 = vmatpush1.bf16.xpose.msra.mxu0 %v1245
    %1263 = vmatprep.subr.bf16.mxu0 0
    %1264 = vmatpush2.bf16.xpose.msra.mxu0 0
    %1265 = vmatprep.subr.bf16.mxu0 0
    %1266 = vmatpush2.bf16.xpose.msra.mxu0 0
    %1267 = vmatprep.subr.bf16.mxu0 0
    %1268 = vmatpush2.bf16.xpose.msra.mxu0 0
    %1269 = vmatprep.subr.bf16.mxu0 0
    %1270 = vmatpush2.bf16.xpose.msra.mxu0 0
    %1271 = vmatprep.subr.bf16.mxu0 0
    %1272 = vmatpush2.bf16.xpose.msra.mxu0 0
    %1273 = vmatprep.subr.bf16.mxu0 0
    %1274 = vmatpush2.bf16.xpose.msra.mxu0 0
    %1275 = vmatprep.subr.bf16.mxu0 0
    %1276 = vmatpush2.bf16.xpose.msra.mxu0 0
    %1277 = vmatprep.subr.bf16.mxu0 0
    %1278 = vmatpush2.bf16.xpose.msra.mxu0 0
    %1279 = vmatprep.mubr.bf16.mxu0 0
    %1280 = vmatmul.mubr.bf16.gmra.mxu0 %v1242
    %v1281 = vpop.f32.mrf.mxu0
    %v1282 = vadd.f32 0.0, %v1281
    %v1283 = vpop.f32.mrf.mxu0
    %v1284 = vpop.f32.mrf.mxu0
    %v1285 = vpop.f32.mrf.mxu0
    %1286 = vdwg.mxu0
    %v1287 = vmul.f32 %v1232, 0.25
    %v1288 = vmul.f32 %v1282, 0.25
    %v1289 = vsel %vm625, %v1287, -inf
    %1290 = vmax.xlane.f32.xlu0 %v1289
    %v1291 = vpop.xlane.xlu0 %1290
    %v1292 = vsel %vm625, %v1288, -inf
    %1293 = vmax.xlane.f32.xlu0 %v1292
    %v1294 = vpop.xlane.xlu0 %1293
    %v1295 = vsub.f32 %v1287, %v1291
    %v1296 = vsub.f32 %v1288, %v1294
    %v1297 = vmul.f32 %v1295, 1.442695
    %v1298 = vpow.pop %v1297
    %v1299 = vmul.f32 %v1296, 1.442695
    %v1300 = vpow.pop %v1299
    %v1301 = vsel %vm625, %v1298, 0.0
    %1302 = vadd.xlane.f32.xlu0 %v1301
    %v1303 = vpop.xlane.xlu0 %1302
    %v1304 = vsel %vm625, %v1300, 0.0
    %1305 = vadd.xlane.f32.xlu0 %v1304
    %v1306 = vpop.xlane.xlu0 %1305
    %v1307 = vrcp.pop %v1303
    %v1308 = vrcp.pop %v1306
    %v1309 = vmul.f32 %v1298, %v1307
    %v1310 = vmul.f32 %v1300, %v1308
    %v1311 = vpack.c.bf16 %v1309, %v1309
    %v1312 = vpack.c.bf16 %v1310, %v1310
    %1313 = vrot.lane.b32.xlu0 %v528, 80
    %v1314 = vpop.permute.xlu0 %1313
    %v1316 = vsel %vm625, %v1311, 0
    %v1319 = vsel %vm653, %v1314, 0
    %1321 = vmatprep.subr.bf16.mxu0 0
    %1322 = vmatpush1.bf16.msra.mxu0 0
    %1323 = vmatprep.subr.bf16.mxu0 0
    %1324 = vmatpush1.bf16.msra.mxu0 0
    %1325 = vmatprep.subr.bf16.mxu0 0
    %1326 = vmatpush1.bf16.msra.mxu0 0
    %1327 = vmatprep.subr.bf16.mxu0 0
    %1328 = vmatpush1.bf16.msra.mxu0 0
    %1329 = vmatprep.subr.bf16.mxu0 0
    %1330 = vmatpush1.bf16.msra.mxu0 0
    %1331 = vmatprep.subr.bf16.mxu0 0
    %1332 = vmatpush1.bf16.msra.mxu0 0
    %1333 = vmatprep.subr.bf16.mxu0 0
    %1334 = vmatpush1.bf16.msra.mxu0 0
    %1335 = vmatprep.subr.bf16.mxu0 0
    %1336 = vmatpush1.bf16.msra.mxu0 %v1319
    %1337 = vmatprep.subr.bf16.mxu0 0
    %1338 = vmatpush2.bf16.msra.mxu0 0
    %1339 = vmatprep.subr.bf16.mxu0 0
    %1340 = vmatpush2.bf16.msra.mxu0 0
    %1341 = vmatprep.subr.bf16.mxu0 0
    %1342 = vmatpush2.bf16.msra.mxu0 0
    %1343 = vmatprep.subr.bf16.mxu0 0
    %1344 = vmatpush2.bf16.msra.mxu0 0
    %1345 = vmatprep.subr.bf16.mxu0 0
    %1346 = vmatpush2.bf16.msra.mxu0 0
    %1347 = vmatprep.subr.bf16.mxu0 0
    %1348 = vmatpush2.bf16.msra.mxu0 0
    %1349 = vmatprep.subr.bf16.mxu0 0
    %1350 = vmatpush2.bf16.msra.mxu0 0
    %1351 = vmatprep.subr.bf16.mxu0 0
    %1352 = vmatpush2.bf16.msra.mxu0 0
    %1353 = vmatprep.mubr.bf16.mxu0 0
    %1354 = vmatmul.mubr.bf16.gmra.mxu0 %v1316
    %v1355 = vpop.f32.mrf.mxu0
    %v1356 = vadd.f32 0.0, %v1355
    %v1357 = vpop.f32.mrf.mxu0
    %v1358 = vpop.f32.mrf.mxu0
    %v1359 = vpop.f32.mrf.mxu0
    %1360 = vdwg.mxu0
    %1361 = vrot.lane.b32.xlu0 %v529, 80
    %v1362 = vpop.permute.xlu0 %1361
    %v1364 = vsel %vm625, %v1312, 0
    %v1367 = vsel %vm653, %v1362, 0
    %1369 = vmatprep.subr.bf16.mxu0 0
    %1370 = vmatpush1.bf16.msra.mxu0 0
    %1371 = vmatprep.subr.bf16.mxu0 0
    %1372 = vmatpush1.bf16.msra.mxu0 0
    %1373 = vmatprep.subr.bf16.mxu0 0
    %1374 = vmatpush1.bf16.msra.mxu0 0
    %1375 = vmatprep.subr.bf16.mxu0 0
    %1376 = vmatpush1.bf16.msra.mxu0 0
    %1377 = vmatprep.subr.bf16.mxu0 0
    %1378 = vmatpush1.bf16.msra.mxu0 0
    %1379 = vmatprep.subr.bf16.mxu0 0
    %1380 = vmatpush1.bf16.msra.mxu0 0
    %1381 = vmatprep.subr.bf16.mxu0 0
    %1382 = vmatpush1.bf16.msra.mxu0 0
    %1383 = vmatprep.subr.bf16.mxu0 0
    %1384 = vmatpush1.bf16.msra.mxu0 %v1367
    %1385 = vmatprep.subr.bf16.mxu0 0
    %1386 = vmatpush2.bf16.msra.mxu0 0
    %1387 = vmatprep.subr.bf16.mxu0 0
    %1388 = vmatpush2.bf16.msra.mxu0 0
    %1389 = vmatprep.subr.bf16.mxu0 0
    %1390 = vmatpush2.bf16.msra.mxu0 0
    %1391 = vmatprep.subr.bf16.mxu0 0
    %1392 = vmatpush2.bf16.msra.mxu0 0
    %1393 = vmatprep.subr.bf16.mxu0 0
    %1394 = vmatpush2.bf16.msra.mxu0 0
    %1395 = vmatprep.subr.bf16.mxu0 0
    %1396 = vmatpush2.bf16.msra.mxu0 0
    %1397 = vmatprep.subr.bf16.mxu0 0
    %1398 = vmatpush2.bf16.msra.mxu0 0
    %1399 = vmatprep.subr.bf16.mxu0 0
    %1400 = vmatpush2.bf16.msra.mxu0 0
    %1401 = vmatprep.mubr.bf16.mxu0 0
    %1402 = vmatmul.mubr.bf16.gmra.mxu0 %v1364
    %v1403 = vpop.f32.mrf.mxu0
    %v1404 = vadd.f32 0.0, %v1403
    %v1405 = vpop.f32.mrf.mxu0
    %v1406 = vpop.f32.mrf.mxu0
    %v1407 = vpop.f32.mrf.mxu0
    %1408 = vdwg.mxu0
    %1409 = vrot.lane.b32.xlu0 %v516, 64
    %v1410 = vpop.permute.xlu0 %1409
    %1411 = vrot.lane.b32.xlu0 %v522, 64
    %v1412 = vpop.permute.xlu0 %1411
    %v1414 = vsel %vm530, %v1410, 0
    %v1417 = vsel %vm530, %v1412, 0
    %1419 = vmatprep.subr.bf16.mxu0 0
    %1420 = vmatpush1.bf16.xpose.msra.mxu0 0
    %1421 = vmatprep.subr.bf16.mxu0 0
    %1422 = vmatpush1.bf16.xpose.msra.mxu0 0
    %1423 = vmatprep.subr.bf16.mxu0 0
    %1424 = vmatpush1.bf16.xpose.msra.mxu0 0
    %1425 = vmatprep.subr.bf16.mxu0 0
    %1426 = vmatpush1.bf16.xpose.msra.mxu0 0
    %1427 = vmatprep.subr.bf16.mxu0 0
    %1428 = vmatpush1.bf16.xpose.msra.mxu0 0
    %1429 = vmatprep.subr.bf16.mxu0 0
    %1430 = vmatpush1.bf16.xpose.msra.mxu0 0
    %1431 = vmatprep.subr.bf16.mxu0 0
    %1432 = vmatpush1.bf16.xpose.msra.mxu0 0
    %1433 = vmatprep.subr.bf16.mxu0 0
    %1434 = vmatpush1.bf16.xpose.msra.mxu0 %v1417
    %1435 = vmatprep.subr.bf16.mxu0 0
    %1436 = vmatpush2.bf16.xpose.msra.mxu0 0
    %1437 = vmatprep.subr.bf16.mxu0 0
    %1438 = vmatpush2.bf16.xpose.msra.mxu0 0
    %1439 = vmatprep.subr.bf16.mxu0 0
    %1440 = vmatpush2.bf16.xpose.msra.mxu0 0
    %1441 = vmatprep.subr.bf16.mxu0 0
    %1442 = vmatpush2.bf16.xpose.msra.mxu0 0
    %1443 = vmatprep.subr.bf16.mxu0 0
    %1444 = vmatpush2.bf16.xpose.msra.mxu0 0
    %1445 = vmatprep.subr.bf16.mxu0 0
    %1446 = vmatpush2.bf16.xpose.msra.mxu0 0
    %1447 = vmatprep.subr.bf16.mxu0 0
    %1448 = vmatpush2.bf16.xpose.msra.mxu0 0
    %1449 = vmatprep.subr.bf16.mxu0 0
    %1450 = vmatpush2.bf16.xpose.msra.mxu0 0
    %1451 = vmatprep.mubr.bf16.mxu0 0
    %1452 = vmatmul.mubr.bf16.gmra.mxu0 %v1414
    %v1453 = vpop.f32.mrf.mxu0
    %v1454 = vadd.f32 0.0, %v1453
    %v1455 = vpop.f32.mrf.mxu0
    %v1456 = vpop.f32.mrf.mxu0
    %v1457 = vpop.f32.mrf.mxu0
    %1458 = vdwg.mxu0
    %1459 = vrot.lane.b32.xlu0 %v517, 64
    %v1460 = vpop.permute.xlu0 %1459
    %1461 = vrot.lane.b32.xlu0 %v523, 64
    %v1462 = vpop.permute.xlu0 %1461
    %v1464 = vsel %vm530, %v1460, 0
    %v1467 = vsel %vm530, %v1462, 0
    %1469 = vmatprep.subr.bf16.mxu0 0
    %1470 = vmatpush1.bf16.xpose.msra.mxu0 0
    %1471 = vmatprep.subr.bf16.mxu0 0
    %1472 = vmatpush1.bf16.xpose.msra.mxu0 0
    %1473 = vmatprep.subr.bf16.mxu0 0
    %1474 = vmatpush1.bf16.xpose.msra.mxu0 0
    %1475 = vmatprep.subr.bf16.mxu0 0
    %1476 = vmatpush1.bf16.xpose.msra.mxu0 0
    %1477 = vmatprep.subr.bf16.mxu0 0
    %1478 = vmatpush1.bf16.xpose.msra.mxu0 0
    %1479 = vmatprep.subr.bf16.mxu0 0
    %1480 = vmatpush1.bf16.xpose.msra.mxu0 0
    %1481 = vmatprep.subr.bf16.mxu0 0
    %1482 = vmatpush1.bf16.xpose.msra.mxu0 0
    %1483 = vmatprep.subr.bf16.mxu0 0
    %1484 = vmatpush1.bf16.xpose.msra.mxu0 %v1467
    %1485 = vmatprep.subr.bf16.mxu0 0
    %1486 = vmatpush2.bf16.xpose.msra.mxu0 0
    %1487 = vmatprep.subr.bf16.mxu0 0
    %1488 = vmatpush2.bf16.xpose.msra.mxu0 0
    %1489 = vmatprep.subr.bf16.mxu0 0
    %1490 = vmatpush2.bf16.xpose.msra.mxu0 0
    %1491 = vmatprep.subr.bf16.mxu0 0
    %1492 = vmatpush2.bf16.xpose.msra.mxu0 0
    %1493 = vmatprep.subr.bf16.mxu0 0
    %1494 = vmatpush2.bf16.xpose.msra.mxu0 0
    %1495 = vmatprep.subr.bf16.mxu0 0
    %1496 = vmatpush2.bf16.xpose.msra.mxu0 0
    %1497 = vmatprep.subr.bf16.mxu0 0
    %1498 = vmatpush2.bf16.xpose.msra.mxu0 0
    %1499 = vmatprep.subr.bf16.mxu0 0
    %1500 = vmatpush2.bf16.xpose.msra.mxu0 0
    %1501 = vmatprep.mubr.bf16.mxu0 0
    %1502 = vmatmul.mubr.bf16.gmra.mxu0 %v1464
    %v1503 = vpop.f32.mrf.mxu0
    %v1504 = vadd.f32 0.0, %v1503
    %v1505 = vpop.f32.mrf.mxu0
    %v1506 = vpop.f32.mrf.mxu0
    %v1507 = vpop.f32.mrf.mxu0
    %1508 = vdwg.mxu0
    %v1509 = vmul.f32 %v1454, 0.25
    %v1510 = vmul.f32 %v1504, 0.25
    %v1511 = vsel %vm625, %v1509, -inf
    %1512 = vmax.xlane.f32.xlu0 %v1511
    %v1513 = vpop.xlane.xlu0 %1512
    %v1514 = vsel %vm625, %v1510, -inf
    %1515 = vmax.xlane.f32.xlu0 %v1514
    %v1516 = vpop.xlane.xlu0 %1515
    %v1517 = vsub.f32 %v1509, %v1513
    %v1518 = vsub.f32 %v1510, %v1516
    %v1519 = vmul.f32 %v1517, 1.442695
    %v1520 = vpow.pop %v1519
    %v1521 = vmul.f32 %v1518, 1.442695
    %v1522 = vpow.pop %v1521
    %v1523 = vsel %vm625, %v1520, 0.0
    %1524 = vadd.xlane.f32.xlu0 %v1523
    %v1525 = vpop.xlane.xlu0 %1524
    %v1526 = vsel %vm625, %v1522, 0.0
    %1527 = vadd.xlane.f32.xlu0 %v1526
    %v1528 = vpop.xlane.xlu0 %1527
    %v1529 = vrcp.pop %v1525
    %v1530 = vrcp.pop %v1528
    %v1531 = vmul.f32 %v1520, %v1529
    %v1532 = vmul.f32 %v1522, %v1530
    %v1533 = vpack.c.bf16 %v1531, %v1531
    %v1534 = vpack.c.bf16 %v1532, %v1532
    %1535 = vrot.lane.b32.xlu0 %v528, 64
    %v1536 = vpop.permute.xlu0 %1535
    %v1538 = vsel %vm625, %v1533, 0
    %v1541 = vsel %vm653, %v1536, 0
    %1543 = vmatprep.subr.bf16.mxu0 0
    %1544 = vmatpush1.bf16.msra.mxu0 0
    %1545 = vmatprep.subr.bf16.mxu0 0
    %1546 = vmatpush1.bf16.msra.mxu0 0
    %1547 = vmatprep.subr.bf16.mxu0 0
    %1548 = vmatpush1.bf16.msra.mxu0 0
    %1549 = vmatprep.subr.bf16.mxu0 0
    %1550 = vmatpush1.bf16.msra.mxu0 0
    %1551 = vmatprep.subr.bf16.mxu0 0
    %1552 = vmatpush1.bf16.msra.mxu0 0
    %1553 = vmatprep.subr.bf16.mxu0 0
    %1554 = vmatpush1.bf16.msra.mxu0 0
    %1555 = vmatprep.subr.bf16.mxu0 0
    %1556 = vmatpush1.bf16.msra.mxu0 0
    %1557 = vmatprep.subr.bf16.mxu0 0
    %1558 = vmatpush1.bf16.msra.mxu0 %v1541
    %1559 = vmatprep.subr.bf16.mxu0 0
    %1560 = vmatpush2.bf16.msra.mxu0 0
    %1561 = vmatprep.subr.bf16.mxu0 0
    %1562 = vmatpush2.bf16.msra.mxu0 0
    %1563 = vmatprep.subr.bf16.mxu0 0
    %1564 = vmatpush2.bf16.msra.mxu0 0
    %1565 = vmatprep.subr.bf16.mxu0 0
    %1566 = vmatpush2.bf16.msra.mxu0 0
    %1567 = vmatprep.subr.bf16.mxu0 0
    %1568 = vmatpush2.bf16.msra.mxu0 0
    %1569 = vmatprep.subr.bf16.mxu0 0
    %1570 = vmatpush2.bf16.msra.mxu0 0
    %1571 = vmatprep.subr.bf16.mxu0 0
    %1572 = vmatpush2.bf16.msra.mxu0 0
    %1573 = vmatprep.subr.bf16.mxu0 0
    %1574 = vmatpush2.bf16.msra.mxu0 0
    %1575 = vmatprep.mubr.bf16.mxu0 0
    %1576 = vmatmul.mubr.bf16.gmra.mxu0 %v1538
    %v1577 = vpop.f32.mrf.mxu0
    %v1578 = vadd.f32 0.0, %v1577
    %v1579 = vpop.f32.mrf.mxu0
    %v1580 = vpop.f32.mrf.mxu0
    %v1581 = vpop.f32.mrf.mxu0
    %1582 = vdwg.mxu0
    %1583 = vrot.lane.b32.xlu0 %v529, 64
    %v1584 = vpop.permute.xlu0 %1583
    %v1586 = vsel %vm625, %v1534, 0
    %v1589 = vsel %vm653, %v1584, 0
    %1591 = vmatprep.subr.bf16.mxu0 0
    %1592 = vmatpush1.bf16.msra.mxu0 0
    %1593 = vmatprep.subr.bf16.mxu0 0
    %1594 = vmatpush1.bf16.msra.mxu0 0
    %1595 = vmatprep.subr.bf16.mxu0 0
    %1596 = vmatpush1.bf16.msra.mxu0 0
    %1597 = vmatprep.subr.bf16.mxu0 0
    %1598 = vmatpush1.bf16.msra.mxu0 0
    %1599 = vmatprep.subr.bf16.mxu0 0
    %1600 = vmatpush1.bf16.msra.mxu0 0
    %1601 = vmatprep.subr.bf16.mxu0 0
    %1602 = vmatpush1.bf16.msra.mxu0 0
    %1603 = vmatprep.subr.bf16.mxu0 0
    %1604 = vmatpush1.bf16.msra.mxu0 0
    %1605 = vmatprep.subr.bf16.mxu0 0
    %1606 = vmatpush1.bf16.msra.mxu0 %v1589
    %1607 = vmatprep.subr.bf16.mxu0 0
    %1608 = vmatpush2.bf16.msra.mxu0 0
    %1609 = vmatprep.subr.bf16.mxu0 0
    %1610 = vmatpush2.bf16.msra.mxu0 0
    %1611 = vmatprep.subr.bf16.mxu0 0
    %1612 = vmatpush2.bf16.msra.mxu0 0
    %1613 = vmatprep.subr.bf16.mxu0 0
    %1614 = vmatpush2.bf16.msra.mxu0 0
    %1615 = vmatprep.subr.bf16.mxu0 0
    %1616 = vmatpush2.bf16.msra.mxu0 0
    %1617 = vmatprep.subr.bf16.mxu0 0
    %1618 = vmatpush2.bf16.msra.mxu0 0
    %1619 = vmatprep.subr.bf16.mxu0 0
    %1620 = vmatpush2.bf16.msra.mxu0 0
    %1621 = vmatprep.subr.bf16.mxu0 0
    %1622 = vmatpush2.bf16.msra.mxu0 0
    %1623 = vmatprep.mubr.bf16.mxu0 0
    %1624 = vmatmul.mubr.bf16.gmra.mxu0 %v1586
    %v1625 = vpop.f32.mrf.mxu0
    %v1626 = vadd.f32 0.0, %v1625
    %v1627 = vpop.f32.mrf.mxu0
    %v1628 = vpop.f32.mrf.mxu0
    %v1629 = vpop.f32.mrf.mxu0
    %1630 = vdwg.mxu0
    %1631 = vrot.lane.b32.xlu0 %v516, 48
    %v1632 = vpop.permute.xlu0 %1631
    %1633 = vrot.lane.b32.xlu0 %v522, 48
    %v1634 = vpop.permute.xlu0 %1633
    %v1636 = vsel %vm530, %v1632, 0
    %v1639 = vsel %vm530, %v1634, 0
    %1641 = vmatprep.subr.bf16.mxu0 0
    %1642 = vmatpush1.bf16.xpose.msra.mxu0 0
    %1643 = vmatprep.subr.bf16.mxu0 0
    %1644 = vmatpush1.bf16.xpose.msra.mxu0 0
    %1645 = vmatprep.subr.bf16.mxu0 0
    %1646 = vmatpush1.bf16.xpose.msra.mxu0 0
    %1647 = vmatprep.subr.bf16.mxu0 0
    %1648 = vmatpush1.bf16.xpose.msra.mxu0 0
    %1649 = vmatprep.subr.bf16.mxu0 0
    %1650 = vmatpush1.bf16.xpose.msra.mxu0 0
    %1651 = vmatprep.subr.bf16.mxu0 0
    %1652 = vmatpush1.bf16.xpose.msra.mxu0 0
    %1653 = vmatprep.subr.bf16.mxu0 0
    %1654 = vmatpush1.bf16.xpose.msra.mxu0 0
    %1655 = vmatprep.subr.bf16.mxu0 0
    %1656 = vmatpush1.bf16.xpose.msra.mxu0 %v1639
    %1657 = vmatprep.subr.bf16.mxu0 0
    %1658 = vmatpush2.bf16.xpose.msra.mxu0 0
    %1659 = vmatprep.subr.bf16.mxu0 0
    %1660 = vmatpush2.bf16.xpose.msra.mxu0 0
    %1661 = vmatprep.subr.bf16.mxu0 0
    %1662 = vmatpush2.bf16.xpose.msra.mxu0 0
    %1663 = vmatprep.subr.bf16.mxu0 0
    %1664 = vmatpush2.bf16.xpose.msra.mxu0 0
    %1665 = vmatprep.subr.bf16.mxu0 0
    %1666 = vmatpush2.bf16.xpose.msra.mxu0 0
    %1667 = vmatprep.subr.bf16.mxu0 0
    %1668 = vmatpush2.bf16.xpose.msra.mxu0 0
    %1669 = vmatprep.subr.bf16.mxu0 0
    %1670 = vmatpush2.bf16.xpose.msra.mxu0 0
    %1671 = vmatprep.subr.bf16.mxu0 0
    %1672 = vmatpush2.bf16.xpose.msra.mxu0 0
    %1673 = vmatprep.mubr.bf16.mxu0 0
    %1674 = vmatmul.mubr.bf16.gmra.mxu0 %v1636
    %v1675 = vpop.f32.mrf.mxu0
    %v1676 = vadd.f32 0.0, %v1675
    %v1677 = vpop.f32.mrf.mxu0
    %v1678 = vpop.f32.mrf.mxu0
    %v1679 = vpop.f32.mrf.mxu0
    %1680 = vdwg.mxu0
    %1681 = vrot.lane.b32.xlu0 %v517, 48
    %v1682 = vpop.permute.xlu0 %1681
    %1683 = vrot.lane.b32.xlu0 %v523, 48
    %v1684 = vpop.permute.xlu0 %1683
    %v1686 = vsel %vm530, %v1682, 0
    %v1689 = vsel %vm530, %v1684, 0
    %1691 = vmatprep.subr.bf16.mxu0 0
    %1692 = vmatpush1.bf16.xpose.msra.mxu0 0
    %1693 = vmatprep.subr.bf16.mxu0 0
    %1694 = vmatpush1.bf16.xpose.msra.mxu0 0
    %1695 = vmatprep.subr.bf16.mxu0 0
    %1696 = vmatpush1.bf16.xpose.msra.mxu0 0
    %1697 = vmatprep.subr.bf16.mxu0 0
    %1698 = vmatpush1.bf16.xpose.msra.mxu0 0
    %1699 = vmatprep.subr.bf16.mxu0 0
    %1700 = vmatpush1.bf16.xpose.msra.mxu0 0
    %1701 = vmatprep.subr.bf16.mxu0 0
    %1702 = vmatpush1.bf16.xpose.msra.mxu0 0
    %1703 = vmatprep.subr.bf16.mxu0 0
    %1704 = vmatpush1.bf16.xpose.msra.mxu0 0
    %1705 = vmatprep.subr.bf16.mxu0 0
    %1706 = vmatpush1.bf16.xpose.msra.mxu0 %v1689
    %1707 = vmatprep.subr.bf16.mxu0 0
    %1708 = vmatpush2.bf16.xpose.msra.mxu0 0
    %1709 = vmatprep.subr.bf16.mxu0 0
    %1710 = vmatpush2.bf16.xpose.msra.mxu0 0
    %1711 = vmatprep.subr.bf16.mxu0 0
    %1712 = vmatpush2.bf16.xpose.msra.mxu0 0
    %1713 = vmatprep.subr.bf16.mxu0 0
    %1714 = vmatpush2.bf16.xpose.msra.mxu0 0
    %1715 = vmatprep.subr.bf16.mxu0 0
    %1716 = vmatpush2.bf16.xpose.msra.mxu0 0
    %1717 = vmatprep.subr.bf16.mxu0 0
    %1718 = vmatpush2.bf16.xpose.msra.mxu0 0
    %1719 = vmatprep.subr.bf16.mxu0 0
    %1720 = vmatpush2.bf16.xpose.msra.mxu0 0
    %1721 = vmatprep.subr.bf16.mxu0 0
    %1722 = vmatpush2.bf16.xpose.msra.mxu0 0
    %1723 = vmatprep.mubr.bf16.mxu0 0
    %1724 = vmatmul.mubr.bf16.gmra.mxu0 %v1686
    %v1725 = vpop.f32.mrf.mxu0
    %v1726 = vadd.f32 0.0, %v1725
    %v1727 = vpop.f32.mrf.mxu0
    %v1728 = vpop.f32.mrf.mxu0
    %v1729 = vpop.f32.mrf.mxu0
    %1730 = vdwg.mxu0
    %v1731 = vmul.f32 %v1676, 0.25
    %v1732 = vmul.f32 %v1726, 0.25
    %v1733 = vsel %vm625, %v1731, -inf
    %1734 = vmax.xlane.f32.xlu0 %v1733
    %v1735 = vpop.xlane.xlu0 %1734
    %v1736 = vsel %vm625, %v1732, -inf
    %1737 = vmax.xlane.f32.xlu0 %v1736
    %v1738 = vpop.xlane.xlu0 %1737
    %v1739 = vsub.f32 %v1731, %v1735
    %v1740 = vsub.f32 %v1732, %v1738
    %v1741 = vmul.f32 %v1739, 1.442695
    %v1742 = vpow.pop %v1741
    %v1743 = vmul.f32 %v1740, 1.442695
    %v1744 = vpow.pop %v1743
    %v1745 = vsel %vm625, %v1742, 0.0
    %1746 = vadd.xlane.f32.xlu0 %v1745
    %v1747 = vpop.xlane.xlu0 %1746
    %v1748 = vsel %vm625, %v1744, 0.0
    %1749 = vadd.xlane.f32.xlu0 %v1748
    %v1750 = vpop.xlane.xlu0 %1749
    %v1751 = vrcp.pop %v1747
    %v1752 = vrcp.pop %v1750
    %v1753 = vmul.f32 %v1742, %v1751
    %v1754 = vmul.f32 %v1744, %v1752
    %v1755 = vpack.c.bf16 %v1753, %v1753
    %v1756 = vpack.c.bf16 %v1754, %v1754
    %1757 = vrot.lane.b32.xlu0 %v528, 48
    %v1758 = vpop.permute.xlu0 %1757
    %v1760 = vsel %vm625, %v1755, 0
    %v1763 = vsel %vm653, %v1758, 0
    %1765 = vmatprep.subr.bf16.mxu0 0
    %1766 = vmatpush1.bf16.msra.mxu0 0
    %1767 = vmatprep.subr.bf16.mxu0 0
    %1768 = vmatpush1.bf16.msra.mxu0 0
    %1769 = vmatprep.subr.bf16.mxu0 0
    %1770 = vmatpush1.bf16.msra.mxu0 0
    %1771 = vmatprep.subr.bf16.mxu0 0
    %1772 = vmatpush1.bf16.msra.mxu0 0
    %1773 = vmatprep.subr.bf16.mxu0 0
    %1774 = vmatpush1.bf16.msra.mxu0 0
    %1775 = vmatprep.subr.bf16.mxu0 0
    %1776 = vmatpush1.bf16.msra.mxu0 0
    %1777 = vmatprep.subr.bf16.mxu0 0
    %1778 = vmatpush1.bf16.msra.mxu0 0
    %1779 = vmatprep.subr.bf16.mxu0 0
    %1780 = vmatpush1.bf16.msra.mxu0 %v1763
    %1781 = vmatprep.subr.bf16.mxu0 0
    %1782 = vmatpush2.bf16.msra.mxu0 0
    %1783 = vmatprep.subr.bf16.mxu0 0
    %1784 = vmatpush2.bf16.msra.mxu0 0
    %1785 = vmatprep.subr.bf16.mxu0 0
    %1786 = vmatpush2.bf16.msra.mxu0 0
    %1787 = vmatprep.subr.bf16.mxu0 0
    %1788 = vmatpush2.bf16.msra.mxu0 0
    %1789 = vmatprep.subr.bf16.mxu0 0
    %1790 = vmatpush2.bf16.msra.mxu0 0
    %1791 = vmatprep.subr.bf16.mxu0 0
    %1792 = vmatpush2.bf16.msra.mxu0 0
    %1793 = vmatprep.subr.bf16.mxu0 0
    %1794 = vmatpush2.bf16.msra.mxu0 0
    %1795 = vmatprep.subr.bf16.mxu0 0
    %1796 = vmatpush2.bf16.msra.mxu0 0
    %1797 = vmatprep.mubr.bf16.mxu0 0
    %1798 = vmatmul.mubr.bf16.gmra.mxu0 %v1760
    %v1799 = vpop.f32.mrf.mxu0
    %v1800 = vadd.f32 0.0, %v1799
    %v1801 = vpop.f32.mrf.mxu0
    %v1802 = vpop.f32.mrf.mxu0
    %v1803 = vpop.f32.mrf.mxu0
    %1804 = vdwg.mxu0
    %1805 = vrot.lane.b32.xlu0 %v529, 48
    %v1806 = vpop.permute.xlu0 %1805
    %v1808 = vsel %vm625, %v1756, 0
    %v1811 = vsel %vm653, %v1806, 0
    %1813 = vmatprep.subr.bf16.mxu0 0
    %1814 = vmatpush1.bf16.msra.mxu0 0
    %1815 = vmatprep.subr.bf16.mxu0 0
    %1816 = vmatpush1.bf16.msra.mxu0 0
    %1817 = vmatprep.subr.bf16.mxu0 0
    %1818 = vmatpush1.bf16.msra.mxu0 0
    %1819 = vmatprep.subr.bf16.mxu0 0
    %1820 = vmatpush1.bf16.msra.mxu0 0
    %1821 = vmatprep.subr.bf16.mxu0 0
    %1822 = vmatpush1.bf16.msra.mxu0 0
    %1823 = vmatprep.subr.bf16.mxu0 0
    %1824 = vmatpush1.bf16.msra.mxu0 0
    %1825 = vmatprep.subr.bf16.mxu0 0
    %1826 = vmatpush1.bf16.msra.mxu0 0
    %1827 = vmatprep.subr.bf16.mxu0 0
    %1828 = vmatpush1.bf16.msra.mxu0 %v1811
    %1829 = vmatprep.subr.bf16.mxu0 0
    %1830 = vmatpush2.bf16.msra.mxu0 0
    %1831 = vmatprep.subr.bf16.mxu0 0
    %1832 = vmatpush2.bf16.msra.mxu0 0
    %1833 = vmatprep.subr.bf16.mxu0 0
    %1834 = vmatpush2.bf16.msra.mxu0 0
    %1835 = vmatprep.subr.bf16.mxu0 0
    %1836 = vmatpush2.bf16.msra.mxu0 0
    %1837 = vmatprep.subr.bf16.mxu0 0
    %1838 = vmatpush2.bf16.msra.mxu0 0
    %1839 = vmatprep.subr.bf16.mxu0 0
    %1840 = vmatpush2.bf16.msra.mxu0 0
    %1841 = vmatprep.subr.bf16.mxu0 0
    %1842 = vmatpush2.bf16.msra.mxu0 0
    %1843 = vmatprep.subr.bf16.mxu0 0
    %1844 = vmatpush2.bf16.msra.mxu0 0
    %1845 = vmatprep.mubr.bf16.mxu0 0
    %1846 = vmatmul.mubr.bf16.gmra.mxu0 %v1808
    %v1847 = vpop.f32.mrf.mxu0
    %v1848 = vadd.f32 0.0, %v1847
    %v1849 = vpop.f32.mrf.mxu0
    %v1850 = vpop.f32.mrf.mxu0
    %v1851 = vpop.f32.mrf.mxu0
    %1852 = vdwg.mxu0
    %1853 = vrot.lane.b32.xlu0 %v516, 32
    %v1854 = vpop.permute.xlu0 %1853
    %1855 = vrot.lane.b32.xlu0 %v522, 32
    %v1856 = vpop.permute.xlu0 %1855
    %v1858 = vsel %vm530, %v1854, 0
    %v1861 = vsel %vm530, %v1856, 0
    %1863 = vmatprep.subr.bf16.mxu0 0
    %1864 = vmatpush1.bf16.xpose.msra.mxu0 0
    %1865 = vmatprep.subr.bf16.mxu0 0
    %1866 = vmatpush1.bf16.xpose.msra.mxu0 0
    %1867 = vmatprep.subr.bf16.mxu0 0
    %1868 = vmatpush1.bf16.xpose.msra.mxu0 0
    %1869 = vmatprep.subr.bf16.mxu0 0
    %1870 = vmatpush1.bf16.xpose.msra.mxu0 0
    %1871 = vmatprep.subr.bf16.mxu0 0
    %1872 = vmatpush1.bf16.xpose.msra.mxu0 0
    %1873 = vmatprep.subr.bf16.mxu0 0
    %1874 = vmatpush1.bf16.xpose.msra.mxu0 0
    %1875 = vmatprep.subr.bf16.mxu0 0
    %1876 = vmatpush1.bf16.xpose.msra.mxu0 0
    %1877 = vmatprep.subr.bf16.mxu0 0
    %1878 = vmatpush1.bf16.xpose.msra.mxu0 %v1861
    %1879 = vmatprep.subr.bf16.mxu0 0
    %1880 = vmatpush2.bf16.xpose.msra.mxu0 0
    %1881 = vmatprep.subr.bf16.mxu0 0
    %1882 = vmatpush2.bf16.xpose.msra.mxu0 0
    %1883 = vmatprep.subr.bf16.mxu0 0
    %1884 = vmatpush2.bf16.xpose.msra.mxu0 0
    %1885 = vmatprep.subr.bf16.mxu0 0
    %1886 = vmatpush2.bf16.xpose.msra.mxu0 0
    %1887 = vmatprep.subr.bf16.mxu0 0
    %1888 = vmatpush2.bf16.xpose.msra.mxu0 0
    %1889 = vmatprep.subr.bf16.mxu0 0
    %1890 = vmatpush2.bf16.xpose.msra.mxu0 0
    %1891 = vmatprep.subr.bf16.mxu0 0
    %1892 = vmatpush2.bf16.xpose.msra.mxu0 0
    %1893 = vmatprep.subr.bf16.mxu0 0
    %1894 = vmatpush2.bf16.xpose.msra.mxu0 0
    %1895 = vmatprep.mubr.bf16.mxu0 0
    %1896 = vmatmul.mubr.bf16.gmra.mxu0 %v1858
    %v1897 = vpop.f32.mrf.mxu0
    %v1898 = vadd.f32 0.0, %v1897
    %v1899 = vpop.f32.mrf.mxu0
    %v1900 = vpop.f32.mrf.mxu0
    %v1901 = vpop.f32.mrf.mxu0
    %1902 = vdwg.mxu0
    %1903 = vrot.lane.b32.xlu0 %v517, 32
    %v1904 = vpop.permute.xlu0 %1903
    %1905 = vrot.lane.b32.xlu0 %v523, 32
    %v1906 = vpop.permute.xlu0 %1905
    %v1908 = vsel %vm530, %v1904, 0
    %v1911 = vsel %vm530, %v1906, 0
    %1913 = vmatprep.subr.bf16.mxu0 0
    %1914 = vmatpush1.bf16.xpose.msra.mxu0 0
    %1915 = vmatprep.subr.bf16.mxu0 0
    %1916 = vmatpush1.bf16.xpose.msra.mxu0 0
    %1917 = vmatprep.subr.bf16.mxu0 0
    %1918 = vmatpush1.bf16.xpose.msra.mxu0 0
    %1919 = vmatprep.subr.bf16.mxu0 0
    %1920 = vmatpush1.bf16.xpose.msra.mxu0 0
    %1921 = vmatprep.subr.bf16.mxu0 0
    %1922 = vmatpush1.bf16.xpose.msra.mxu0 0
    %1923 = vmatprep.subr.bf16.mxu0 0
    %1924 = vmatpush1.bf16.xpose.msra.mxu0 0
    %1925 = vmatprep.subr.bf16.mxu0 0
    %1926 = vmatpush1.bf16.xpose.msra.mxu0 0
    %1927 = vmatprep.subr.bf16.mxu0 0
    %1928 = vmatpush1.bf16.xpose.msra.mxu0 %v1911
    %1929 = vmatprep.subr.bf16.mxu0 0
    %1930 = vmatpush2.bf16.xpose.msra.mxu0 0
    %1931 = vmatprep.subr.bf16.mxu0 0
    %1932 = vmatpush2.bf16.xpose.msra.mxu0 0
    %1933 = vmatprep.subr.bf16.mxu0 0
    %1934 = vmatpush2.bf16.xpose.msra.mxu0 0
    %1935 = vmatprep.subr.bf16.mxu0 0
    %1936 = vmatpush2.bf16.xpose.msra.mxu0 0
    %1937 = vmatprep.subr.bf16.mxu0 0
    %1938 = vmatpush2.bf16.xpose.msra.mxu0 0
    %1939 = vmatprep.subr.bf16.mxu0 0
    %1940 = vmatpush2.bf16.xpose.msra.mxu0 0
    %1941 = vmatprep.subr.bf16.mxu0 0
    %1942 = vmatpush2.bf16.xpose.msra.mxu0 0
    %1943 = vmatprep.subr.bf16.mxu0 0
    %1944 = vmatpush2.bf16.xpose.msra.mxu0 0
    %1945 = vmatprep.mubr.bf16.mxu0 0
    %1946 = vmatmul.mubr.bf16.gmra.mxu0 %v1908
    %v1947 = vpop.f32.mrf.mxu0
    %v1948 = vadd.f32 0.0, %v1947
    %v1949 = vpop.f32.mrf.mxu0
    %v1950 = vpop.f32.mrf.mxu0
    %v1951 = vpop.f32.mrf.mxu0
    %1952 = vdwg.mxu0
    %v1953 = vmul.f32 %v1898, 0.25
    %v1954 = vmul.f32 %v1948, 0.25
    %v1955 = vsel %vm625, %v1953, -inf
    %1956 = vmax.xlane.f32.xlu0 %v1955
    %v1957 = vpop.xlane.xlu0 %1956
    %v1958 = vsel %vm625, %v1954, -inf
    %1959 = vmax.xlane.f32.xlu0 %v1958
    %v1960 = vpop.xlane.xlu0 %1959
    %v1961 = vsub.f32 %v1953, %v1957
    %v1962 = vsub.f32 %v1954, %v1960
    %v1963 = vmul.f32 %v1961, 1.442695
    %v1964 = vpow.pop %v1963
    %v1965 = vmul.f32 %v1962, 1.442695
    %v1966 = vpow.pop %v1965
    %v1967 = vsel %vm625, %v1964, 0.0
    %1968 = vadd.xlane.f32.xlu0 %v1967
    %v1969 = vpop.xlane.xlu0 %1968
    %v1970 = vsel %vm625, %v1966, 0.0
    %1971 = vadd.xlane.f32.xlu0 %v1970
    %v1972 = vpop.xlane.xlu0 %1971
    %v1973 = vrcp.pop %v1969
    %v1974 = vrcp.pop %v1972
    %v1975 = vmul.f32 %v1964, %v1973
    %v1976 = vmul.f32 %v1966, %v1974
    %v1977 = vpack.c.bf16 %v1975, %v1975
    %v1978 = vpack.c.bf16 %v1976, %v1976
    %1979 = vrot.lane.b32.xlu0 %v528, 32
    %v1980 = vpop.permute.xlu0 %1979
    %v1982 = vsel %vm625, %v1977, 0
    %v1985 = vsel %vm653, %v1980, 0
    %1987 = vmatprep.subr.bf16.mxu0 0
    %1988 = vmatpush1.bf16.msra.mxu0 0
    %1989 = vmatprep.subr.bf16.mxu0 0
    %1990 = vmatpush1.bf16.msra.mxu0 0
    %1991 = vmatprep.subr.bf16.mxu0 0
    %1992 = vmatpush1.bf16.msra.mxu0 0
    %1993 = vmatprep.subr.bf16.mxu0 0
    %1994 = vmatpush1.bf16.msra.mxu0 0
    %1995 = vmatprep.subr.bf16.mxu0 0
    %1996 = vmatpush1.bf16.msra.mxu0 0
    %1997 = vmatprep.subr.bf16.mxu0 0
    %1998 = vmatpush1.bf16.msra.mxu0 0
    %1999 = vmatprep.subr.bf16.mxu0 0
    %2000 = vmatpush1.bf16.msra.mxu0 0
    %2001 = vmatprep.subr.bf16.mxu0 0
    %2002 = vmatpush1.bf16.msra.mxu0 %v1985
    %2003 = vmatprep.subr.bf16.mxu0 0
    %2004 = vmatpush2.bf16.msra.mxu0 0
    %2005 = vmatprep.subr.bf16.mxu0 0
    %2006 = vmatpush2.bf16.msra.mxu0 0
    %2007 = vmatprep.subr.bf16.mxu0 0
    %2008 = vmatpush2.bf16.msra.mxu0 0
    %2009 = vmatprep.subr.bf16.mxu0 0
    %2010 = vmatpush2.bf16.msra.mxu0 0
    %2011 = vmatprep.subr.bf16.mxu0 0
    %2012 = vmatpush2.bf16.msra.mxu0 0
    %2013 = vmatprep.subr.bf16.mxu0 0
    %2014 = vmatpush2.bf16.msra.mxu0 0
    %2015 = vmatprep.subr.bf16.mxu0 0
    %2016 = vmatpush2.bf16.msra.mxu0 0
    %2017 = vmatprep.subr.bf16.mxu0 0
    %2018 = vmatpush2.bf16.msra.mxu0 0
    %2019 = vmatprep.mubr.bf16.mxu0 0
    %2020 = vmatmul.mubr.bf16.gmra.mxu0 %v1982
    %v2021 = vpop.f32.mrf.mxu0
    %v2022 = vadd.f32 0.0, %v2021
    %v2023 = vpop.f32.mrf.mxu0
    %v2024 = vpop.f32.mrf.mxu0
    %v2025 = vpop.f32.mrf.mxu0
    %2026 = vdwg.mxu0
    %2027 = vrot.lane.b32.xlu0 %v529, 32
    %v2028 = vpop.permute.xlu0 %2027
    %v2030 = vsel %vm625, %v1978, 0
    %v2033 = vsel %vm653, %v2028, 0
    %2035 = vmatprep.subr.bf16.mxu0 0
    %2036 = vmatpush1.bf16.msra.mxu0 0
    %2037 = vmatprep.subr.bf16.mxu0 0
    %2038 = vmatpush1.bf16.msra.mxu0 0
    %2039 = vmatprep.subr.bf16.mxu0 0
    %2040 = vmatpush1.bf16.msra.mxu0 0
    %2041 = vmatprep.subr.bf16.mxu0 0
    %2042 = vmatpush1.bf16.msra.mxu0 0
    %2043 = vmatprep.subr.bf16.mxu0 0
    %2044 = vmatpush1.bf16.msra.mxu0 0
    %2045 = vmatprep.subr.bf16.mxu0 0
    %2046 = vmatpush1.bf16.msra.mxu0 0
    %2047 = vmatprep.subr.bf16.mxu0 0
    %2048 = vmatpush1.bf16.msra.mxu0 0
    %2049 = vmatprep.subr.bf16.mxu0 0
    %2050 = vmatpush1.bf16.msra.mxu0 %v2033
    %2051 = vmatprep.subr.bf16.mxu0 0
    %2052 = vmatpush2.bf16.msra.mxu0 0
    %2053 = vmatprep.subr.bf16.mxu0 0
    %2054 = vmatpush2.bf16.msra.mxu0 0
    %2055 = vmatprep.subr.bf16.mxu0 0
    %2056 = vmatpush2.bf16.msra.mxu0 0
    %2057 = vmatprep.subr.bf16.mxu0 0
    %2058 = vmatpush2.bf16.msra.mxu0 0
    %2059 = vmatprep.subr.bf16.mxu0 0
    %2060 = vmatpush2.bf16.msra.mxu0 0
    %2061 = vmatprep.subr.bf16.mxu0 0
    %2062 = vmatpush2.bf16.msra.mxu0 0
    %2063 = vmatprep.subr.bf16.mxu0 0
    %2064 = vmatpush2.bf16.msra.mxu0 0
    %2065 = vmatprep.subr.bf16.mxu0 0
    %2066 = vmatpush2.bf16.msra.mxu0 0
    %2067 = vmatprep.mubr.bf16.mxu0 0
    %2068 = vmatmul.mubr.bf16.gmra.mxu0 %v2030
    %v2069 = vpop.f32.mrf.mxu0
    %v2070 = vadd.f32 0.0, %v2069
    %v2071 = vpop.f32.mrf.mxu0
    %v2072 = vpop.f32.mrf.mxu0
    %v2073 = vpop.f32.mrf.mxu0
    %2074 = vdwg.mxu0
    %2075 = vrot.lane.b32.xlu0 %v516, 16
    %v2076 = vpop.permute.xlu0 %2075
    %2077 = vrot.lane.b32.xlu0 %v522, 16
    %v2078 = vpop.permute.xlu0 %2077
    %v2080 = vsel %vm530, %v2076, 0
    %v2083 = vsel %vm530, %v2078, 0
    %2085 = vmatprep.subr.bf16.mxu0 0
    %2086 = vmatpush1.bf16.xpose.msra.mxu0 0
    %2087 = vmatprep.subr.bf16.mxu0 0
    %2088 = vmatpush1.bf16.xpose.msra.mxu0 0
    %2089 = vmatprep.subr.bf16.mxu0 0
    %2090 = vmatpush1.bf16.xpose.msra.mxu0 0
    %2091 = vmatprep.subr.bf16.mxu0 0
    %2092 = vmatpush1.bf16.xpose.msra.mxu0 0
    %2093 = vmatprep.subr.bf16.mxu0 0
    %2094 = vmatpush1.bf16.xpose.msra.mxu0 0
    %2095 = vmatprep.subr.bf16.mxu0 0
    %2096 = vmatpush1.bf16.xpose.msra.mxu0 0
    %2097 = vmatprep.subr.bf16.mxu0 0
    %2098 = vmatpush1.bf16.xpose.msra.mxu0 0
    %2099 = vmatprep.subr.bf16.mxu0 0
    %2100 = vmatpush1.bf16.xpose.msra.mxu0 %v2083
    %2101 = vmatprep.subr.bf16.mxu0 0
    %2102 = vmatpush2.bf16.xpose.msra.mxu0 0
    %2103 = vmatprep.subr.bf16.mxu0 0
    %2104 = vmatpush2.bf16.xpose.msra.mxu0 0
    %2105 = vmatprep.subr.bf16.mxu0 0
    %2106 = vmatpush2.bf16.xpose.msra.mxu0 0
    %2107 = vmatprep.subr.bf16.mxu0 0
    %2108 = vmatpush2.bf16.xpose.msra.mxu0 0
    %2109 = vmatprep.subr.bf16.mxu0 0
    %2110 = vmatpush2.bf16.xpose.msra.mxu0 0
    %2111 = vmatprep.subr.bf16.mxu0 0
    %2112 = vmatpush2.bf16.xpose.msra.mxu0 0
    %2113 = vmatprep.subr.bf16.mxu0 0
    %2114 = vmatpush2.bf16.xpose.msra.mxu0 0
    %2115 = vmatprep.subr.bf16.mxu0 0
    %2116 = vmatpush2.bf16.xpose.msra.mxu0 0
    %2117 = vmatprep.mubr.bf16.mxu0 0
    %2118 = vmatmul.mubr.bf16.gmra.mxu0 %v2080
    %v2119 = vpop.f32.mrf.mxu0
    %v2120 = vadd.f32 0.0, %v2119
    %v2121 = vpop.f32.mrf.mxu0
    %v2122 = vpop.f32.mrf.mxu0
    %v2123 = vpop.f32.mrf.mxu0
    %2124 = vdwg.mxu0
    %2125 = vrot.lane.b32.xlu0 %v517, 16
    %v2126 = vpop.permute.xlu0 %2125
    %2127 = vrot.lane.b32.xlu0 %v523, 16
    %v2128 = vpop.permute.xlu0 %2127
    %v2130 = vsel %vm530, %v2126, 0
    %v2133 = vsel %vm530, %v2128, 0
    %2135 = vmatprep.subr.bf16.mxu0 0
    %2136 = vmatpush1.bf16.xpose.msra.mxu0 0
    %2137 = vmatprep.subr.bf16.mxu0 0
    %2138 = vmatpush1.bf16.xpose.msra.mxu0 0
    %2139 = vmatprep.subr.bf16.mxu0 0
    %2140 = vmatpush1.bf16.xpose.msra.mxu0 0
    %2141 = vmatprep.subr.bf16.mxu0 0
    %2142 = vmatpush1.bf16.xpose.msra.mxu0 0
    %2143 = vmatprep.subr.bf16.mxu0 0
    %2144 = vmatpush1.bf16.xpose.msra.mxu0 0
    %2145 = vmatprep.subr.bf16.mxu0 0
    %2146 = vmatpush1.bf16.xpose.msra.mxu0 0
    %2147 = vmatprep.subr.bf16.mxu0 0
    %2148 = vmatpush1.bf16.xpose.msra.mxu0 0
    %2149 = vmatprep.subr.bf16.mxu0 0
    %2150 = vmatpush1.bf16.xpose.msra.mxu0 %v2133
    %2151 = vmatprep.subr.bf16.mxu0 0
    %2152 = vmatpush2.bf16.xpose.msra.mxu0 0
    %2153 = vmatprep.subr.bf16.mxu0 0
    %2154 = vmatpush2.bf16.xpose.msra.mxu0 0
    %2155 = vmatprep.subr.bf16.mxu0 0
    %2156 = vmatpush2.bf16.xpose.msra.mxu0 0
    %2157 = vmatprep.subr.bf16.mxu0 0
    %2158 = vmatpush2.bf16.xpose.msra.mxu0 0
    %2159 = vmatprep.subr.bf16.mxu0 0
    %2160 = vmatpush2.bf16.xpose.msra.mxu0 0
    %2161 = vmatprep.subr.bf16.mxu0 0
    %2162 = vmatpush2.bf16.xpose.msra.mxu0 0
    %2163 = vmatprep.subr.bf16.mxu0 0
    %2164 = vmatpush2.bf16.xpose.msra.mxu0 0
    %2165 = vmatprep.subr.bf16.mxu0 0
    %2166 = vmatpush2.bf16.xpose.msra.mxu0 0
    %2167 = vmatprep.mubr.bf16.mxu0 0
    %2168 = vmatmul.mubr.bf16.gmra.mxu0 %v2130
    %v2169 = vpop.f32.mrf.mxu0
    %v2170 = vadd.f32 0.0, %v2169
    %v2171 = vpop.f32.mrf.mxu0
    %v2172 = vpop.f32.mrf.mxu0
    %v2173 = vpop.f32.mrf.mxu0
    %2174 = vdwg.mxu0
    %v2175 = vmul.f32 %v2120, 0.25
    %v2176 = vmul.f32 %v2170, 0.25
    %v2177 = vsel %vm625, %v2175, -inf
    %2178 = vmax.xlane.f32.xlu0 %v2177
    %v2179 = vpop.xlane.xlu0 %2178
    %v2180 = vsel %vm625, %v2176, -inf
    %2181 = vmax.xlane.f32.xlu0 %v2180
    %v2182 = vpop.xlane.xlu0 %2181
    %v2183 = vsub.f32 %v2175, %v2179
    %v2184 = vsub.f32 %v2176, %v2182
    %v2185 = vmul.f32 %v2183, 1.442695
    %v2186 = vpow.pop %v2185
    %v2187 = vmul.f32 %v2184, 1.442695
    %v2188 = vpow.pop %v2187
    %v2189 = vsel %vm625, %v2186, 0.0
    %2190 = vadd.xlane.f32.xlu0 %v2189
    %v2191 = vpop.xlane.xlu0 %2190
    %v2192 = vsel %vm625, %v2188, 0.0
    %2193 = vadd.xlane.f32.xlu0 %v2192
    %v2194 = vpop.xlane.xlu0 %2193
    %v2195 = vrcp.pop %v2191
    %v2196 = vrcp.pop %v2194
    %v2197 = vmul.f32 %v2186, %v2195
    %v2198 = vmul.f32 %v2188, %v2196
    %v2199 = vpack.c.bf16 %v2197, %v2197
    %v2200 = vpack.c.bf16 %v2198, %v2198
    %2201 = vrot.lane.b32.xlu0 %v528, 16
    %v2202 = vpop.permute.xlu0 %2201
    %v2204 = vsel %vm625, %v2199, 0
    %v2207 = vsel %vm653, %v2202, 0
    %2209 = vmatprep.subr.bf16.mxu0 0
    %2210 = vmatpush1.bf16.msra.mxu0 0
    %2211 = vmatprep.subr.bf16.mxu0 0
    %2212 = vmatpush1.bf16.msra.mxu0 0
    %2213 = vmatprep.subr.bf16.mxu0 0
    %2214 = vmatpush1.bf16.msra.mxu0 0
    %2215 = vmatprep.subr.bf16.mxu0 0
    %2216 = vmatpush1.bf16.msra.mxu0 0
    %2217 = vmatprep.subr.bf16.mxu0 0
    %2218 = vmatpush1.bf16.msra.mxu0 0
    %2219 = vmatprep.subr.bf16.mxu0 0
    %2220 = vmatpush1.bf16.msra.mxu0 0
    %2221 = vmatprep.subr.bf16.mxu0 0
    %2222 = vmatpush1.bf16.msra.mxu0 0
    %2223 = vmatprep.subr.bf16.mxu0 0
    %2224 = vmatpush1.bf16.msra.mxu0 %v2207
    %2225 = vmatprep.subr.bf16.mxu0 0
    %2226 = vmatpush2.bf16.msra.mxu0 0
    %2227 = vmatprep.subr.bf16.mxu0 0
    %2228 = vmatpush2.bf16.msra.mxu0 0
    %2229 = vmatprep.subr.bf16.mxu0 0
    %2230 = vmatpush2.bf16.msra.mxu0 0
    %2231 = vmatprep.subr.bf16.mxu0 0
    %2232 = vmatpush2.bf16.msra.mxu0 0
    %2233 = vmatprep.subr.bf16.mxu0 0
    %2234 = vmatpush2.bf16.msra.mxu0 0
    %2235 = vmatprep.subr.bf16.mxu0 0
    %2236 = vmatpush2.bf16.msra.mxu0 0
    %2237 = vmatprep.subr.bf16.mxu0 0
    %2238 = vmatpush2.bf16.msra.mxu0 0
    %2239 = vmatprep.subr.bf16.mxu0 0
    %2240 = vmatpush2.bf16.msra.mxu0 0
    %2241 = vmatprep.mubr.bf16.mxu0 0
    %2242 = vmatmul.mubr.bf16.gmra.mxu0 %v2204
    %v2243 = vpop.f32.mrf.mxu0
    %v2244 = vadd.f32 0.0, %v2243
    %v2245 = vpop.f32.mrf.mxu0
    %v2246 = vpop.f32.mrf.mxu0
    %v2247 = vpop.f32.mrf.mxu0
    %2248 = vdwg.mxu0
    %2249 = vrot.lane.b32.xlu0 %v529, 16
    %v2250 = vpop.permute.xlu0 %2249
    %v2252 = vsel %vm625, %v2200, 0
    %v2255 = vsel %vm653, %v2250, 0
    %2257 = vmatprep.subr.bf16.mxu0 0
    %2258 = vmatpush1.bf16.msra.mxu0 0
    %2259 = vmatprep.subr.bf16.mxu0 0
    %2260 = vmatpush1.bf16.msra.mxu0 0
    %2261 = vmatprep.subr.bf16.mxu0 0
    %2262 = vmatpush1.bf16.msra.mxu0 0
    %2263 = vmatprep.subr.bf16.mxu0 0
    %2264 = vmatpush1.bf16.msra.mxu0 0
    %2265 = vmatprep.subr.bf16.mxu0 0
    %2266 = vmatpush1.bf16.msra.mxu0 0
    %2267 = vmatprep.subr.bf16.mxu0 0
    %2268 = vmatpush1.bf16.msra.mxu0 0
    %2269 = vmatprep.subr.bf16.mxu0 0
    %2270 = vmatpush1.bf16.msra.mxu0 0
    %2271 = vmatprep.subr.bf16.mxu0 0
    %2272 = vmatpush1.bf16.msra.mxu0 %v2255
    %2273 = vmatprep.subr.bf16.mxu0 0
    %2274 = vmatpush2.bf16.msra.mxu0 0
    %2275 = vmatprep.subr.bf16.mxu0 0
    %2276 = vmatpush2.bf16.msra.mxu0 0
    %2277 = vmatprep.subr.bf16.mxu0 0
    %2278 = vmatpush2.bf16.msra.mxu0 0
    %2279 = vmatprep.subr.bf16.mxu0 0
    %2280 = vmatpush2.bf16.msra.mxu0 0
    %2281 = vmatprep.subr.bf16.mxu0 0
    %2282 = vmatpush2.bf16.msra.mxu0 0
    %2283 = vmatprep.subr.bf16.mxu0 0
    %2284 = vmatpush2.bf16.msra.mxu0 0
    %2285 = vmatprep.subr.bf16.mxu0 0
    %2286 = vmatpush2.bf16.msra.mxu0 0
    %2287 = vmatprep.subr.bf16.mxu0 0
    %2288 = vmatpush2.bf16.msra.mxu0 0
    %2289 = vmatprep.mubr.bf16.mxu0 0
    %2290 = vmatmul.mubr.bf16.gmra.mxu0 %v2252
    %v2291 = vpop.f32.mrf.mxu0
    %v2292 = vadd.f32 0.0, %v2291
    %v2293 = vpop.f32.mrf.mxu0
    %v2294 = vpop.f32.mrf.mxu0
    %v2295 = vpop.f32.mrf.mxu0
    %2296 = vdwg.mxu0
    %2299 = vrot.lane.b32.xlu0 %v912, 16
    %v2300 = vpop.permute.xlu0 %2299
    %2301 = vrot.lane.b32.xlu0 %v960, 16
    %v2302 = vpop.permute.xlu0 %2301
    %2307 = vrot.lane.b32.xlu0 %v1134, 32
    %v2308 = vpop.permute.xlu0 %2307
    %2309 = vrot.lane.b32.xlu0 %v1182, 32
    %v2310 = vpop.permute.xlu0 %2309
    %2315 = vrot.lane.b32.xlu0 %v1356, 48
    %v2316 = vpop.permute.xlu0 %2315
    %2317 = vrot.lane.b32.xlu0 %v1404, 48
    %v2318 = vpop.permute.xlu0 %2317
    %2323 = vrot.lane.b32.xlu0 %v1578, 64
    %v2324 = vpop.permute.xlu0 %2323
    %2325 = vrot.lane.b32.xlu0 %v1626, 64
    %v2326 = vpop.permute.xlu0 %2325
    %2331 = vrot.lane.b32.xlu0 %v1800, 80
    %v2332 = vpop.permute.xlu0 %2331
    %2333 = vrot.lane.b32.xlu0 %v1848, 80
    %v2334 = vpop.permute.xlu0 %2333
    %2339 = vrot.lane.b32.xlu0 %v2022, 96
    %v2340 = vpop.permute.xlu0 %2339
    %2341 = vrot.lane.b32.xlu0 %v2070, 96
    %v2342 = vpop.permute.xlu0 %2341
    %2347 = vrot.lane.b32.xlu0 %v2244, 112
    %v2348 = vpop.permute.xlu0 %2347
    %2349 = vrot.lane.b32.xlu0 %v2292, 112
    %v2350 = vpop.permute.xlu0 %2349
    %v2353 = vsel %vm530, %v692, %v2300
    %v2354 = vsel %vm530, %v738, %v2302
    %vm2355 = vcmask 261120
    %v2356 = vsel %vm2355, %v2353, %v2308
    %v2357 = vsel %vm2355, %v2354, %v2310
    %vm2358 = vcmask 392192
    %v2359 = vsel %vm2358, %v2356, %v2316
    %v2360 = vsel %vm2358, %v2357, %v2318
    %vm2361 = vcmask 523264
    %v2362 = vsel %vm2361, %v2359, %v2324
    %v2363 = vsel %vm2361, %v2360, %v2326
    %vm2364 = vcmask 654336
    %v2365 = vsel %vm2364, %v2362, %v2332
    %v2366 = vsel %vm2364, %v2363, %v2334
    %vm2367 = vcmask 785408
    %v2368 = vsel %vm2367, %v2365, %v2340
    %v2369 = vsel %vm2367, %v2366, %v2342
    %vm2370 = vcmask 916480
    %v2371 = vsel %vm2370, %v2368, %v2348
    %v2372 = vsel %vm2370, %v2369, %v2350
    %v2373 = vpack.c.bf16 %v2372, %v2371
    %v2374 = vld [vmem:[#allocation11] sm:$0xf]
    %v2375 = vld [vmem:[#allocation11 + $0x4] sm:$0xf]
    %v2376 = vld [vmem:[#allocation11 + $0x8] sm:$0xf]
    %v2377 = vld [vmem:[#allocation11 + $0xc] sm:$0xf]
    %v2378 = vld [vmem:[#allocation11 + $0x10] sm:$0xf]
    %v2379 = vld [vmem:[#allocation11 + $0x14] sm:$0xf]
    %v2380 = vld [vmem:[#allocation11 + $0x18] sm:$0xf]
    %v2381 = vld [vmem:[#allocation11 + $0x1c] sm:$0xf]
    %v2382 = vld [vmem:[#allocation11 + $0x20] sm:$0xf]
    %v2383 = vld [vmem:[#allocation11 + $0x24] sm:$0xf]
    %v2384 = vld [vmem:[#allocation11 + $0x28] sm:$0xf]
    %v2385 = vld [vmem:[#allocation11 + $0x2c] sm:$0xf]
    %v2386 = vld [vmem:[#allocation11 + $0x30] sm:$0xf]
    %v2387 = vld [vmem:[#allocation11 + $0x34] sm:$0xf]
    %v2388 = vld [vmem:[#allocation11 + $0x38] sm:$0xf]
    %v2389 = vld [vmem:[#allocation11 + $0x3c] sm:$0xf]
    %v2390 = vld [vmem:[%s9] sm:$0x1]
    %v2392 = vlaneseq
    %v2393 = vshrl.u32 %v2392, 7
    %v2394 = vsub.s32 0, %v2393
    %v2395 = vrot.slane %v2390, %v2394
    %v2413 = vunpack.c.l.b16 %v2374
    %v2414 = vunpack.c.l.b16 %v2375
    %v2415 = vunpack.c.l.b16 %v2376
    %v2416 = vunpack.c.l.b16 %v2377
    %v2417 = vunpack.c.l.b16 %v2378
    %v2418 = vunpack.c.l.b16 %v2379
    %v2419 = vunpack.c.l.b16 %v2380
    %v2420 = vunpack.c.l.b16 %v2381
    %v2421 = vunpack.c.l.b16 %v2382
    %v2422 = vunpack.c.l.b16 %v2383
    %v2423 = vunpack.c.l.b16 %v2384
    %v2424 = vunpack.c.l.b16 %v2385
    %v2425 = vunpack.c.l.b16 %v2386
    %v2426 = vunpack.c.l.b16 %v2387
    %v2427 = vunpack.c.l.b16 %v2388
    %v2428 = vunpack.c.l.b16 %v2389
    %v2429 = vpack.c.b16 %v2414, %v2413
    %v2430 = vpack.c.b16 %v2416, %v2415
    %v2431 = vpack.c.b16 %v2418, %v2417
    %v2432 = vpack.c.b16 %v2420, %v2419
    %v2433 = vpack.c.b16 %v2422, %v2421
    %v2434 = vpack.c.b16 %v2424, %v2423
    %v2435 = vpack.c.b16 %v2426, %v2425
    %v2436 = vpack.c.b16 %v2428, %v2427
    %2445 = vmatprep.subr.bf16.mxu0 0
    %2446 = vmatpush1.bf16.msra.mxu0 %v2436
    %2447 = vmatprep.subr.bf16.mxu0 0
    %2448 = vmatpush1.bf16.msra.mxu0 %v2435
    %2449 = vmatprep.subr.bf16.mxu0 0
    %2450 = vmatpush1.bf16.msra.mxu0 %v2434
    %2451 = vmatprep.subr.bf16.mxu0 0
    %2452 = vmatpush1.bf16.msra.mxu0 %v2433
    %2453 = vmatprep.subr.bf16.mxu0 0
    %2454 = vmatpush1.bf16.msra.mxu0 %v2432
    %2455 = vmatprep.subr.bf16.mxu0 0
    %2456 = vmatpush1.bf16.msra.mxu0 %v2431
    %2457 = vmatprep.subr.bf16.mxu0 0
    %2458 = vmatpush1.bf16.msra.mxu0 %v2430
    %2459 = vmatprep.subr.bf16.mxu0 0
    %2460 = vmatpush1.bf16.msra.mxu0 %v2429
    %2461 = vmatprep.subr.bf16.mxu0 0
    %2462 = vmatpush2.bf16.msra.mxu0 0
    %2463 = vmatprep.subr.bf16.mxu0 0
    %2464 = vmatpush2.bf16.msra.mxu0 0
    %2465 = vmatprep.subr.bf16.mxu0 0
    %2466 = vmatpush2.bf16.msra.mxu0 0
    %2467 = vmatprep.subr.bf16.mxu0 0
    %2468 = vmatpush2.bf16.msra.mxu0 0
    %2469 = vmatprep.subr.bf16.mxu0 0
    %2470 = vmatpush2.bf16.msra.mxu0 0
    %2471 = vmatprep.subr.bf16.mxu0 0
    %2472 = vmatpush2.bf16.msra.mxu0 0
    %2473 = vmatprep.subr.bf16.mxu0 0
    %2474 = vmatpush2.bf16.msra.mxu0 0
    %2475 = vmatprep.subr.bf16.mxu0 0
    %2476 = vmatpush2.bf16.msra.mxu0 0
    %2477 = vmatprep.mubr.bf16.mxu0 0
    %2478 = vmatmul.mubr.bf16.gmra.mxu0 %v2373
    %v2479 = vpop.f32.mrf.mxu0
    %v2480 = vadd.f32 %v2395, %v2479
    %v2481 = vpop.f32.mrf.mxu0
    %v2482 = vpop.f32.mrf.mxu0
    %v2483 = vadd.f32 %v2395, %v2482
    %v2484 = vpop.f32.mrf.mxu0
    %2485 = vdwg.mxu0
    %v2486 = vadd.f32 %v2480, %v170
    %v2487 = vadd.f32 %v2483, %v171
    %v2488 = vld [vmem:[%s10] sm:$0x1]
    %v2489 = vld [vmem:[%s11] sm:$0x1]
    %2490 = vadd.xlane.f32.xlu0 %v2486
    %v2491 = vpop.xlane.xlu0 %2490
    %2492 = vadd.xlane.f32.xlu0 %v2487
    %v2493 = vpop.xlane.xlu0 %2492
    %v2494 = vrcp.pop 128.0
    %v2495 = vmul.f32 %v2491, %v2494
    %v2496 = vmul.f32 %v2493, %v2494
    %v2497 = vsub.f32 %v2486, %v2495
    %v2498 = vsub.f32 %v2487, %v2496
    %v2499 = vmul.f32 %v2497, %v2497
    %v2500 = vmul.f32 %v2498, %v2498
    %2501 = vadd.xlane.f32.xlu0 %v2499
    %v2502 = vpop.xlane.xlu0 %2501
    %2503 = vadd.xlane.f32.xlu0 %v2500
    %v2504 = vpop.xlane.xlu0 %2503
    %v2505 = vmul.f32 %v2502, %v2494
    %v2506 = vmul.f32 %v2504, %v2494
    %v2507 = vadd.f32 %v2505, 1e-05
    %v2508 = vadd.f32 %v2506, 1e-05
    %v2509 = vrsqrt.pop %v2507
    %v2510 = vrsqrt.pop %v2508
    %v2511 = vmul.f32 %v2497, %v2509
    %v2512 = vmul.f32 %v2498, %v2510
    %v2514 = vlaneseq
    %v2515 = vshrl.u32 %v2514, 7
    %v2516 = vsub.s32 0, %v2515
    %v2517 = vrot.slane %v2488, %v2516
    %v2519 = vmul.f32 %v2511, %v2517
    %v2520 = vmul.f32 %v2512, %v2517
    %v2522 = vlaneseq
    %v2523 = vshrl.u32 %v2522, 7
    %v2524 = vsub.s32 0, %v2523
    %v2525 = vrot.slane %v2489, %v2524
    %v2527 = vadd.f32 %v2519, %v2525
    %v2528 = vadd.f32 %v2520, %v2525
    %v2529 = vpack.c.bf16 %v2528, %v2527
    %v2530 = vld [vmem:[#allocation13] sm:$0xff]
    %v2531 = vld [vmem:[#allocation13 + $0x8] sm:$0xff]
    %v2532 = vld [vmem:[#allocation13 + $0x10] sm:$0xff]
    %v2533 = vld [vmem:[#allocation13 + $0x18] sm:$0xff]
    %v2534 = vld [vmem:[#allocation13 + $0x20] sm:$0xff]
    %v2535 = vld [vmem:[#allocation13 + $0x28] sm:$0xff]
    %v2536 = vld [vmem:[#allocation13 + $0x30] sm:$0xff]
    %v2537 = vld [vmem:[#allocation13 + $0x38] sm:$0xff]
    %v2538 = vld [vmem:[#allocation13 + $0x40] sm:$0xff]
    %v2539 = vld [vmem:[#allocation13 + $0x48] sm:$0xff]
    %v2540 = vld [vmem:[#allocation13 + $0x50] sm:$0xff]
    %v2541 = vld [vmem:[#allocation13 + $0x58] sm:$0xff]
    %v2542 = vld [vmem:[#allocation13 + $0x60] sm:$0xff]
    %v2543 = vld [vmem:[#allocation13 + $0x68] sm:$0xff]
    %v2544 = vld [vmem:[#allocation13 + $0x70] sm:$0xff]
    %v2545 = vld [vmem:[#allocation13 + $0x78] sm:$0xff]
    %v2546 = vld [vmem:[#allocation13 + $0x80] sm:$0xff]
    %v2547 = vld [vmem:[#allocation13 + $0x88] sm:$0xff]
    %v2548 = vld [vmem:[#allocation13 + $0x90] sm:$0xff]
    %v2549 = vld [vmem:[#allocation13 + $0x98] sm:$0xff]
    %v2550 = vld [vmem:[#allocation13 + $0xa0] sm:$0xff]
    %v2551 = vld [vmem:[#allocation13 + $0xa8] sm:$0xff]
    %v2552 = vld [vmem:[#allocation13 + $0xb0] sm:$0xff]
    %v2553 = vld [vmem:[#allocation13 + $0xb8] sm:$0xff]
    %v2554 = vld [vmem:[#allocation13 + $0xc0] sm:$0xff]
    %v2555 = vld [vmem:[#allocation13 + $0xc8] sm:$0xff]
    %v2556 = vld [vmem:[#allocation13 + $0xd0] sm:$0xff]
    %v2557 = vld [vmem:[#allocation13 + $0xd8] sm:$0xff]
    %v2558 = vld [vmem:[#allocation13 + $0xe0] sm:$0xff]
    %v2559 = vld [vmem:[#allocation13 + $0xe8] sm:$0xff]
    %v2560 = vld [vmem:[#allocation13 + $0xf0] sm:$0xff]
    %v2561 = vld [vmem:[#allocation13 + $0xf8] sm:$0xff]
    %v2562 = vld [vmem:[%s13] sm:$0xf]
    %v2564 = vlaneseq
    %v2565 = vshrl.u32 %v2564, 7
    %v2566 = vsub.s32 0, %v2565
    %v2567 = vrot.slane %v2562, %v2566
    %v2568 = vlaneseq
    %v2569 = vshrl.u32 %v2568, 7
    %v2570 = vsub.s32 1, %v2569
    %v2571 = vrot.slane %v2562, %v2570
    %v2572 = vlaneseq
    %v2573 = vshrl.u32 %v2572, 7
    %v2574 = vsub.s32 2, %v2573
    %v2575 = vrot.slane %v2562, %v2574
    %v2576 = vlaneseq
    %v2577 = vshrl.u32 %v2576, 7
    %v2578 = vsub.s32 3, %v2577
    %v2579 = vrot.slane %v2562, %v2578
    %v2616 = vunpack.c.l.b16 %v2530
    %v2617 = vunpack.c.h.b16 %v2530
    %v2618 = vunpack.c.l.b16 %v2531
    %v2619 = vunpack.c.h.b16 %v2531
    %v2620 = vunpack.c.l.b16 %v2532
    %v2621 = vunpack.c.h.b16 %v2532
    %v2622 = vunpack.c.l.b16 %v2533
    %v2623 = vunpack.c.h.b16 %v2533
    %v2624 = vunpack.c.l.b16 %v2534
    %v2625 = vunpack.c.h.b16 %v2534
    %v2626 = vunpack.c.l.b16 %v2535
    %v2627 = vunpack.c.h.b16 %v2535
    %v2628 = vunpack.c.l.b16 %v2536
    %v2629 = vunpack.c.h.b16 %v2536
    %v2630 = vunpack.c.l.b16 %v2537
    %v2631 = vunpack.c.h.b16 %v2537
    %v2632 = vunpack.c.l.b16 %v2538
    %v2633 = vunpack.c.h.b16 %v2538
    %v2634 = vunpack.c.l.b16 %v2539
    %v2635 = vunpack.c.h.b16 %v2539
    %v2636 = vunpack.c.l.b16 %v2540
    %v2637 = vunpack.c.h.b16 %v2540
    %v2638 = vunpack.c.l.b16 %v2541
    %v2639 = vunpack.c.h.b16 %v2541
    %v2640 = vunpack.c.l.b16 %v2542
    %v2641 = vunpack.c.h.b16 %v2542
    %v2642 = vunpack.c.l.b16 %v2543
    %v2643 = vunpack.c.h.b16 %v2543
    %v2644 = vunpack.c.l.b16 %v2544
    %v2645 = vunpack.c.h.b16 %v2544
    %v2646 = vunpack.c.l.b16 %v2545
    %v2647 = vunpack.c.h.b16 %v2545
    %v2648 = vunpack.c.l.b16 %v2546
    %v2649 = vunpack.c.h.b16 %v2546
    %v2650 = vunpack.c.l.b16 %v2547
    %v2651 = vunpack.c.h.b16 %v2547
    %v2652 = vunpack.c.l.b16 %v2548
    %v2653 = vunpack.c.h.b16 %v2548
    %v2654 = vunpack.c.l.b16 %v2549
    %v2655 = vunpack.c.h.b16 %v2549
    %v2656 = vunpack.c.l.b16 %v2550
    %v2657 = vunpack.c.h.b16 %v2550
    %v2658 = vunpack.c.l.b16 %v2551
    %v2659 = vunpack.c.h.b16 %v2551
    %v2660 = vunpack.c.l.b16 %v2552
    %v2661 = vunpack.c.h.b16 %v2552
    %v2662 = vunpack.c.l.b16 %v2553
    %v2663 = vunpack.c.h.b16 %v2553
    %v2664 = vunpack.c.l.b16 %v2554
    %v2665 = vunpack.c.h.b16 %v2554
    %v2666 = vunpack.c.l.b16 %v2555
    %v2667 = vunpack.c.h.b16 %v2555
    %v2668 = vunpack.c.l.b16 %v2556
    %v2669 = vunpack.c.h.b16 %v2556
    %v2670 = vunpack.c.l.b16 %v2557
    %v2671 = vunpack.c.h.b16 %v2557
    %v2672 = vunpack.c.l.b16 %v2558
    %v2673 = vunpack.c.h.b16 %v2558
    %v2674 = vunpack.c.l.b16 %v2559
    %v2675 = vunpack.c.h.b16 %v2559
    %v2676 = vunpack.c.l.b16 %v2560
    %v2677 = vunpack.c.h.b16 %v2560
    %v2678 = vunpack.c.l.b16 %v2561
    %v2679 = vunpack.c.h.b16 %v2561
    %v2680 = vpack.c.b16 %v2620, %v2616
    %v2681 = vpack.c.b16 %v2621, %v2617
    %v2682 = vpack.c.b16 %v2622, %v2618
    %v2683 = vpack.c.b16 %v2623, %v2619
    %v2684 = vpack.c.b16 %v2628, %v2624
    %v2685 = vpack.c.b16 %v2629, %v2625
    %v2686 = vpack.c.b16 %v2630, %v2626
    %v2687 = vpack.c.b16 %v2631, %v2627
    %v2688 = vpack.c.b16 %v2636, %v2632
    %v2689 = vpack.c.b16 %v2637, %v2633
    %v2690 = vpack.c.b16 %v2638, %v2634
    %v2691 = vpack.c.b16 %v2639, %v2635
    %v2692 = vpack.c.b16 %v2644, %v2640
    %v2693 = vpack.c.b16 %v2645, %v2641
    %v2694 = vpack.c.b16 %v2646, %v2642
    %v2695 = vpack.c.b16 %v2647, %v2643
    %v2696 = vpack.c.b16 %v2652, %v2648
    %v2697 = vpack.c.b16 %v2653, %v2649
    %v2698 = vpack.c.b16 %v2654, %v2650
    %v2699 = vpack.c.b16 %v2655, %v2651
    %v2700 = vpack.c.b16 %v2660, %v2656
    %v2701 = vpack.c.b16 %v2661, %v2657
    %v2702 = vpack.c.b16 %v2662, %v2658
    %v2703 = vpack.c.b16 %v2663, %v2659
    %v2704 = vpack.c.b16 %v2668, %v2664
    %v2705 = vpack.c.b16 %v2669, %v2665
    %v2706 = vpack.c.b16 %v2670, %v2666
    %v2707 = vpack.c.b16 %v2671, %v2667
    %v2708 = vpack.c.b16 %v2676, %v2672
    %v2709 = vpack.c.b16 %v2677, %v2673
    %v2710 = vpack.c.b16 %v2678, %v2674
    %v2711 = vpack.c.b16 %v2679, %v2675
    %2744 = vmatprep.subr.bf16.mxu0 %v2709
    %2745 = vmatpush1.bf16.msra.mxu0 %v2708
    %2746 = vmatprep.subr.bf16.mxu0 %v2705
    %2747 = vmatpush1.bf16.msra.mxu0 %v2704
    %2748 = vmatprep.subr.bf16.mxu0 %v2701
    %2749 = vmatpush1.bf16.msra.mxu0 %v2700
    %2750 = vmatprep.subr.bf16.mxu0 %v2697
    %2751 = vmatpush1.bf16.msra.mxu0 %v2696
    %2752 = vmatprep.subr.bf16.mxu0 %v2693
    %2753 = vmatpush1.bf16.msra.mxu0 %v2692
    %2754 = vmatprep.subr.bf16.mxu0 %v2689
    %2755 = vmatpush1.bf16.msra.mxu0 %v2688
    %2756 = vmatprep.subr.bf16.mxu0 %v2685
    %2757 = vmatpush1.bf16.msra.mxu0 %v2684
    %2758 = vmatprep.subr.bf16.mxu0 %v2681
    %2759 = vmatpush1.bf16.msra.mxu0 %v2680
    %2760 = vmatprep.subr.bf16.mxu0 0
    %2761 = vmatpush2.bf16.msra.mxu0 0
    %2762 = vmatprep.subr.bf16.mxu0 0
    %2763 = vmatpush2.bf16.msra.mxu0 0
    %2764 = vmatprep.subr.bf16.mxu0 0
    %2765 = vmatpush2.bf16.msra.mxu0 0
    %2766 = vmatprep.subr.bf16.mxu0 0
    %2767 = vmatpush2.bf16.msra.mxu0 0
    %2768 = vmatprep.subr.bf16.mxu0 0
    %2769 = vmatpush2.bf16.msra.mxu0 0
    %2770 = vmatprep.subr.bf16.mxu0 0
    %2771 = vmatpush2.bf16.msra.mxu0 0
    %2772 = vmatprep.subr.bf16.mxu0 0
    %2773 = vmatpush2.bf16.msra.mxu0 0
    %2774 = vmatprep.subr.bf16.mxu0 0
    %2775 = vmatpush2.bf16.msra.mxu0 0
    %2776 = vmatprep.mubr.bf16.mxu0 0
    %2777 = vmatmul.mubr.bf16.gmra.mxu0 %v2529
    %v2778 = vpop.f32.mrf.mxu0
    %v2779 = vadd.f32 %v2567, %v2778
    %v2780 = vpop.f32.mrf.mxu0
    %v2781 = vadd.f32 %v2571, %v2780
    %v2782 = vpop.f32.mrf.mxu0
    %v2783 = vadd.f32 %v2567, %v2782
    %v2784 = vpop.f32.mrf.mxu0
    %v2785 = vadd.f32 %v2571, %v2784
    %2786 = vdwg.mxu0
    %2787 = vmatprep.subr.bf16.mxu0 %v2711
    %2788 = vmatpush1.bf16.msra.mxu0 %v2710
    %2789 = vmatprep.subr.bf16.mxu0 %v2707
    %2790 = vmatpush1.bf16.msra.mxu0 %v2706
    %2791 = vmatprep.subr.bf16.mxu0 %v2703
    %2792 = vmatpush1.bf16.msra.mxu0 %v2702
    %2793 = vmatprep.subr.bf16.mxu0 %v2699
    %2794 = vmatpush1.bf16.msra.mxu0 %v2698
    %2795 = vmatprep.subr.bf16.mxu0 %v2695
    %2796 = vmatpush1.bf16.msra.mxu0 %v2694
    %2797 = vmatprep.subr.bf16.mxu0 %v2691
    %2798 = vmatpush1.bf16.msra.mxu0 %v2690
    %2799 = vmatprep.subr.bf16.mxu0 %v2687
    %2800 = vmatpush1.bf16.msra.mxu0 %v2686
    %2801 = vmatprep.subr.bf16.mxu0 %v2683
    %2802 = vmatpush1.bf16.msra.mxu0 %v2682
    %2803 = vmatprep.subr.bf16.mxu0 0
    %2804 = vmatpush2.bf16.msra.mxu0 0
    %2805 = vmatprep.subr.bf16.mxu0 0
    %2806 = vmatpush2.bf16.msra.mxu0 0
    %2807 = vmatprep.subr.bf16.mxu0 0
    %2808 = vmatpush2.bf16.msra.mxu0 0
    %2809 = vmatprep.subr.bf16.mxu0 0
    %2810 = vmatpush2.bf16.msra.mxu0 0
    %2811 = vmatprep.subr.bf16.mxu0 0
    %2812 = vmatpush2.bf16.msra.mxu0 0
    %2813 = vmatprep.subr.bf16.mxu0 0
    %2814 = vmatpush2.bf16.msra.mxu0 0
    %2815 = vmatprep.subr.bf16.mxu0 0
    %2816 = vmatpush2.bf16.msra.mxu0 0
    %2817 = vmatprep.subr.bf16.mxu0 0
    %2818 = vmatpush2.bf16.msra.mxu0 0
    %2819 = vmatprep.mubr.bf16.mxu0 0
    %2820 = vmatmul.mubr.bf16.gmra.mxu0 %v2529
    %v2821 = vpop.f32.mrf.mxu0
    %v2822 = vadd.f32 %v2575, %v2821
    %v2823 = vpop.f32.mrf.mxu0
    %v2824 = vadd.f32 %v2579, %v2823
    %v2825 = vpop.f32.mrf.mxu0
    %v2826 = vadd.f32 %v2575, %v2825
    %v2827 = vpop.f32.mrf.mxu0
    %v2828 = vadd.f32 %v2579, %v2827
    %2829 = vdwg.mxu0
    %v2830 = vmul.f32 %v2779, 0.5
    %v2831 = vmul.f32 %v2781, 0.5
    %v2832 = vmul.f32 %v2822, 0.5
    %v2833 = vmul.f32 %v2824, 0.5
    %v2834 = vmul.f32 %v2783, 0.5
    %v2835 = vmul.f32 %v2785, 0.5
    %v2836 = vmul.f32 %v2826, 0.5
    %v2837 = vmul.f32 %v2828, 0.5
    %v2838 = vmul.f32 %v2779, 0.70710677
    %v2839 = vmul.f32 %v2781, 0.70710677
    %v2840 = vmul.f32 %v2822, 0.70710677
    %v2841 = vmul.f32 %v2824, 0.70710677
    %v2842 = vmul.f32 %v2783, 0.70710677
    %v2843 = vmul.f32 %v2785, 0.70710677
    %v2844 = vmul.f32 %v2826, 0.70710677
    %v2845 = vmul.f32 %v2828, 0.70710677
    %vm2846 = vcmp.ge.f32.partialorder %v2838, 0.0
    %vm2847 = vcmp.ge.f32.partialorder %v2839, 0.0
    %vm2848 = vcmp.ge.f32.partialorder %v2840, 0.0
    %vm2849 = vcmp.ge.f32.partialorder %v2841, 0.0
    %vm2850 = vcmp.ge.f32.partialorder %v2842, 0.0
    %vm2851 = vcmp.ge.f32.partialorder %v2843, 0.0
    %vm2852 = vcmp.ge.f32.partialorder %v2844, 0.0
    %vm2853 = vcmp.ge.f32.partialorder %v2845, 0.0
    %v2854 = vsel %vm2846, 1.0, -1.0
    %v2855 = vsel %vm2847, 1.0, -1.0
    %v2856 = vsel %vm2848, 1.0, -1.0
    %v2857 = vsel %vm2849, 1.0, -1.0
    %v2858 = vsel %vm2850, 1.0, -1.0
    %v2859 = vsel %vm2851, 1.0, -1.0
    %v2860 = vsel %vm2852, 1.0, -1.0
    %v2861 = vsel %vm2853, 1.0, -1.0
    %v2862 = vand.u32 2147483647, %v2838
    %v2863 = vand.u32 2147483647, %v2839
    %v2864 = vand.u32 2147483647, %v2840
    %v2865 = vand.u32 2147483647, %v2841
    %v2866 = vand.u32 2147483647, %v2842
    %v2867 = vand.u32 2147483647, %v2843
    %v2868 = vand.u32 2147483647, %v2844
    %v2869 = vand.u32 2147483647, %v2845
    %v2870 = vmul.f32 %v2862, 0.3275911
    %v2871 = vmul.f32 %v2863, 0.3275911
    %v2872 = vmul.f32 %v2864, 0.3275911
    %v2873 = vmul.f32 %v2865, 0.3275911
    %v2874 = vmul.f32 %v2866, 0.3275911
    %v2875 = vmul.f32 %v2867, 0.3275911
    %v2876 = vmul.f32 %v2868, 0.3275911
    %v2877 = vmul.f32 %v2869, 0.3275911
    %v2878 = vadd.f32 %v2870, 1.0
    %v2879 = vadd.f32 %v2871, 1.0
    %v2880 = vadd.f32 %v2872, 1.0
    %v2881 = vadd.f32 %v2873, 1.0
    %v2882 = vadd.f32 %v2874, 1.0
    %v2883 = vadd.f32 %v2875, 1.0
    %v2884 = vadd.f32 %v2876, 1.0
    %v2885 = vadd.f32 %v2877, 1.0
    %v2886 = vrcp.pop %v2878
    %v2887 = vrcp.pop %v2879
    %v2888 = vrcp.pop %v2880
    %v2889 = vrcp.pop %v2881
    %v2890 = vrcp.pop %v2882
    %v2891 = vrcp.pop %v2883
    %v2892 = vrcp.pop %v2884
    %v2893 = vrcp.pop %v2885
    %v2894 = vmul.f32 %v2886, 1.0614054
    %v2895 = vmul.f32 %v2887, 1.0614054
    %v2896 = vmul.f32 %v2888, 1.0614054
    %v2897 = vmul.f32 %v2889, 1.0614054
    %v2898 = vmul.f32 %v2890, 1.0614054
    %v2899 = vmul.f32 %v2891, 1.0614054
    %v2900 = vmul.f32 %v2892, 1.0614054
    %v2901 = vmul.f32 %v2893, 1.0614054
    %v2902 = vadd.f32 %v2894, -1.4531521
    %v2903 = vadd.f32 %v2895, -1.4531521
    %v2904 = vadd.f32 %v2896, -1.4531521
    %v2905 = vadd.f32 %v2897, -1.4531521
    %v2906 = vadd.f32 %v2898, -1.4531521
    %v2907 = vadd.f32 %v2899, -1.4531521
    %v2908 = vadd.f32 %v2900, -1.4531521
    %v2909 = vadd.f32 %v2901, -1.4531521
    %v2910 = vmul.f32 %v2902, %v2886
    %v2911 = vmul.f32 %v2903, %v2887
    %v2912 = vmul.f32 %v2904, %v2888
    %v2913 = vmul.f32 %v2905, %v2889
    %v2914 = vmul.f32 %v2906, %v2890
    %v2915 = vmul.f32 %v2907, %v2891
    %v2916 = vmul.f32 %v2908, %v2892
    %v2917 = vmul.f32 %v2909, %v2893
    %v2918 = vadd.f32 %v2910, 1.4214138
    %v2919 = vadd.f32 %v2911, 1.4214138
    %v2920 = vadd.f32 %v2912, 1.4214138
    %v2921 = vadd.f32 %v2913, 1.4214138
    %v2922 = vadd.f32 %v2914, 1.4214138
    %v2923 = vadd.f32 %v2915, 1.4214138
    %v2924 = vadd.f32 %v2916, 1.4214138
    %v2925 = vadd.f32 %v2917, 1.4214138
    %v2926 = vmul.f32 %v2918, %v2886
    %v2927 = vmul.f32 %v2919, %v2887
    %v2928 = vmul.f32 %v2920, %v2888
    %v2929 = vmul.f32 %v2921, %v2889
    %v2930 = vmul.f32 %v2922, %v2890
    %v2931 = vmul.f32 %v2923, %v2891
    %v2932 = vmul.f32 %v2924, %v2892
    %v2933 = vmul.f32 %v2925, %v2893
    %v2934 = vadd.f32 %v2926, -0.28449672
    %v2935 = vadd.f32 %v2927, -0.28449672
    %v2936 = vadd.f32 %v2928, -0.28449672
    %v2937 = vadd.f32 %v2929, -0.28449672
    %v2938 = vadd.f32 %v2930, -0.28449672
    %v2939 = vadd.f32 %v2931, -0.28449672
    %v2940 = vadd.f32 %v2932, -0.28449672
    %v2941 = vadd.f32 %v2933, -0.28449672
    %v2942 = vmul.f32 %v2934, %v2886
    %v2943 = vmul.f32 %v2935, %v2887
    %v2944 = vmul.f32 %v2936, %v2888
    %v2945 = vmul.f32 %v2937, %v2889
    %v2946 = vmul.f32 %v2938, %v2890
    %v2947 = vmul.f32 %v2939, %v2891
    %v2948 = vmul.f32 %v2940, %v2892
    %v2949 = vmul.f32 %v2941, %v2893
    %v2950 = vadd.f32 %v2942, 0.2548296
    %v2951 = vadd.f32 %v2943, 0.2548296
    %v2952 = vadd.f32 %v2944, 0.2548296
    %v2953 = vadd.f32 %v2945, 0.2548296
    %v2954 = vadd.f32 %v2946, 0.2548296
    %v2955 = vadd.f32 %v2947, 0.2548296
    %v2956 = vadd.f32 %v2948, 0.2548296
    %v2957 = vadd.f32 %v2949, 0.2548296
    %v2958 = vmul.f32 %v2950, %v2886
    %v2959 = vmul.f32 %v2951, %v2887
    %v2960 = vmul.f32 %v2952, %v2888
    %v2961 = vmul.f32 %v2953, %v2889
    %v2962 = vmul.f32 %v2954, %v2890
    %v2963 = vmul.f32 %v2955, %v2891
    %v2964 = vmul.f32 %v2956, %v2892
    %v2965 = vmul.f32 %v2957, %v2893
    %v2966 = vsub.f32 0.0, %v2862
    %v2967 = vsub.f32 0.0, %v2863
    %v2968 = vsub.f32 0.0, %v2864
    %v2969 = vsub.f32 0.0, %v2865
    %v2970 = vsub.f32 0.0, %v2866
    %v2971 = vsub.f32 0.0, %v2867
    %v2972 = vsub.f32 0.0, %v2868
    %v2973 = vsub.f32 0.0, %v2869
    %v2974 = vmul.f32 %v2966, %v2862
    %v2975 = vmul.f32 %v2967, %v2863
    %v2976 = vmul.f32 %v2968, %v2864
    %v2977 = vmul.f32 %v2969, %v2865
    %v2978 = vmul.f32 %v2970, %v2866
    %v2979 = vmul.f32 %v2971, %v2867
    %v2980 = vmul.f32 %v2972, %v2868
    %v2981 = vmul.f32 %v2973, %v2869
    %v2982 = vmul.f32 %v2974, 1.442695
    %v2983 = vpow.pop %v2982
    %v2984 = vmul.f32 %v2975, 1.442695
    %v2985 = vpow.pop %v2984
    %v2986 = vmul.f32 %v2976, 1.442695
    %v2987 = vpow.pop %v2986
    %v2988 = vmul.f32 %v2977, 1.442695
    %v2989 = vpow.pop %v2988
    %v2990 = vmul.f32 %v2978, 1.442695
    %v2991 = vpow.pop %v2990
    %v2992 = vmul.f32 %v2979, 1.442695
    %v2993 = vpow.pop %v2992
    %v2994 = vmul.f32 %v2980, 1.442695
    %v2995 = vpow.pop %v2994
    %v2996 = vmul.f32 %v2981, 1.442695
    %v2997 = vpow.pop %v2996
    %v2998 = vmul.f32 %v2958, %v2983
    %v2999 = vmul.f32 %v2959, %v2985
    %v3000 = vmul.f32 %v2960, %v2987
    %v3001 = vmul.f32 %v2961, %v2989
    %v3002 = vmul.f32 %v2962, %v2991
    %v3003 = vmul.f32 %v2963, %v2993
    %v3004 = vmul.f32 %v2964, %v2995
    %v3005 = vmul.f32 %v2965, %v2997
    %v3006 = vsub.f32 1.0, %v2998
    %v3007 = vsub.f32 1.0, %v2999
    %v3008 = vsub.f32 1.0, %v3000
    %v3009 = vsub.f32 1.0, %v3001
    %v3010 = vsub.f32 1.0, %v3002
    %v3011 = vsub.f32 1.0, %v3003
    %v3012 = vsub.f32 1.0, %v3004
    %v3013 = vsub.f32 1.0, %v3005
    %v3014 = vmul.f32 %v2854, %v3006
    %v3015 = vmul.f32 %v2855, %v3007
    %v3016 = vmul.f32 %v2856, %v3008
    %v3017 = vmul.f32 %v2857, %v3009
    %v3018 = vmul.f32 %v2858, %v3010
    %v3019 = vmul.f32 %v2859, %v3011
    %v3020 = vmul.f32 %v2860, %v3012
    %v3021 = vmul.f32 %v2861, %v3013
    %v3022 = vadd.f32 %v3014, 1.0
    %v3023 = vadd.f32 %v3015, 1.0
    %v3024 = vadd.f32 %v3016, 1.0
    %v3025 = vadd.f32 %v3017, 1.0
    %v3026 = vadd.f32 %v3018, 1.0
    %v3027 = vadd.f32 %v3019, 1.0
    %v3028 = vadd.f32 %v3020, 1.0
    %v3029 = vadd.f32 %v3021, 1.0
    %v3030 = vmul.f32 %v2830, %v3022
    %v3031 = vmul.f32 %v2831, %v3023
    %v3032 = vmul.f32 %v2832, %v3024
    %v3033 = vmul.f32 %v2833, %v3025
    %v3034 = vmul.f32 %v2834, %v3026
    %v3035 = vmul.f32 %v2835, %v3027
    %v3036 = vmul.f32 %v2836, %v3028
    %v3037 = vmul.f32 %v2837, %v3029
    %v3038 = vpack.c.bf16 %v3034, %v3030
    %v3039 = vpack.c.bf16 %v3035, %v3031
    %v3040 = vpack.c.bf16 %v3036, %v3032
    %v3041 = vpack.c.bf16 %v3037, %v3033
    %v3042 = vld [vmem:[#allocation14] sm:$0xf]
    %v3043 = vld [vmem:[#allocation14 + $0x4] sm:$0xf]
    %v3044 = vld [vmem:[#allocation14 + $0x8] sm:$0xf]
    %v3045 = vld [vmem:[#allocation14 + $0xc] sm:$0xf]
    %v3046 = vld [vmem:[#allocation14 + $0x10] sm:$0xf]
    %v3047 = vld [vmem:[#allocation14 + $0x14] sm:$0xf]
    %v3048 = vld [vmem:[#allocation14 + $0x18] sm:$0xf]
    %v3049 = vld [vmem:[#allocation14 + $0x1c] sm:$0xf]
    %v3050 = vld [vmem:[#allocation14 + $0x20] sm:$0xf]
    %v3051 = vld [vmem:[#allocation14 + $0x24] sm:$0xf]
    %v3052 = vld [vmem:[#allocation14 + $0x28] sm:$0xf]
    %v3053 = vld [vmem:[#allocation14 + $0x2c] sm:$0xf]
    %v3054 = vld [vmem:[#allocation14 + $0x30] sm:$0xf]
    %v3055 = vld [vmem:[#allocation14 + $0x34] sm:$0xf]
    %v3056 = vld [vmem:[#allocation14 + $0x38] sm:$0xf]
    %v3057 = vld [vmem:[#allocation14 + $0x3c] sm:$0xf]
    %v3058 = vld [vmem:[#allocation14 + $0x40] sm:$0xf]
    %v3059 = vld [vmem:[#allocation14 + $0x44] sm:$0xf]
    %v3060 = vld [vmem:[#allocation14 + $0x48] sm:$0xf]
    %v3061 = vld [vmem:[#allocation14 + $0x4c] sm:$0xf]
    %v3062 = vld [vmem:[#allocation14 + $0x50] sm:$0xf]
    %v3063 = vld [vmem:[#allocation14 + $0x54] sm:$0xf]
    %v3064 = vld [vmem:[#allocation14 + $0x58] sm:$0xf]
    %v3065 = vld [vmem:[#allocation14 + $0x5c] sm:$0xf]
    %v3066 = vld [vmem:[#allocation14 + $0x60] sm:$0xf]
    %v3067 = vld [vmem:[#allocation14 + $0x64] sm:$0xf]
    %v3068 = vld [vmem:[#allocation14 + $0x68] sm:$0xf]
    %v3069 = vld [vmem:[#allocation14 + $0x6c] sm:$0xf]
    %v3070 = vld [vmem:[#allocation14 + $0x70] sm:$0xf]
    %v3071 = vld [vmem:[#allocation14 + $0x74] sm:$0xf]
    %v3072 = vld [vmem:[#allocation14 + $0x78] sm:$0xf]
    %v3073 = vld [vmem:[#allocation14 + $0x7c] sm:$0xf]
    %v3074 = vld [vmem:[#allocation14 + $0x80] sm:$0xf]
    %v3075 = vld [vmem:[#allocation14 + $0x84] sm:$0xf]
    %v3076 = vld [vmem:[#allocation14 + $0x88] sm:$0xf]
    %v3077 = vld [vmem:[#allocation14 + $0x8c] sm:$0xf]
    %v3078 = vld [vmem:[#allocation14 + $0x90] sm:$0xf]
    %v3079 = vld [vmem:[#allocation14 + $0x94] sm:$0xf]
    %v3080 = vld [vmem:[#allocation14 + $0x98] sm:$0xf]
    %v3081 = vld [vmem:[#allocation14 + $0x9c] sm:$0xf]
    %v3082 = vld [vmem:[#allocation14 + $0xa0] sm:$0xf]
    %v3083 = vld [vmem:[#allocation14 + $0xa4] sm:$0xf]
    %v3084 = vld [vmem:[#allocation14 + $0xa8] sm:$0xf]
    %v3085 = vld [vmem:[#allocation14 + $0xac] sm:$0xf]
    %v3086 = vld [vmem:[#allocation14 + $0xb0] sm:$0xf]
    %v3087 = vld [vmem:[#allocation14 + $0xb4] sm:$0xf]
    %v3088 = vld [vmem:[#allocation14 + $0xb8] sm:$0xf]
    %v3089 = vld [vmem:[#allocation14 + $0xbc] sm:$0xf]
    %v3090 = vld [vmem:[#allocation14 + $0xc0] sm:$0xf]
    %v3091 = vld [vmem:[#allocation14 + $0xc4] sm:$0xf]
    %v3092 = vld [vmem:[#allocation14 + $0xc8] sm:$0xf]
    %v3093 = vld [vmem:[#allocation14 + $0xcc] sm:$0xf]
    %v3094 = vld [vmem:[#allocation14 + $0xd0] sm:$0xf]
    %v3095 = vld [vmem:[#allocation14 + $0xd4] sm:$0xf]
    %v3096 = vld [vmem:[#allocation14 + $0xd8] sm:$0xf]
    %v3097 = vld [vmem:[#allocation14 + $0xdc] sm:$0xf]
    %v3098 = vld [vmem:[#allocation14 + $0xe0] sm:$0xf]
    %v3099 = vld [vmem:[#allocation14 + $0xe4] sm:$0xf]
    %v3100 = vld [vmem:[#allocation14 + $0xe8] sm:$0xf]
    %v3101 = vld [vmem:[#allocation14 + $0xec] sm:$0xf]
    %v3102 = vld [vmem:[#allocation14 + $0xf0] sm:$0xf]
    %v3103 = vld [vmem:[#allocation14 + $0xf4] sm:$0xf]
    %v3104 = vld [vmem:[#allocation14 + $0xf8] sm:$0xf]
    %v3105 = vld [vmem:[#allocation14 + $0xfc] sm:$0xf]
    %v3106 = vld [vmem:[%s15] sm:$0x1]
    %v3108 = vlaneseq
    %v3109 = vshrl.u32 %v3108, 7
    %v3110 = vsub.s32 0, %v3109
    %v3111 = vrot.slane %v3106, %v3110
    %v3177 = vunpack.c.l.b16 %v3042
    %v3178 = vunpack.c.l.b16 %v3043
    %v3179 = vunpack.c.l.b16 %v3044
    %v3180 = vunpack.c.l.b16 %v3045
    %v3181 = vunpack.c.l.b16 %v3046
    %v3182 = vunpack.c.l.b16 %v3047
    %v3183 = vunpack.c.l.b16 %v3048
    %v3184 = vunpack.c.l.b16 %v3049
    %v3185 = vunpack.c.l.b16 %v3050
    %v3186 = vunpack.c.l.b16 %v3051
    %v3187 = vunpack.c.l.b16 %v3052
    %v3188 = vunpack.c.l.b16 %v3053
    %v3189 = vunpack.c.l.b16 %v3054
    %v3190 = vunpack.c.l.b16 %v3055
    %v3191 = vunpack.c.l.b16 %v3056
    %v3192 = vunpack.c.l.b16 %v3057
    %v3193 = vunpack.c.l.b16 %v3058
    %v3194 = vunpack.c.l.b16 %v3059
    %v3195 = vunpack.c.l.b16 %v3060
    %v3196 = vunpack.c.l.b16 %v3061
    %v3197 = vunpack.c.l.b16 %v3062
    %v3198 = vunpack.c.l.b16 %v3063
    %v3199 = vunpack.c.l.b16 %v3064
    %v3200 = vunpack.c.l.b16 %v3065
    %v3201 = vunpack.c.l.b16 %v3066
    %v3202 = vunpack.c.l.b16 %v3067
    %v3203 = vunpack.c.l.b16 %v3068
    %v3204 = vunpack.c.l.b16 %v3069
    %v3205 = vunpack.c.l.b16 %v3070
    %v3206 = vunpack.c.l.b16 %v3071
    %v3207 = vunpack.c.l.b16 %v3072
    %v3208 = vunpack.c.l.b16 %v3073
    %v3209 = vunpack.c.l.b16 %v3074
    %v3210 = vunpack.c.l.b16 %v3075
    %v3211 = vunpack.c.l.b16 %v3076
    %v3212 = vunpack.c.l.b16 %v3077
    %v3213 = vunpack.c.l.b16 %v3078
    %v3214 = vunpack.c.l.b16 %v3079
    %v3215 = vunpack.c.l.b16 %v3080
    %v3216 = vunpack.c.l.b16 %v3081
    %v3217 = vunpack.c.l.b16 %v3082
    %v3218 = vunpack.c.l.b16 %v3083
    %v3219 = vunpack.c.l.b16 %v3084
    %v3220 = vunpack.c.l.b16 %v3085
    %v3221 = vunpack.c.l.b16 %v3086
    %v3222 = vunpack.c.l.b16 %v3087
    %v3223 = vunpack.c.l.b16 %v3088
    %v3224 = vunpack.c.l.b16 %v3089
    %v3225 = vunpack.c.l.b16 %v3090
    %v3226 = vunpack.c.l.b16 %v3091
    %v3227 = vunpack.c.l.b16 %v3092
    %v3228 = vunpack.c.l.b16 %v3093
    %v3229 = vunpack.c.l.b16 %v3094
    %v3230 = vunpack.c.l.b16 %v3095
    %v3231 = vunpack.c.l.b16 %v3096
    %v3232 = vunpack.c.l.b16 %v3097
    %v3233 = vunpack.c.l.b16 %v3098
    %v3234 = vunpack.c.l.b16 %v3099
    %v3235 = vunpack.c.l.b16 %v3100
    %v3236 = vunpack.c.l.b16 %v3101
    %v3237 = vunpack.c.l.b16 %v3102
    %v3238 = vunpack.c.l.b16 %v3103
    %v3239 = vunpack.c.l.b16 %v3104
    %v3240 = vunpack.c.l.b16 %v3105
    %v3241 = vpack.c.b16 %v3178, %v3177
    %v3242 = vpack.c.b16 %v3180, %v3179
    %v3243 = vpack.c.b16 %v3182, %v3181
    %v3244 = vpack.c.b16 %v3184, %v3183
    %v3245 = vpack.c.b16 %v3186, %v3185
    %v3246 = vpack.c.b16 %v3188, %v3187
    %v3247 = vpack.c.b16 %v3190, %v3189
    %v3248 = vpack.c.b16 %v3192, %v3191
    %v3249 = vpack.c.b16 %v3194, %v3193
    %v3250 = vpack.c.b16 %v3196, %v3195
    %v3251 = vpack.c.b16 %v3198, %v3197
    %v3252 = vpack.c.b16 %v3200, %v3199
    %v3253 = vpack.c.b16 %v3202, %v3201
    %v3254 = vpack.c.b16 %v3204, %v3203
    %v3255 = vpack.c.b16 %v3206, %v3205
    %v3256 = vpack.c.b16 %v3208, %v3207
    %v3257 = vpack.c.b16 %v3210, %v3209
    %v3258 = vpack.c.b16 %v3212, %v3211
    %v3259 = vpack.c.b16 %v3214, %v3213
    %v3260 = vpack.c.b16 %v3216, %v3215
    %v3261 = vpack.c.b16 %v3218, %v3217
    %v3262 = vpack.c.b16 %v3220, %v3219
    %v3263 = vpack.c.b16 %v3222, %v3221
    %v3264 = vpack.c.b16 %v3224, %v3223
    %v3265 = vpack.c.b16 %v3226, %v3225
    %v3266 = vpack.c.b16 %v3228, %v3227
    %v3267 = vpack.c.b16 %v3230, %v3229
    %v3268 = vpack.c.b16 %v3232, %v3231
    %v3269 = vpack.c.b16 %v3234, %v3233
    %v3270 = vpack.c.b16 %v3236, %v3235
    %v3271 = vpack.c.b16 %v3238, %v3237
    %v3272 = vpack.c.b16 %v3240, %v3239
    %3305 = vmatprep.subr.bf16.mxu0 0
    %3306 = vmatpush1.bf16.msra.mxu0 %v3248
    %3307 = vmatprep.subr.bf16.mxu0 0
    %3308 = vmatpush1.bf16.msra.mxu0 %v3247
    %3309 = vmatprep.subr.bf16.mxu0 0
    %3310 = vmatpush1.bf16.msra.mxu0 %v3246
    %3311 = vmatprep.subr.bf16.mxu0 0
    %3312 = vmatpush1.bf16.msra.mxu0 %v3245
    %3313 = vmatprep.subr.bf16.mxu0 0
    %3314 = vmatpush1.bf16.msra.mxu0 %v3244
    %3315 = vmatprep.subr.bf16.mxu0 0
    %3316 = vmatpush1.bf16.msra.mxu0 %v3243
    %3317 = vmatprep.subr.bf16.mxu0 0
    %3318 = vmatpush1.bf16.msra.mxu0 %v3242
    %3319 = vmatprep.subr.bf16.mxu0 0
    %3320 = vmatpush1.bf16.msra.mxu0 %v3241
    %3321 = vmatprep.subr.bf16.mxu0 0
    %3322 = vmatpush2.bf16.msra.mxu0 %v3256
    %3323 = vmatprep.subr.bf16.mxu0 0
    %3324 = vmatpush2.bf16.msra.mxu0 %v3255
    %3325 = vmatprep.subr.bf16.mxu0 0
    %3326 = vmatpush2.bf16.msra.mxu0 %v3254
    %3327 = vmatprep.subr.bf16.mxu0 0
    %3328 = vmatpush2.bf16.msra.mxu0 %v3253
    %3329 = vmatprep.subr.bf16.mxu0 0
    %3330 = vmatpush2.bf16.msra.mxu0 %v3252
    %3331 = vmatprep.subr.bf16.mxu0 0
    %3332 = vmatpush2.bf16.msra.mxu0 %v3251
    %3333 = vmatprep.subr.bf16.mxu0 0
    %3334 = vmatpush2.bf16.msra.mxu0 %v3250
    %3335 = vmatprep.subr.bf16.mxu0 0
    %3336 = vmatpush2.bf16.msra.mxu0 %v3249
    %3337 = vmatprep.mubr.bf16.mxu0 %v3039
    %3338 = vmatmul.mubr.bf16.gmra.mxu0 %v3038
    %v3339 = vpop.f32.mrf.mxu0
    %v3340 = vadd.f32 %v3111, %v3339
    %v3341 = vpop.f32.mrf.mxu0
    %v3342 = vpop.f32.mrf.mxu0
    %v3343 = vadd.f32 %v3111, %v3342
    %v3344 = vpop.f32.mrf.mxu0
    %3345 = vdwg.mxu0
    %3346 = vmatprep.subr.bf16.mxu0 0
    %3347 = vmatpush1.bf16.msra.mxu0 %v3264
    %3348 = vmatprep.subr.bf16.mxu0 0
    %3349 = vmatpush1.bf16.msra.mxu0 %v3263
    %3350 = vmatprep.subr.bf16.mxu0 0
    %3351 = vmatpush1.bf16.msra.mxu0 %v3262
    %3352 = vmatprep.subr.bf16.mxu0 0
    %3353 = vmatpush1.bf16.msra.mxu0 %v3261
    %3354 = vmatprep.subr.bf16.mxu0 0
    %3355 = vmatpush1.bf16.msra.mxu0 %v3260
    %3356 = vmatprep.subr.bf16.mxu0 0
    %3357 = vmatpush1.bf16.msra.mxu0 %v3259
    %3358 = vmatprep.subr.bf16.mxu0 0
    %3359 = vmatpush1.bf16.msra.mxu0 %v3258
    %3360 = vmatprep.subr.bf16.mxu0 0
    %3361 = vmatpush1.bf16.msra.mxu0 %v3257
    %3362 = vmatprep.subr.bf16.mxu0 0
    %3363 = vmatpush2.bf16.msra.mxu0 %v3272
    %3364 = vmatprep.subr.bf16.mxu0 0
    %3365 = vmatpush2.bf16.msra.mxu0 %v3271
    %3366 = vmatprep.subr.bf16.mxu0 0
    %3367 = vmatpush2.bf16.msra.mxu0 %v3270
    %3368 = vmatprep.subr.bf16.mxu0 0
    %3369 = vmatpush2.bf16.msra.mxu0 %v3269
    %3370 = vmatprep.subr.bf16.mxu0 0
    %3371 = vmatpush2.bf16.msra.mxu0 %v3268
    %3372 = vmatprep.subr.bf16.mxu0 0
    %3373 = vmatpush2.bf16.msra.mxu0 %v3267
    %3374 = vmatprep.subr.bf16.mxu0 0
    %3375 = vmatpush2.bf16.msra.mxu0 %v3266
    %3376 = vmatprep.subr.bf16.mxu0 0
    %3377 = vmatpush2.bf16.msra.mxu0 %v3265
    %3378 = vmatprep.mubr.bf16.mxu0 %v3041
    %3379 = vmatmul.mubr.bf16.gmra.mxu0 %v3040
    %v3380 = vpop.f32.mrf.mxu0
    %v3381 = vadd.f32 %v3340, %v3380
    %v3382 = vpop.f32.mrf.mxu0
    %v3383 = vpop.f32.mrf.mxu0
    %v3384 = vadd.f32 %v3343, %v3383
    %v3385 = vpop.f32.mrf.mxu0
    %3386 = vdwg.mxu0
    %v3387 = vadd.f32 %v3381, %v2527
    %v3388 = vadd.f32 %v3384, %v2528
    %v3389 = vld [vmem:[%s16] sm:$0x1]
    %v3390 = vld [vmem:[%s17] sm:$0x1]
    %3391 = vadd.xlane.f32.xlu0 %v3387
    %v3392 = vpop.xlane.xlu0 %3391
    %3393 = vadd.xlane.f32.xlu0 %v3388
    %v3394 = vpop.xlane.xlu0 %3393
    %v3395 = vmul.f32 %v3392, %v2494
    %v3396 = vmul.f32 %v3394, %v2494
    %v3397 = vsub.f32 %v3387, %v3395
    %v3398 = vsub.f32 %v3388, %v3396
    %v3399 = vmul.f32 %v3397, %v3397
    %v3400 = vmul.f32 %v3398, %v3398
    %3401 = vadd.xlane.f32.xlu0 %v3399
    %v3402 = vpop.xlane.xlu0 %3401
    %3403 = vadd.xlane.f32.xlu0 %v3400
    %v3404 = vpop.xlane.xlu0 %3403
    %v3405 = vmul.f32 %v3402, %v2494
    %v3406 = vmul.f32 %v3404, %v2494
    %v3407 = vadd.f32 %v3405, 1e-05
    %v3408 = vadd.f32 %v3406, 1e-05
    %v3409 = vrsqrt.pop %v3407
    %v3410 = vrsqrt.pop %v3408
    %v3411 = vmul.f32 %v3397, %v3409
    %v3412 = vmul.f32 %v3398, %v3410
    %v3414 = vlaneseq
    %v3415 = vshrl.u32 %v3414, 7
    %v3416 = vsub.s32 0, %v3415
    %v3417 = vrot.slane %v3389, %v3416
    %v3419 = vmul.f32 %v3411, %v3417
    %v3420 = vmul.f32 %v3412, %v3417
    %v3422 = vlaneseq
    %v3423 = vshrl.u32 %v3422, 7
    %v3424 = vsub.s32 0, %v3423
    %v3425 = vrot.slane %v3390, %v3424
    %v3427 = vadd.f32 %v3419, %v3425
    %v3428 = vadd.f32 %v3420, %v3425
    %3429 = vst [vmem:[#allocation16] sm:$0xff] %v3427
    %3430 = vst [vmem:[#allocation16 + $0x8] sm:$0xff] %v3428
    // Predicated region
    $region106: #{tpu_custom_call.1} parent=1 // pred_check
      _
    $region107: #{tpu_custom_call.1} parent=1 // pred_check_branch
      %3432 = sbr.rel (0) target = $region109
    $region108: #{tpu_custom_call.1} parent=1 // pred_region
      %s3434 = ssub.s32 256, 256
      %3435 = vsyncadd [#allocation4], %s3434
      %s3436 = sshll.u32 [#allocation16], 4
      %s3437 = int_to_ptr.vmem [resolvable:$true] %s3436
      %3442 = dma.vmem_to_hbm [thread:$0]  %s3437, 256, %s18, [#allocation4], 128, 128, 8
    $region109: #{tpu_custom_call.1} parent=1 // pred_fallthru
      _
    // Predicated region
    $region110: #{tpu_custom_call.1} parent=1 // pred_check
      _
    $region111: #{tpu_custom_call.1} parent=1 // pred_check_branch
      %3444 = sbr.rel (0) target = $region113
    $region112: #{tpu_custom_call.1} parent=1 // pred_region
      %3445 = dma.done [#allocation4], 256
    $region113: #{tpu_custom_call.1} parent=1 // pred_fallthru
      _
    %3446 = vsyncpa [#allocation3], 1
    %3447 = vsyncpa [#allocation6], 1
    %3448 = vsyncpa [#allocation9], 1
    %3449 = vsyncpa [#allocation12], 1
    %3450 = vsyncpa [#allocation15], 1
    %3451 = vsyncpa [#allocation4], 1

</llo_original>
